<compile_context>
chip_gen: v6e
topology: v6e:2x2x1
jax: 0.10.0
libtpu: 0.0.40
codegen_flags: <defaults>
</compile_context>

<pallas_src>
import functools

import jax
import jax.numpy as jnp
from jax.experimental import pallas as pl
from jax.experimental.pallas import tpu as pltpu


def _mixprop_kernel(x_ref, abd_ref, wk_ref, b_ref, o_ref, *,
                    gdep, alpha, mxu_dtype, precision):
    # x_ref:   (bt*N, C*L)              f32 input block, propagation layout
    # abd_ref: (bt*N, bt*N)             block-diag normalized adj^T (mxu dtype)
    # wk_ref:  (gdep+1, C*L, c_out*L)   kron'd 1x1-conv weights (mxu dtype)
    # b_ref:   (1, c_out*L)             lane-expanded bias (f32)
    # o_ref:   (bt*N, c_out*L)          lane-dense output block
    x = x_ref[...]                      # f32
    a_bd = abd_ref[...]

    # hop-0 MLP contribution: (btN, C*L) @ (C*L, c_out*L) -> lane dim 128
    acc = jnp.dot(x.astype(mxu_dtype), wk_ref[0],
                  preferred_element_type=jnp.float32, precision=precision)

    h = x                               # f32 propagation state
    for g in range(1, gdep + 1):        # static unroll over the small depth
        # one MXU matmul per hop for the WHOLE batch tile (block-diag adj)
        prop = jnp.dot(a_bd, h.astype(mxu_dtype),
                       preferred_element_type=jnp.float32, precision=precision)
        h = (1.0 - alpha) * x + alpha * prop            # alpha mix in f32 (VPU)
        # hop-g MLP contribution, same layout -> no relayout, single acc chain
        acc = acc + jnp.dot(h.astype(mxu_dtype), wk_ref[g],
                            preferred_element_type=jnp.float32,
                            precision=precision)

    # bias broadcast once, lane-dense unmasked store
    o_ref[...] = (acc + b_ref[...]).astype(o_ref.dtype)


def mixprop_pallas(x, adj, weight, bias, *, gdep, alpha, bt=None,
                   mxu_dtype=jnp.bfloat16):
    B, C, N, L = x.shape
    c_out, cg = weight.shape
    assert cg == (gdep + 1) * C
    assert adj.shape == (N, N)

    if bt is None:  # largest divisor of B that is <= 8 (amortize step overhead)
        bt = max(d for d in range(1, min(B, 8) + 1) if B % d == 0)
    assert B % bt == 0, "batch tile must divide batch"

    btN = bt * N
    CL = C * L
    OL = c_out * L
    assert btN % 8 == 0, "bt*N must be a multiple of 8 (sublane tiling)"
    assert OL % 128 == 0, "c_out*L must be a multiple of 128 (lane tiling)"

    precision = (jax.lax.Precision.HIGHEST
                 if mxu_dtype == jnp.float32 else None)

    # ---- batch-invariant prep, hoisted out of the kernel (runs once) ----
    adj_i = adj + jnp.eye(N, dtype=adj.dtype)
    a_norm = adj_i / jnp.sum(adj_i, axis=1, keepdims=True)
    aT = jnp.transpose(a_norm)                                  # prop = aT @ h
    a_bd = jnp.kron(jnp.eye(bt, dtype=aT.dtype), aT).astype(mxu_dtype)

    # kron 1x1-conv weights: M_g = kron(w_g^T, I_L)  -> (C*L, c_out*L)
    eye_L = jnp.eye(L, dtype=weight.dtype)
    wk = jnp.stack([jnp.kron(weight[:, g * C:(g + 1) * C].T, eye_L)
                    for g in range(gdep + 1)]).astype(mxu_dtype)
    # lane-expanded bias: b_lane[o*L + l] = bias[o]
    b_lane = jnp.repeat(bias, L).reshape(1, OL).astype(jnp.float32)

    # propagation layout: (B*N, C*L), rows = batch*node, lanes = chan*seq
    x_prop = jnp.transpose(x, (0, 2, 1, 3)).reshape(B * N, CL)

    kernel = functools.partial(_mixprop_kernel, gdep=gdep, alpha=alpha,
                               mxu_dtype=mxu_dtype, precision=precision)

    out_flat = pl.pallas_call(
        kernel,
        out_shape=jax.ShapeDtypeStruct((B * N, OL), x.dtype),
        grid_spec=pltpu.PrefetchScalarGridSpec(
            num_scalar_prefetch=0,
            grid=(B // bt,),
            in_specs=[
                pl.BlockSpec((btN, CL), lambda i: (i, 0)),
                pl.BlockSpec((btN, btN), lambda i: (0, 0)),
                pl.BlockSpec((gdep + 1, CL, OL), lambda i: (0, 0, 0)),
                pl.BlockSpec((1, OL), lambda i: (0, 0)),
            ],
            out_specs=pl.BlockSpec((btN, OL), lambda i: (i, 0)),
        ),
        compiler_params=pltpu.CompilerParams(
            dimension_semantics=("parallel",),       # shard batch tiles on v7x
            vmem_limit_bytes=32 * 1024 * 1024),
    )(x_prop, a_bd, wk, b_lane)

    # (B*N, c_out*L) -> (B, c_out, N, L)   (single XLA reorder, once per call)
    return out_flat.reshape(B, N, c_out, L).transpose(0, 2, 1, 3)


def mixprop_ref(x, adj, weight, bias, *, gdep, alpha):
    """Pure-JAX reference mirroring the PyTorch forward (true-f32 matmuls)."""
    hp = jax.lax.Precision.HIGHEST
    n = adj.shape[0]
    adj = adj + jnp.eye(n, dtype=adj.dtype)
    d = adj.sum(axis=1)
    a = adj / d[:, None]
    h = x
    out = [x]
    for _ in range(gdep):
        h = (1.0 - alpha) * x + alpha * jnp.einsum('bcnl,nw->bcwl', h, a,
                                                   precision=hp)
        out.append(h)
    ho = jnp.concatenate(out, axis=1)
    y = jnp.einsum('oc,bcnl->bonl', weight, ho, precision=hp)
    return y + bias[None, :, None, None]


if __name__ == "__main__":
    # Small, module-consistent shapes.
    B, C_IN, N, L = 2, 4, 16, 16
    C_OUT = 8
    GDEP = 2
    ALPHA = 0.05
    # DROPOUT is stored by the module but never applied in forward().

    key = jax.random.PRNGKey(0)
    kx, ka, kw, kb = jax.random.split(key, 4)

    x = jax.random.normal(kx, (B, C_IN, N, L), dtype=jnp.float32)
    # Non-negative adjacency so row sums are safely positive.
    adj = jax.random.uniform(ka, (N, N), dtype=jnp.float32)

    cg = (GDEP + 1) * C_IN
    weight = jax.random.normal(kw, (C_OUT, cg), dtype=jnp.float32) * 0.1
    bias = jax.random.normal(kb, (C_OUT,), dtype=jnp.float32) * 0.1

    ref = mixprop_ref(x, adj, weight, bias, gdep=GDEP, alpha=ALPHA)

    # Exact-precision path (f32 MXU operands, HIGHEST precision): tight check.
    out_f32 = jax.block_until_ready(
        mixprop_pallas(x, adj, weight, bias, gdep=GDEP, alpha=ALPHA,
                       mxu_dtype=jnp.float32))
    assert out_f32.shape == (B, C_OUT, N, L)
    assert jnp.allclose(out_f32, ref, rtol=1e-5, atol=1e-5), "f32 mismatch"

    # Default fast path (bf16 MXU operands, f32 accumulation): relaxed check.
    out_bf16 = jax.block_until_ready(
        mixprop_pallas(x, adj, weight, bias, gdep=GDEP, alpha=ALPHA))
    assert out_bf16.shape == (B, C_OUT, N, L)
    assert jnp.allclose(out_bf16, ref, rtol=3e-2, atol=3e-2), "bf16 mismatch"

    print("KERNEL_OK")
</pallas_src>

<mosaic_0001>
module attributes {stable_mosaic.version = 11 : i64} {
  func.func @_mixprop_kernel(%arg0: i32, %arg1: memref<32x64xf32, #tpu.memory_space<vmem>>, %arg2: memref<32x32xf32, #tpu.memory_space<vmem>>, %arg3: memref<3x64x128xf32, #tpu.memory_space<vmem>>, %arg4: memref<1x128xf32, #tpu.memory_space<vmem>>, %arg5: memref<32x128xf32, #tpu.memory_space<vmem>>) attributes {dimension_semantics = [#tpu.dimension_semantics<parallel>], iteration_bounds = array<i64: 1>, scalar_prefetch = 0 : i64, scratch_operands = 0 : i64, tpu.core_type = #tpu.core_type<tc>, window_params = [{transform_indices = @transform_0, window_bounds = array<i64: 32, 64>}, {pipeline_mode = #tpu.pipeline_mode<synchronous>, transform_indices = @transform_1, window_bounds = array<i64: 32, 32>}, {pipeline_mode = #tpu.pipeline_mode<synchronous>, transform_indices = @transform_2, window_bounds = array<i64: 3, 64, 128>}, {pipeline_mode = #tpu.pipeline_mode<synchronous>, transform_indices = @transform_3, window_bounds = array<i64: 1, 128>}, {transform_indices = @transform_4, window_bounds = array<i64: 32, 128>}]} {
    %c0 = arith.constant 0 : index
    %c0_0 = arith.constant 0 : index
    %0 = vector.load %arg1[%c0, %c0_0] : memref<32x64xf32, #tpu.memory_space<vmem>>, vector<32x64xf32>
    %c0_1 = arith.constant 0 : index
    %c0_2 = arith.constant 0 : index
    %1 = vector.load %arg2[%c0_1, %c0_2] : memref<32x32xf32, #tpu.memory_space<vmem>>, vector<32x32xf32>
    %c0_3 = arith.constant 0 : index
    %c0_4 = arith.constant 0 : index
    %c0_5 = arith.constant 0 : index
    %2 = vector.load %arg3[%c0_3, %c0_4, %c0_5] : memref<3x64x128xf32, #tpu.memory_space<vmem>>, vector<1x64x128xf32>
    %3 = vector.shape_cast %2 : vector<1x64x128xf32> to vector<64x128xf32>
    %cst = arith.constant dense<0.000000e+00> : vector<32x128xf32>
    %4 = tpu.matmul %0, %3, %cst {dimension_numbers = #tpu.dot_dimension_numbers<[1], [0], [0], [1], [0, 0, 1, 1], [], []>, precision = #tpu.contract_precision<fp32>} : vector<32x64xf32>, vector<64x128xf32>, vector<32x128xf32> -> vector<32x128xf32>
    %cst_6 = arith.constant dense<0.000000e+00> : vector<32x64xf32>
    %5 = tpu.matmul %1, %0, %cst_6 {dimension_numbers = #tpu.dot_dimension_numbers<[1], [0], [0], [1], [0, 0, 1, 1], [], []>, precision = #tpu.contract_precision<fp32>} : vector<32x32xf32>, vector<32x64xf32>, vector<32x64xf32> -> vector<32x64xf32>
    %cst_7 = arith.constant 0.949999988 : f32
    %6 = vector.broadcast %cst_7 : f32 to vector<32x64xf32>
    %7 = arith.mulf %6, %0 : vector<32x64xf32>
    %cst_8 = arith.constant 5.000000e-02 : f32
    %8 = vector.broadcast %cst_8 : f32 to vector<32x64xf32>
    %9 = arith.mulf %8, %5 : vector<32x64xf32>
    %10 = arith.addf %7, %9 : vector<32x64xf32>
    %c1 = arith.constant 1 : index
    %c0_9 = arith.constant 0 : index
    %c0_10 = arith.constant 0 : index
    %11 = vector.load %arg3[%c1, %c0_9, %c0_10] : memref<3x64x128xf32, #tpu.memory_space<vmem>>, vector<1x64x128xf32>
    %12 = vector.shape_cast %11 : vector<1x64x128xf32> to vector<64x128xf32>
    %cst_11 = arith.constant dense<0.000000e+00> : vector<32x128xf32>
    %13 = tpu.matmul %10, %12, %cst_11 {dimension_numbers = #tpu.dot_dimension_numbers<[1], [0], [0], [1], [0, 0, 1, 1], [], []>, precision = #tpu.contract_precision<fp32>} : vector<32x64xf32>, vector<64x128xf32>, vector<32x128xf32> -> vector<32x128xf32>
    %14 = arith.addf %4, %13 : vector<32x128xf32>
    %cst_12 = arith.constant dense<0.000000e+00> : vector<32x64xf32>
    %15 = tpu.matmul %1, %10, %cst_12 {dimension_numbers = #tpu.dot_dimension_numbers<[1], [0], [0], [1], [0, 0, 1, 1], [], []>, precision = #tpu.contract_precision<fp32>} : vector<32x32xf32>, vector<32x64xf32>, vector<32x64xf32> -> vector<32x64xf32>
    %cst_13 = arith.constant 0.949999988 : f32
    %16 = vector.broadcast %cst_13 : f32 to vector<32x64xf32>
    %17 = arith.mulf %16, %0 : vector<32x64xf32>
    %cst_14 = arith.constant 5.000000e-02 : f32
    %18 = vector.broadcast %cst_14 : f32 to vector<32x64xf32>
    %19 = arith.mulf %18, %15 : vector<32x64xf32>
    %20 = arith.addf %17, %19 : vector<32x64xf32>
    %c2 = arith.constant 2 : index
    %c0_15 = arith.constant 0 : index
    %c0_16 = arith.constant 0 : index
    %21 = vector.load %arg3[%c2, %c0_15, %c0_16] : memref<3x64x128xf32, #tpu.memory_space<vmem>>, vector<1x64x128xf32>
    %22 = vector.shape_cast %21 : vector<1x64x128xf32> to vector<64x128xf32>
    %cst_17 = arith.constant dense<0.000000e+00> : vector<32x128xf32>
    %23 = tpu.matmul %20, %22, %cst_17 {dimension_numbers = #tpu.dot_dimension_numbers<[1], [0], [0], [1], [0, 0, 1, 1], [], []>, precision = #tpu.contract_precision<fp32>} : vector<32x64xf32>, vector<64x128xf32>, vector<32x128xf32> -> vector<32x128xf32>
    %24 = arith.addf %14, %23 : vector<32x128xf32>
    %c0_18 = arith.constant 0 : index
    %c0_19 = arith.constant 0 : index
    %25 = vector.load %arg4[%c0_18, %c0_19] : memref<1x128xf32, #tpu.memory_space<vmem>>, vector<1x128xf32>
    %26 = vector.broadcast %25 : vector<1x128xf32> to vector<32x128xf32>
    %27 = arith.addf %24, %26 : vector<32x128xf32>
    %c0_20 = arith.constant 0 : index
    %c0_21 = arith.constant 0 : index
    %28 = vector.load %arg5[%c0_20, %c0_21] : memref<32x128xf32, #tpu.memory_space<vmem>>, vector<32x128xf32>
    tpu.vector_store %arg5[%c0_20, %c0_21], %27 {strides = array<i32>} : memref<32x128xf32, #tpu.memory_space<vmem>>, vector<32x128xf32>,
    return
  }
  func.func @transform_0(%arg0: i32) -> (i32, i32) {
    %c0_i32 = arith.constant 0 : i32
    %c0_i32_0 = arith.constant 0 : i32
    return %arg0, %c0_i32 : i32, i32
  }
  func.func @transform_1(%arg0: i32) -> (i32, i32) {
    %c0_i32 = arith.constant 0 : i32
    %c0_i32_0 = arith.constant 0 : i32
    %c0_i32_1 = arith.constant 0 : i32
    return %c0_i32, %c0_i32_0 : i32, i32
  }
  func.func @transform_2(%arg0: i32) -> (i32, i32, i32) {
    %c0_i32 = arith.constant 0 : i32
    %c0_i32_0 = arith.constant 0 : i32
    %c0_i32_1 = arith.constant 0 : i32
    %c0_i32_2 = arith.constant 0 : i32
    return %c0_i32, %c0_i32_0, %c0_i32_1 : i32, i32, i32
  }
  func.func @transform_3(%arg0: i32) -> (i32, i32) {
    %c0_i32 = arith.constant 0 : i32
    %c0_i32_0 = arith.constant 0 : i32
    %c0_i32_1 = arith.constant 0 : i32
    return %c0_i32, %c0_i32_0 : i32, i32
  }
  func.func @transform_4(%arg0: i32) -> (i32, i32) {
    %c0_i32 = arith.constant 0 : i32
    %c0_i32_0 = arith.constant 0 : i32
    return %arg0, %c0_i32 : i32, i32
  }
}

</mosaic_0001>

<llo_original>
// kernel: tpu_custom_call.1
$region0: #{tpu_custom_call.1}
  #allocation0 [shape = 'u32[]', space=smem, size = 0x4, offset = 0x4, fixed_abs, tag = 'smem constant byte address 0x4 - core index']
  #allocation1 [shape = 'u32[144,128]{1,0:T(1,128)}', space=vmem, size = 0x12000, scoped, tag = 'internal scratch']
  %s0 = inlined_call_operand.hbm [shape: f32[32,64], index: 0, kind: input, shape index: {}]
  %s1 = inlined_call_operand.hbm [shape: f32[32,32], index: 1, kind: input, shape index: {}]
  %s2 = inlined_call_operand.hbm [shape: f32[3,64,128], index: 2, kind: input, shape index: {}]
  %s3 = inlined_call_operand.vmem [shape: f32[1,128], index: 3, kind: input, shape index: {}]
  %s4 = inlined_call_operand.hbm [shape: f32[32,128], index: 4, kind: output, shape index: {}]
  %s5 = sld [smem:[#allocation0]]
  $region38: #{tpu_custom_call.1} parent=0
    _
  %s7 = ssub.s32 1, %s5
  %s8 = scalar_select 0, %s7, %s5
  $region1: #{tpu_custom_call.1} parent=0
    #allocation2 [shape = 'u8[16384]{0}', space=vmem, size = 0x4000, scoped, tag = 'input window, operand 0, single buffered']
    #allocation3 [shape = 's32[1]{0}', space=sflag, size = 0x4, scoped, tag = 'scoped memory for tpu_custom_call.1']
    #allocation4 [shape = 's32[1]{0}', space=sflag, size = 0x4, scoped, tag = 'scoped memory for tpu_custom_call.1']
    #allocation5 [shape = 'u8[16384]{0}', space=vmem, size = 0x4000, scoped, tag = 'input window, operand 1, single buffered']
    #allocation6 [shape = 's32[1]{0}', space=sflag, size = 0x4, scoped, tag = 'scoped memory for tpu_custom_call.1']
    #allocation7 [shape = 'u8[98304]{0}', space=vmem, size = 0x18000, scoped, tag = 'input window, operand 2, single buffered']
    #allocation8 [shape = 'u8[16384]{0}', space=vmem, size = 0x4000, scoped, tag = 'output window, operand 0, single buffered']
    %9 = vsyncpa [#allocation3], 0
    %10 = vsyncpa [#allocation6], 0
    %11 = vsyncpa [#allocation4], 0
    // Predicated region
    $region2: #{tpu_custom_call.1} parent=1 // pred_check
      _
    $region3: #{tpu_custom_call.1} parent=1 // pred_check_branch
      %13 = sbr.rel (0) target = $region5
    $region4: #{tpu_custom_call.1} parent=1 // pred_region
      %s15 = ssub.s32 512, 512
      %16 = vsyncadd [#allocation3], %s15
      %s17 = sshll.u32 [#allocation2], 4
      %s18 = int_to_ptr.vmem [resolvable:$true] %s17
      %23 = dma.hbm_to_vmem [thread:$0]  %s0, 512, %s18, [#allocation3], 128, 128, 8
    $region5: #{tpu_custom_call.1} parent=1 // pred_fallthru
      _
    // Predicated region
    $region6: #{tpu_custom_call.1} parent=1 // pred_check
      _
    $region7: #{tpu_custom_call.1} parent=1 // pred_check_branch
      %25 = sbr.rel (0) target = $region9
    $region8: #{tpu_custom_call.1} parent=1 // pred_region
      %s27 = ssub.s32 512, 512
      %28 = vsyncadd [#allocation6], %s27
      %s29 = sshll.u32 [#allocation5], 4
      %s30 = int_to_ptr.vmem [resolvable:$true] %s29
      %35 = dma.hbm_to_vmem [thread:$0]  %s1, 512, %s30, [#allocation6], 128, 128, 8
    $region9: #{tpu_custom_call.1} parent=1 // pred_fallthru
      _
    // Predicated region
    $region10: #{tpu_custom_call.1} parent=1 // pred_check
      _
    $region11: #{tpu_custom_call.1} parent=1 // pred_check_branch
      %37 = sbr.rel (0) target = $region13
    $region12: #{tpu_custom_call.1} parent=1 // pred_region
      %s39 = ssub.s32 3072, 3072
      %40 = vsyncadd [#allocation6], %s39
      %s41 = sshll.u32 [#allocation7], 4
      %s42 = int_to_ptr.vmem [resolvable:$true] %s41
      %47 = dma.hbm_to_vmem [thread:$0]  %s2, 3072, %s42, [#allocation6], 128, 128, 8
    $region13: #{tpu_custom_call.1} parent=1 // pred_fallthru
      _
    // Predicated region
    $region14: #{tpu_custom_call.1} parent=1 // pred_check
      _
    $region15: #{tpu_custom_call.1} parent=1 // pred_check_branch
      %49 = sbr.rel (0) target = $region17
    $region16: #{tpu_custom_call.1} parent=1 // pred_region
      _
    $region17: #{tpu_custom_call.1} parent=1 // pred_fallthru
      _
    // Predicated region
    $region18: #{tpu_custom_call.1} parent=1 // pred_check
      _
    $region19: #{tpu_custom_call.1} parent=1 // pred_check_branch
      %51 = sbr.rel (0) target = $region21
    $region20: #{tpu_custom_call.1} parent=1 // pred_region
      %52 = dma.done [#allocation3], 512
    $region21: #{tpu_custom_call.1} parent=1 // pred_fallthru
      _
    // Predicated region
    $region22: #{tpu_custom_call.1} parent=1 // pred_check
      _
    $region23: #{tpu_custom_call.1} parent=1 // pred_check_branch
      %54 = sbr.rel (0) target = $region25
    $region24: #{tpu_custom_call.1} parent=1 // pred_region
      %55 = dma.done [#allocation6], 512
    $region25: #{tpu_custom_call.1} parent=1 // pred_fallthru
      _
    // Predicated region
    $region26: #{tpu_custom_call.1} parent=1 // pred_check
      _
    $region27: #{tpu_custom_call.1} parent=1 // pred_check_branch
      %57 = sbr.rel (0) target = $region29
    $region28: #{tpu_custom_call.1} parent=1 // pred_region
      %58 = dma.done [#allocation6], 3072
    $region29: #{tpu_custom_call.1} parent=1 // pred_fallthru
      _
    %v59 = vld [vmem:[#allocation2] sm:$0xff]
    %v60 = vld [vmem:[#allocation2 + $0x8] sm:$0xff]
    %v61 = vld [vmem:[#allocation2 + $0x10] sm:$0xff]
    %v62 = vld [vmem:[#allocation2 + $0x18] sm:$0xff]
    %v63 = vld [vmem:[#allocation5] sm:$0xff]
    %v64 = vld [vmem:[#allocation5 + $0x8] sm:$0xff]
    %v65 = vld [vmem:[#allocation5 + $0x10] sm:$0xff]
    %v66 = vld [vmem:[#allocation5 + $0x18] sm:$0xff]
    %v67 = vld [vmem:[#allocation7] sm:$0xff]
    %v68 = vld [vmem:[#allocation7 + $0x8] sm:$0xff]
    %v69 = vld [vmem:[#allocation7 + $0x10] sm:$0xff]
    %v70 = vld [vmem:[#allocation7 + $0x18] sm:$0xff]
    %v71 = vld [vmem:[#allocation7 + $0x20] sm:$0xff]
    %v72 = vld [vmem:[#allocation7 + $0x28] sm:$0xff]
    %v73 = vld [vmem:[#allocation7 + $0x30] sm:$0xff]
    %v74 = vld [vmem:[#allocation7 + $0x38] sm:$0xff]
    %vm75 = vcmask 261120
    %v77 = vsel %vm75, %v63, 0
    %v80 = vsel %vm75, %v64, 0
    %v83 = vsel %vm75, %v65, 0
    %v86 = vsel %vm75, %v66, 0
    %88 = vmatprep.subr.mxu0 0.0
    %89 = vmatpush1.msra.mxu0 0.0
    %90 = vmatprep.subr.mxu0 0.0
    %91 = vmatpush1.msra.mxu0 0.0
    %92 = vmatprep.subr.mxu0 0.0
    %93 = vmatpush1.msra.mxu0 0.0
    %94 = vmatprep.subr.mxu0 0.0
    %95 = vmatpush1.msra.mxu0 0.0
    %96 = vmatprep.subr.mxu0 0.0
    %97 = vmatpush1.msra.mxu0 0.0
    %98 = vmatprep.subr.mxu0 0.0
    %99 = vmatpush1.msra.mxu0 0.0
    %100 = vmatprep.subr.mxu0 0.0
    %101 = vmatpush1.msra.mxu0 0.0
    %102 = vmatprep.subr.mxu0 0.0
    %103 = vmatpush1.msra.mxu0 0.0
    %104 = vmatprep.subr.mxu0 0.0
    %105 = vmatpush1.msra.mxu0 0.0
    %106 = vmatprep.subr.mxu0 0.0
    %107 = vmatpush1.msra.mxu0 0.0
    %108 = vmatprep.subr.mxu0 0.0
    %109 = vmatpush1.msra.mxu0 0.0
    %110 = vmatprep.subr.mxu0 0.0
    %111 = vmatpush1.msra.mxu0 0.0
    %112 = vmatprep.subr.mxu0 0.0
    %v113 = vand.u32 %v62, 4294901760
    %114 = vmatpush1.msra.mxu0 %v113
    %115 = vmatprep.subr.mxu0 0.0
    %v116 = vand.u32 %v61, 4294901760
    %117 = vmatpush1.msra.mxu0 %v116
    %118 = vmatprep.subr.mxu0 0.0
    %v119 = vand.u32 %v60, 4294901760
    %120 = vmatpush1.msra.mxu0 %v119
    %121 = vmatprep.subr.mxu0 0.0
    %v122 = vand.u32 %v59, 4294901760
    %123 = vmatpush1.msra.mxu0 %v122
    %124 = vmatprep.subr.mxu0 0.0
    %125 = vmatpush2.msra.mxu0 0.0
    %126 = vmatprep.subr.mxu0 0.0
    %127 = vmatpush2.msra.mxu0 0.0
    %128 = vmatprep.subr.mxu0 0.0
    %129 = vmatpush2.msra.mxu0 0.0
    %130 = vmatprep.subr.mxu0 0.0
    %131 = vmatpush2.msra.mxu0 0.0
    %132 = vmatprep.subr.mxu0 0.0
    %133 = vmatpush2.msra.mxu0 0.0
    %134 = vmatprep.subr.mxu0 0.0
    %135 = vmatpush2.msra.mxu0 0.0
    %136 = vmatprep.subr.mxu0 0.0
    %137 = vmatpush2.msra.mxu0 0.0
    %138 = vmatprep.subr.mxu0 0.0
    %139 = vmatpush2.msra.mxu0 0.0
    %140 = vmatprep.subr.mxu0 0.0
    %141 = vmatpush2.msra.mxu0 0.0
    %142 = vmatprep.subr.mxu0 0.0
    %143 = vmatpush2.msra.mxu0 0.0
    %144 = vmatprep.subr.mxu0 0.0
    %145 = vmatpush2.msra.mxu0 0.0
    %146 = vmatprep.subr.mxu0 0.0
    %147 = vmatpush2.msra.mxu0 0.0
    %148 = vmatprep.subr.mxu0 0.0
    %149 = vmatpush2.msra.mxu0 0.0
    %150 = vmatprep.subr.mxu0 0.0
    %151 = vmatpush2.msra.mxu0 0.0
    %152 = vmatprep.subr.mxu0 0.0
    %153 = vmatpush2.msra.mxu0 0.0
    %154 = vmatprep.subr.mxu0 0.0
    %155 = vmatpush2.msra.mxu0 0.0
    %156 = vmatprep.mubr.f32.mxu0 0.0
    %v157 = vand.u32 %v77, 4294901760
    %v158 = vsub.f32 %v77, %v157
    %v159 = vand.u32 %v158, 4294901760
    %v160 = vsub.f32 %v158, %v159
    %v161 = vand.u32 %v160, 4294901760
    %162 = vmatmul.mubr.f32.gmra.mxu0 %v161
    %v163 = vpop.f32.mrf.mxu0
    %v164 = vadd.f32 0.0, %v163
    %v165 = vpop.f32.mrf.mxu0
    %166 = vmatprep.mubr.f32.mxu0 0.0
    %v167 = vand.u32 %v80, 4294901760
    %v168 = vsub.f32 %v80, %v167
    %v169 = vand.u32 %v168, 4294901760
    %v170 = vsub.f32 %v168, %v169
    %v171 = vand.u32 %v170, 4294901760
    %172 = vmatmul.mubr.f32.gmra.mxu0 %v171
    %v173 = vpop.f32.mrf.mxu0
    %v174 = vadd.f32 0.0, %v173
    %v175 = vpop.f32.mrf.mxu0
    %176 = vmatprep.mubr.f32.mxu0 0.0
    %v177 = vand.u32 %v83, 4294901760
    %v178 = vsub.f32 %v83, %v177
    %v179 = vand.u32 %v178, 4294901760
    %v180 = vsub.f32 %v178, %v179
    %v181 = vand.u32 %v180, 4294901760
    %182 = vmatmul.mubr.f32.gmra.mxu0 %v181
    %v183 = vpop.f32.mrf.mxu0
    %v184 = vadd.f32 0.0, %v183
    %v185 = vpop.f32.mrf.mxu0
    %186 = vmatprep.mubr.f32.mxu0 0.0
    %v187 = vand.u32 %v86, 4294901760
    %v188 = vsub.f32 %v86, %v187
    %v189 = vand.u32 %v188, 4294901760
    %v190 = vsub.f32 %v188, %v189
    %v191 = vand.u32 %v190, 4294901760
    %192 = vmatmul.mubr.f32.gmra.mxu0 %v191
    %v193 = vpop.f32.mrf.mxu0
    %v194 = vadd.f32 0.0, %v193
    %v195 = vpop.f32.mrf.mxu0
    %196 = vdwg.mxu0
    %197 = vmatprep.subr.mxu0 0.0
    %198 = vmatpush1.msra.mxu0 0.0
    %199 = vmatprep.subr.mxu0 0.0
    %200 = vmatpush1.msra.mxu0 0.0
    %201 = vmatprep.subr.mxu0 0.0
    %202 = vmatpush1.msra.mxu0 0.0
    %203 = vmatprep.subr.mxu0 0.0
    %204 = vmatpush1.msra.mxu0 0.0
    %205 = vmatprep.subr.mxu0 0.0
    %206 = vmatpush1.msra.mxu0 0.0
    %207 = vmatprep.subr.mxu0 0.0
    %208 = vmatpush1.msra.mxu0 0.0
    %209 = vmatprep.subr.mxu0 0.0
    %210 = vmatpush1.msra.mxu0 0.0
    %211 = vmatprep.subr.mxu0 0.0
    %212 = vmatpush1.msra.mxu0 0.0
    %213 = vmatprep.subr.mxu0 0.0
    %214 = vmatpush1.msra.mxu0 0.0
    %215 = vmatprep.subr.mxu0 0.0
    %216 = vmatpush1.msra.mxu0 0.0
    %217 = vmatprep.subr.mxu0 0.0
    %218 = vmatpush1.msra.mxu0 0.0
    %219 = vmatprep.subr.mxu0 0.0
    %220 = vmatpush1.msra.mxu0 0.0
    %221 = vmatprep.subr.mxu0 0.0
    %v222 = vand.u32 %v62, 4294901760
    %v223 = vsub.f32 %v62, %v222
    %v224 = vand.u32 %v223, 4294901760
    %v225 = vsub.f32 %v223, %v224
    %v226 = vand.u32 %v225, 4294901760
    %227 = vmatpush1.msra.mxu0 %v226
    %228 = vmatprep.subr.mxu0 0.0
    %v229 = vand.u32 %v61, 4294901760
    %v230 = vsub.f32 %v61, %v229
    %v231 = vand.u32 %v230, 4294901760
    %v232 = vsub.f32 %v230, %v231
    %v233 = vand.u32 %v232, 4294901760
    %234 = vmatpush1.msra.mxu0 %v233
    %235 = vmatprep.subr.mxu0 0.0
    %v236 = vand.u32 %v60, 4294901760
    %v237 = vsub.f32 %v60, %v236
    %v238 = vand.u32 %v237, 4294901760
    %v239 = vsub.f32 %v237, %v238
    %v240 = vand.u32 %v239, 4294901760
    %241 = vmatpush1.msra.mxu0 %v240
    %242 = vmatprep.subr.mxu0 0.0
    %v243 = vand.u32 %v59, 4294901760
    %v244 = vsub.f32 %v59, %v243
    %v245 = vand.u32 %v244, 4294901760
    %v246 = vsub.f32 %v244, %v245
    %v247 = vand.u32 %v246, 4294901760
    %248 = vmatpush1.msra.mxu0 %v247
    %249 = vmatprep.subr.mxu0 0.0
    %250 = vmatpush2.msra.mxu0 0.0
    %251 = vmatprep.subr.mxu0 0.0
    %252 = vmatpush2.msra.mxu0 0.0
    %253 = vmatprep.subr.mxu0 0.0
    %254 = vmatpush2.msra.mxu0 0.0
    %255 = vmatprep.subr.mxu0 0.0
    %256 = vmatpush2.msra.mxu0 0.0
    %257 = vmatprep.subr.mxu0 0.0
    %258 = vmatpush2.msra.mxu0 0.0
    %259 = vmatprep.subr.mxu0 0.0
    %260 = vmatpush2.msra.mxu0 0.0
    %261 = vmatprep.subr.mxu0 0.0
    %262 = vmatpush2.msra.mxu0 0.0
    %263 = vmatprep.subr.mxu0 0.0
    %264 = vmatpush2.msra.mxu0 0.0
    %265 = vmatprep.subr.mxu0 0.0
    %266 = vmatpush2.msra.mxu0 0.0
    %267 = vmatprep.subr.mxu0 0.0
    %268 = vmatpush2.msra.mxu0 0.0
    %269 = vmatprep.subr.mxu0 0.0
    %270 = vmatpush2.msra.mxu0 0.0
    %271 = vmatprep.subr.mxu0 0.0
    %272 = vmatpush2.msra.mxu0 0.0
    %273 = vmatprep.subr.mxu0 0.0
    %274 = vmatpush2.msra.mxu0 0.0
    %275 = vmatprep.subr.mxu0 0.0
    %276 = vmatpush2.msra.mxu0 0.0
    %277 = vmatprep.subr.mxu0 0.0
    %278 = vmatpush2.msra.mxu0 0.0
    %279 = vmatprep.subr.mxu0 0.0
    %280 = vmatpush2.msra.mxu0 0.0
    %281 = vmatprep.mubr.f32.mxu0 0.0
    %v282 = vand.u32 %v77, 4294901760
    %283 = vmatmul.mubr.f32.gmra.mxu0 %v282
    %v284 = vpop.f32.mrf.mxu0
    %v285 = vadd.f32 %v164, %v284
    %v286 = vpop.f32.mrf.mxu0
    %287 = vmatprep.mubr.f32.mxu0 0.0
    %v288 = vand.u32 %v80, 4294901760
    %289 = vmatmul.mubr.f32.gmra.mxu0 %v288
    %v290 = vpop.f32.mrf.mxu0
    %v291 = vadd.f32 %v174, %v290
    %v292 = vpop.f32.mrf.mxu0
    %293 = vmatprep.mubr.f32.mxu0 0.0
    %v294 = vand.u32 %v83, 4294901760
    %295 = vmatmul.mubr.f32.gmra.mxu0 %v294
    %v296 = vpop.f32.mrf.mxu0
    %v297 = vadd.f32 %v184, %v296
    %v298 = vpop.f32.mrf.mxu0
    %299 = vmatprep.mubr.f32.mxu0 0.0
    %v300 = vand.u32 %v86, 4294901760
    %301 = vmatmul.mubr.f32.gmra.mxu0 %v300
    %v302 = vpop.f32.mrf.mxu0
    %v303 = vadd.f32 %v194, %v302
    %v304 = vpop.f32.mrf.mxu0
    %305 = vdwg.mxu0
    %306 = vmatprep.subr.mxu0 0.0
    %307 = vmatpush1.msra.mxu0 0.0
    %308 = vmatprep.subr.mxu0 0.0
    %309 = vmatpush1.msra.mxu0 0.0
    %310 = vmatprep.subr.mxu0 0.0
    %311 = vmatpush1.msra.mxu0 0.0
    %312 = vmatprep.subr.mxu0 0.0
    %313 = vmatpush1.msra.mxu0 0.0
    %314 = vmatprep.subr.mxu0 0.0
    %315 = vmatpush1.msra.mxu0 0.0
    %316 = vmatprep.subr.mxu0 0.0
    %317 = vmatpush1.msra.mxu0 0.0
    %318 = vmatprep.subr.mxu0 0.0
    %319 = vmatpush1.msra.mxu0 0.0
    %320 = vmatprep.subr.mxu0 0.0
    %321 = vmatpush1.msra.mxu0 0.0
    %322 = vmatprep.subr.mxu0 0.0
    %323 = vmatpush1.msra.mxu0 0.0
    %324 = vmatprep.subr.mxu0 0.0
    %325 = vmatpush1.msra.mxu0 0.0
    %326 = vmatprep.subr.mxu0 0.0
    %327 = vmatpush1.msra.mxu0 0.0
    %328 = vmatprep.subr.mxu0 0.0
    %329 = vmatpush1.msra.mxu0 0.0
    %330 = vmatprep.subr.mxu0 0.0
    %v331 = vand.u32 %v62, 4294901760
    %v332 = vsub.f32 %v62, %v331
    %333 = vmatpush1.msra.mxu0 %v332
    %334 = vmatprep.subr.mxu0 0.0
    %v335 = vand.u32 %v61, 4294901760
    %v336 = vsub.f32 %v61, %v335
    %337 = vmatpush1.msra.mxu0 %v336
    %338 = vmatprep.subr.mxu0 0.0
    %v339 = vand.u32 %v60, 4294901760
    %v340 = vsub.f32 %v60, %v339
    %341 = vmatpush1.msra.mxu0 %v340
    %342 = vmatprep.subr.mxu0 0.0
    %v343 = vand.u32 %v59, 4294901760
    %v344 = vsub.f32 %v59, %v343
    %345 = vmatpush1.msra.mxu0 %v344
    %346 = vmatprep.subr.mxu0 0.0
    %347 = vmatpush2.msra.mxu0 0.0
    %348 = vmatprep.subr.mxu0 0.0
    %349 = vmatpush2.msra.mxu0 0.0
    %350 = vmatprep.subr.mxu0 0.0
    %351 = vmatpush2.msra.mxu0 0.0
    %352 = vmatprep.subr.mxu0 0.0
    %353 = vmatpush2.msra.mxu0 0.0
    %354 = vmatprep.subr.mxu0 0.0
    %355 = vmatpush2.msra.mxu0 0.0
    %356 = vmatprep.subr.mxu0 0.0
    %357 = vmatpush2.msra.mxu0 0.0
    %358 = vmatprep.subr.mxu0 0.0
    %359 = vmatpush2.msra.mxu0 0.0
    %360 = vmatprep.subr.mxu0 0.0
    %361 = vmatpush2.msra.mxu0 0.0
    %362 = vmatprep.subr.mxu0 0.0
    %363 = vmatpush2.msra.mxu0 0.0
    %364 = vmatprep.subr.mxu0 0.0
    %365 = vmatpush2.msra.mxu0 0.0
    %366 = vmatprep.subr.mxu0 0.0
    %367 = vmatpush2.msra.mxu0 0.0
    %368 = vmatprep.subr.mxu0 0.0
    %369 = vmatpush2.msra.mxu0 0.0
    %370 = vmatprep.subr.mxu0 0.0
    %371 = vmatpush2.msra.mxu0 0.0
    %372 = vmatprep.subr.mxu0 0.0
    %373 = vmatpush2.msra.mxu0 0.0
    %374 = vmatprep.subr.mxu0 0.0
    %375 = vmatpush2.msra.mxu0 0.0
    %376 = vmatprep.subr.mxu0 0.0
    %377 = vmatpush2.msra.mxu0 0.0
    %378 = vmatprep.mubr.f32.mxu0 0.0
    %v379 = vand.u32 %v77, 4294901760
    %v380 = vsub.f32 %v77, %v379
    %381 = vmatmul.mubr.f32.gmra.mxu0 %v380
    %v382 = vpop.f32.mrf.mxu0
    %v383 = vadd.f32 %v285, %v382
    %v384 = vpop.f32.mrf.mxu0
    %385 = vmatprep.mubr.f32.mxu0 0.0
    %v386 = vand.u32 %v80, 4294901760
    %v387 = vsub.f32 %v80, %v386
    %388 = vmatmul.mubr.f32.gmra.mxu0 %v387
    %v389 = vpop.f32.mrf.mxu0
    %v390 = vadd.f32 %v291, %v389
    %v391 = vpop.f32.mrf.mxu0
    %392 = vmatprep.mubr.f32.mxu0 0.0
    %v393 = vand.u32 %v83, 4294901760
    %v394 = vsub.f32 %v83, %v393
    %395 = vmatmul.mubr.f32.gmra.mxu0 %v394
    %v396 = vpop.f32.mrf.mxu0
    %v397 = vadd.f32 %v297, %v396
    %v398 = vpop.f32.mrf.mxu0
    %399 = vmatprep.mubr.f32.mxu0 0.0
    %v400 = vand.u32 %v86, 4294901760
    %v401 = vsub.f32 %v86, %v400
    %402 = vmatmul.mubr.f32.gmra.mxu0 %v401
    %v403 = vpop.f32.mrf.mxu0
    %v404 = vadd.f32 %v303, %v403
    %v405 = vpop.f32.mrf.mxu0
    %406 = vdwg.mxu0
    %407 = vmatprep.subr.mxu0 0.0
    %408 = vmatpush1.msra.mxu0 0.0
    %409 = vmatprep.subr.mxu0 0.0
    %410 = vmatpush1.msra.mxu0 0.0
    %411 = vmatprep.subr.mxu0 0.0
    %412 = vmatpush1.msra.mxu0 0.0
    %413 = vmatprep.subr.mxu0 0.0
    %414 = vmatpush1.msra.mxu0 0.0
    %415 = vmatprep.subr.mxu0 0.0
    %416 = vmatpush1.msra.mxu0 0.0
    %417 = vmatprep.subr.mxu0 0.0
    %418 = vmatpush1.msra.mxu0 0.0
    %419 = vmatprep.subr.mxu0 0.0
    %420 = vmatpush1.msra.mxu0 0.0
    %421 = vmatprep.subr.mxu0 0.0
    %422 = vmatpush1.msra.mxu0 0.0
    %423 = vmatprep.subr.mxu0 0.0
    %424 = vmatpush1.msra.mxu0 0.0
    %425 = vmatprep.subr.mxu0 0.0
    %426 = vmatpush1.msra.mxu0 0.0
    %427 = vmatprep.subr.mxu0 0.0
    %428 = vmatpush1.msra.mxu0 0.0
    %429 = vmatprep.subr.mxu0 0.0
    %430 = vmatpush1.msra.mxu0 0.0
    %431 = vmatprep.subr.mxu0 0.0
    %v432 = vand.u32 %v62, 4294901760
    %433 = vmatpush1.msra.mxu0 %v432
    %434 = vmatprep.subr.mxu0 0.0
    %v435 = vand.u32 %v61, 4294901760
    %436 = vmatpush1.msra.mxu0 %v435
    %437 = vmatprep.subr.mxu0 0.0
    %v438 = vand.u32 %v60, 4294901760
    %439 = vmatpush1.msra.mxu0 %v438
    %440 = vmatprep.subr.mxu0 0.0
    %v441 = vand.u32 %v59, 4294901760
    %442 = vmatpush1.msra.mxu0 %v441
    %443 = vmatprep.subr.mxu0 0.0
    %444 = vmatpush2.msra.mxu0 0.0
    %445 = vmatprep.subr.mxu0 0.0
    %446 = vmatpush2.msra.mxu0 0.0
    %447 = vmatprep.subr.mxu0 0.0
    %448 = vmatpush2.msra.mxu0 0.0
    %449 = vmatprep.subr.mxu0 0.0
    %450 = vmatpush2.msra.mxu0 0.0
    %451 = vmatprep.subr.mxu0 0.0
    %452 = vmatpush2.msra.mxu0 0.0
    %453 = vmatprep.subr.mxu0 0.0
    %454 = vmatpush2.msra.mxu0 0.0
    %455 = vmatprep.subr.mxu0 0.0
    %456 = vmatpush2.msra.mxu0 0.0
    %457 = vmatprep.subr.mxu0 0.0
    %458 = vmatpush2.msra.mxu0 0.0
    %459 = vmatprep.subr.mxu0 0.0
    %460 = vmatpush2.msra.mxu0 0.0
    %461 = vmatprep.subr.mxu0 0.0
    %462 = vmatpush2.msra.mxu0 0.0
    %463 = vmatprep.subr.mxu0 0.0
    %464 = vmatpush2.msra.mxu0 0.0
    %465 = vmatprep.subr.mxu0 0.0
    %466 = vmatpush2.msra.mxu0 0.0
    %467 = vmatprep.subr.mxu0 0.0
    %468 = vmatpush2.msra.mxu0 0.0
    %469 = vmatprep.subr.mxu0 0.0
    %470 = vmatpush2.msra.mxu0 0.0
    %471 = vmatprep.subr.mxu0 0.0
    %472 = vmatpush2.msra.mxu0 0.0
    %473 = vmatprep.subr.mxu0 0.0
    %474 = vmatpush2.msra.mxu0 0.0
    %475 = vmatprep.mubr.f32.mxu0 0.0
    %v476 = vand.u32 %v77, 4294901760
    %v477 = vsub.f32 %v77, %v476
    %v478 = vand.u32 %v477, 4294901760
    %479 = vmatmul.mubr.f32.gmra.mxu0 %v478
    %v480 = vpop.f32.mrf.mxu0
    %v481 = vadd.f32 %v383, %v480
    %v482 = vpop.f32.mrf.mxu0
    %483 = vmatprep.mubr.f32.mxu0 0.0
    %v484 = vand.u32 %v80, 4294901760
    %v485 = vsub.f32 %v80, %v484
    %v486 = vand.u32 %v485, 4294901760
    %487 = vmatmul.mubr.f32.gmra.mxu0 %v486
    %v488 = vpop.f32.mrf.mxu0
    %v489 = vadd.f32 %v390, %v488
    %v490 = vpop.f32.mrf.mxu0
    %491 = vmatprep.mubr.f32.mxu0 0.0
    %v492 = vand.u32 %v83, 4294901760
    %v493 = vsub.f32 %v83, %v492
    %v494 = vand.u32 %v493, 4294901760
    %495 = vmatmul.mubr.f32.gmra.mxu0 %v494
    %v496 = vpop.f32.mrf.mxu0
    %v497 = vadd.f32 %v397, %v496
    %v498 = vpop.f32.mrf.mxu0
    %499 = vmatprep.mubr.f32.mxu0 0.0
    %v500 = vand.u32 %v86, 4294901760
    %v501 = vsub.f32 %v86, %v500
    %v502 = vand.u32 %v501, 4294901760
    %503 = vmatmul.mubr.f32.gmra.mxu0 %v502
    %v504 = vpop.f32.mrf.mxu0
    %v505 = vadd.f32 %v404, %v504
    %v506 = vpop.f32.mrf.mxu0
    %507 = vdwg.mxu0
    %508 = vmatprep.subr.mxu0 0.0
    %509 = vmatpush1.msra.mxu0 0.0
    %510 = vmatprep.subr.mxu0 0.0
    %511 = vmatpush1.msra.mxu0 0.0
    %512 = vmatprep.subr.mxu0 0.0
    %513 = vmatpush1.msra.mxu0 0.0
    %514 = vmatprep.subr.mxu0 0.0
    %515 = vmatpush1.msra.mxu0 0.0
    %516 = vmatprep.subr.mxu0 0.0
    %517 = vmatpush1.msra.mxu0 0.0
    %518 = vmatprep.subr.mxu0 0.0
    %519 = vmatpush1.msra.mxu0 0.0
    %520 = vmatprep.subr.mxu0 0.0
    %521 = vmatpush1.msra.mxu0 0.0
    %522 = vmatprep.subr.mxu0 0.0
    %523 = vmatpush1.msra.mxu0 0.0
    %524 = vmatprep.subr.mxu0 0.0
    %525 = vmatpush1.msra.mxu0 0.0
    %526 = vmatprep.subr.mxu0 0.0
    %527 = vmatpush1.msra.mxu0 0.0
    %528 = vmatprep.subr.mxu0 0.0
    %529 = vmatpush1.msra.mxu0 0.0
    %530 = vmatprep.subr.mxu0 0.0
    %531 = vmatpush1.msra.mxu0 0.0
    %532 = vmatprep.subr.mxu0 0.0
    %v533 = vand.u32 %v62, 4294901760
    %v534 = vsub.f32 %v62, %v533
    %v535 = vand.u32 %v534, 4294901760
    %536 = vmatpush1.msra.mxu0 %v535
    %537 = vmatprep.subr.mxu0 0.0
    %v538 = vand.u32 %v61, 4294901760
    %v539 = vsub.f32 %v61, %v538
    %v540 = vand.u32 %v539, 4294901760
    %541 = vmatpush1.msra.mxu0 %v540
    %542 = vmatprep.subr.mxu0 0.0
    %v543 = vand.u32 %v60, 4294901760
    %v544 = vsub.f32 %v60, %v543
    %v545 = vand.u32 %v544, 4294901760
    %546 = vmatpush1.msra.mxu0 %v545
    %547 = vmatprep.subr.mxu0 0.0
    %v548 = vand.u32 %v59, 4294901760
    %v549 = vsub.f32 %v59, %v548
    %v550 = vand.u32 %v549, 4294901760
    %551 = vmatpush1.msra.mxu0 %v550
    %552 = vmatprep.subr.mxu0 0.0
    %553 = vmatpush2.msra.mxu0 0.0
    %554 = vmatprep.subr.mxu0 0.0
    %555 = vmatpush2.msra.mxu0 0.0
    %556 = vmatprep.subr.mxu0 0.0
    %557 = vmatpush2.msra.mxu0 0.0
    %558 = vmatprep.subr.mxu0 0.0
    %559 = vmatpush2.msra.mxu0 0.0
    %560 = vmatprep.subr.mxu0 0.0
    %561 = vmatpush2.msra.mxu0 0.0
    %562 = vmatprep.subr.mxu0 0.0
    %563 = vmatpush2.msra.mxu0 0.0
    %564 = vmatprep.subr.mxu0 0.0
    %565 = vmatpush2.msra.mxu0 0.0
    %566 = vmatprep.subr.mxu0 0.0
    %567 = vmatpush2.msra.mxu0 0.0
    %568 = vmatprep.subr.mxu0 0.0
    %569 = vmatpush2.msra.mxu0 0.0
    %570 = vmatprep.subr.mxu0 0.0
    %571 = vmatpush2.msra.mxu0 0.0
    %572 = vmatprep.subr.mxu0 0.0
    %573 = vmatpush2.msra.mxu0 0.0
    %574 = vmatprep.subr.mxu0 0.0
    %575 = vmatpush2.msra.mxu0 0.0
    %576 = vmatprep.subr.mxu0 0.0
    %577 = vmatpush2.msra.mxu0 0.0
    %578 = vmatprep.subr.mxu0 0.0
    %579 = vmatpush2.msra.mxu0 0.0
    %580 = vmatprep.subr.mxu0 0.0
    %581 = vmatpush2.msra.mxu0 0.0
    %582 = vmatprep.subr.mxu0 0.0
    %583 = vmatpush2.msra.mxu0 0.0
    %584 = vmatprep.mubr.f32.mxu0 0.0
    %v585 = vand.u32 %v77, 4294901760
    %586 = vmatmul.mubr.f32.gmra.mxu0 %v585
    %v587 = vpop.f32.mrf.mxu0
    %v588 = vadd.f32 %v481, %v587
    %v589 = vpop.f32.mrf.mxu0
    %590 = vmatprep.mubr.f32.mxu0 0.0
    %v591 = vand.u32 %v80, 4294901760
    %592 = vmatmul.mubr.f32.gmra.mxu0 %v591
    %v593 = vpop.f32.mrf.mxu0
    %v594 = vadd.f32 %v489, %v593
    %v595 = vpop.f32.mrf.mxu0
    %596 = vmatprep.mubr.f32.mxu0 0.0
    %v597 = vand.u32 %v83, 4294901760
    %598 = vmatmul.mubr.f32.gmra.mxu0 %v597
    %v599 = vpop.f32.mrf.mxu0
    %v600 = vadd.f32 %v497, %v599
    %v601 = vpop.f32.mrf.mxu0
    %602 = vmatprep.mubr.f32.mxu0 0.0
    %v603 = vand.u32 %v86, 4294901760
    %604 = vmatmul.mubr.f32.gmra.mxu0 %v603
    %v605 = vpop.f32.mrf.mxu0
    %v606 = vadd.f32 %v505, %v605
    %v607 = vpop.f32.mrf.mxu0
    %608 = vdwg.mxu0
    %609 = vmatprep.subr.mxu0 0.0
    %610 = vmatpush1.msra.mxu0 0.0
    %611 = vmatprep.subr.mxu0 0.0
    %612 = vmatpush1.msra.mxu0 0.0
    %613 = vmatprep.subr.mxu0 0.0
    %614 = vmatpush1.msra.mxu0 0.0
    %615 = vmatprep.subr.mxu0 0.0
    %616 = vmatpush1.msra.mxu0 0.0
    %617 = vmatprep.subr.mxu0 0.0
    %618 = vmatpush1.msra.mxu0 0.0
    %619 = vmatprep.subr.mxu0 0.0
    %620 = vmatpush1.msra.mxu0 0.0
    %621 = vmatprep.subr.mxu0 0.0
    %622 = vmatpush1.msra.mxu0 0.0
    %623 = vmatprep.subr.mxu0 0.0
    %624 = vmatpush1.msra.mxu0 0.0
    %625 = vmatprep.subr.mxu0 0.0
    %626 = vmatpush1.msra.mxu0 0.0
    %627 = vmatprep.subr.mxu0 0.0
    %628 = vmatpush1.msra.mxu0 0.0
    %629 = vmatprep.subr.mxu0 0.0
    %630 = vmatpush1.msra.mxu0 0.0
    %631 = vmatprep.subr.mxu0 0.0
    %632 = vmatpush1.msra.mxu0 0.0
    %633 = vmatprep.subr.mxu0 0.0
    %v634 = vand.u32 %v62, 4294901760
    %635 = vmatpush1.msra.mxu0 %v634
    %636 = vmatprep.subr.mxu0 0.0
    %v637 = vand.u32 %v61, 4294901760
    %638 = vmatpush1.msra.mxu0 %v637
    %639 = vmatprep.subr.mxu0 0.0
    %v640 = vand.u32 %v60, 4294901760
    %641 = vmatpush1.msra.mxu0 %v640
    %642 = vmatprep.subr.mxu0 0.0
    %v643 = vand.u32 %v59, 4294901760
    %644 = vmatpush1.msra.mxu0 %v643
    %645 = vmatprep.subr.mxu0 0.0
    %646 = vmatpush2.msra.mxu0 0.0
    %647 = vmatprep.subr.mxu0 0.0
    %648 = vmatpush2.msra.mxu0 0.0
    %649 = vmatprep.subr.mxu0 0.0
    %650 = vmatpush2.msra.mxu0 0.0
    %651 = vmatprep.subr.mxu0 0.0
    %652 = vmatpush2.msra.mxu0 0.0
    %653 = vmatprep.subr.mxu0 0.0
    %654 = vmatpush2.msra.mxu0 0.0
    %655 = vmatprep.subr.mxu0 0.0
    %656 = vmatpush2.msra.mxu0 0.0
    %657 = vmatprep.subr.mxu0 0.0
    %658 = vmatpush2.msra.mxu0 0.0
    %659 = vmatprep.subr.mxu0 0.0
    %660 = vmatpush2.msra.mxu0 0.0
    %661 = vmatprep.subr.mxu0 0.0
    %662 = vmatpush2.msra.mxu0 0.0
    %663 = vmatprep.subr.mxu0 0.0
    %664 = vmatpush2.msra.mxu0 0.0
    %665 = vmatprep.subr.mxu0 0.0
    %666 = vmatpush2.msra.mxu0 0.0
    %667 = vmatprep.subr.mxu0 0.0
    %668 = vmatpush2.msra.mxu0 0.0
    %669 = vmatprep.subr.mxu0 0.0
    %670 = vmatpush2.msra.mxu0 0.0
    %671 = vmatprep.subr.mxu0 0.0
    %672 = vmatpush2.msra.mxu0 0.0
    %673 = vmatprep.subr.mxu0 0.0
    %674 = vmatpush2.msra.mxu0 0.0
    %675 = vmatprep.subr.mxu0 0.0
    %676 = vmatpush2.msra.mxu0 0.0
    %677 = vmatprep.mubr.f32.mxu0 0.0
    %v678 = vand.u32 %v77, 4294901760
    %679 = vmatmul.mubr.f32.gmra.mxu0 %v678
    %v680 = vpop.f32.mrf.mxu0
    %v681 = vadd.f32 %v588, %v680
    %v682 = vpop.f32.mrf.mxu0
    %683 = vmatprep.mubr.f32.mxu0 0.0
    %v684 = vand.u32 %v80, 4294901760
    %685 = vmatmul.mubr.f32.gmra.mxu0 %v684
    %v686 = vpop.f32.mrf.mxu0
    %v687 = vadd.f32 %v594, %v686
    %v688 = vpop.f32.mrf.mxu0
    %689 = vmatprep.mubr.f32.mxu0 0.0
    %v690 = vand.u32 %v83, 4294901760
    %691 = vmatmul.mubr.f32.gmra.mxu0 %v690
    %v692 = vpop.f32.mrf.mxu0
    %v693 = vadd.f32 %v600, %v692
    %v694 = vpop.f32.mrf.mxu0
    %695 = vmatprep.mubr.f32.mxu0 0.0
    %v696 = vand.u32 %v86, 4294901760
    %697 = vmatmul.mubr.f32.gmra.mxu0 %v696
    %v698 = vpop.f32.mrf.mxu0
    %v699 = vadd.f32 %v606, %v698
    %v700 = vpop.f32.mrf.mxu0
    %701 = vdwg.mxu0
    %v702 = vmul.f32 %v59, 0.95
    %v703 = vmul.f32 %v60, 0.95
    %v704 = vmul.f32 %v61, 0.95
    %v705 = vmul.f32 %v62, 0.95
    %v706 = vmul.f32 %v681, 0.05
    %v707 = vmul.f32 %v687, 0.05
    %v708 = vmul.f32 %v693, 0.05
    %v709 = vmul.f32 %v699, 0.05
    %v710 = vadd.f32 %v702, %v706
    %v711 = vadd.f32 %v703, %v707
    %v712 = vadd.f32 %v704, %v708
    %v713 = vadd.f32 %v705, %v709
    %s714 = scalar_lea.vmem [#allocation7], 64
    %v715 = vld [vmem:[%s714] sm:$0xff]
    %v716 = vld [vmem:[%s714 + $0x8] sm:$0xff]
    %v717 = vld [vmem:[%s714 + $0x10] sm:$0xff]
    %v718 = vld [vmem:[%s714 + $0x18] sm:$0xff]
    %v719 = vld [vmem:[%s714 + $0x20] sm:$0xff]
    %v720 = vld [vmem:[%s714 + $0x28] sm:$0xff]
    %v721 = vld [vmem:[%s714 + $0x30] sm:$0xff]
    %v722 = vld [vmem:[%s714 + $0x38] sm:$0xff]
    %vm723 = vcmask 523264
    %v725 = vsel %vm723, %v710, 0
    %v728 = vsel %vm723, %v711, 0
    %v731 = vsel %vm723, %v712, 0
    %v734 = vsel %vm723, %v713, 0
    %736 = vmatprep.subr.mxu0 0.0
    %737 = vmatpush1.msra.mxu0 0.0
    %738 = vmatprep.subr.mxu0 0.0
    %739 = vmatpush1.msra.mxu0 0.0
    %740 = vmatprep.subr.mxu0 0.0
    %741 = vmatpush1.msra.mxu0 0.0
    %742 = vmatprep.subr.mxu0 0.0
    %743 = vmatpush1.msra.mxu0 0.0
    %744 = vmatprep.subr.mxu0 0.0
    %745 = vmatpush1.msra.mxu0 0.0
    %746 = vmatprep.subr.mxu0 0.0
    %747 = vmatpush1.msra.mxu0 0.0
    %748 = vmatprep.subr.mxu0 0.0
    %749 = vmatpush1.msra.mxu0 0.0
    %750 = vmatprep.subr.mxu0 0.0
    %751 = vmatpush1.msra.mxu0 0.0
    %752 = vmatprep.subr.mxu0 0.0
    %v753 = vand.u32 %v722, 4294901760
    %754 = vmatpush1.msra.mxu0 %v753
    %755 = vmatprep.subr.mxu0 0.0
    %v756 = vand.u32 %v721, 4294901760
    %757 = vmatpush1.msra.mxu0 %v756
    %758 = vmatprep.subr.mxu0 0.0
    %v759 = vand.u32 %v720, 4294901760
    %760 = vmatpush1.msra.mxu0 %v759
    %761 = vmatprep.subr.mxu0 0.0
    %v762 = vand.u32 %v719, 4294901760
    %763 = vmatpush1.msra.mxu0 %v762
    %764 = vmatprep.subr.mxu0 0.0
    %v765 = vand.u32 %v718, 4294901760
    %766 = vmatpush1.msra.mxu0 %v765
    %767 = vmatprep.subr.mxu0 0.0
    %v768 = vand.u32 %v717, 4294901760
    %769 = vmatpush1.msra.mxu0 %v768
    %770 = vmatprep.subr.mxu0 0.0
    %v771 = vand.u32 %v716, 4294901760
    %772 = vmatpush1.msra.mxu0 %v771
    %773 = vmatprep.subr.mxu0 0.0
    %v774 = vand.u32 %v715, 4294901760
    %775 = vmatpush1.msra.mxu0 %v774
    %776 = vmatprep.subr.mxu0 0.0
    %777 = vmatpush2.msra.mxu0 0.0
    %778 = vmatprep.subr.mxu0 0.0
    %779 = vmatpush2.msra.mxu0 0.0
    %780 = vmatprep.subr.mxu0 0.0
    %781 = vmatpush2.msra.mxu0 0.0
    %782 = vmatprep.subr.mxu0 0.0
    %783 = vmatpush2.msra.mxu0 0.0
    %784 = vmatprep.subr.mxu0 0.0
    %785 = vmatpush2.msra.mxu0 0.0
    %786 = vmatprep.subr.mxu0 0.0
    %787 = vmatpush2.msra.mxu0 0.0
    %788 = vmatprep.subr.mxu0 0.0
    %789 = vmatpush2.msra.mxu0 0.0
    %790 = vmatprep.subr.mxu0 0.0
    %791 = vmatpush2.msra.mxu0 0.0
    %792 = vmatprep.subr.mxu0 0.0
    %793 = vmatpush2.msra.mxu0 0.0
    %794 = vmatprep.subr.mxu0 0.0
    %795 = vmatpush2.msra.mxu0 0.0
    %796 = vmatprep.subr.mxu0 0.0
    %797 = vmatpush2.msra.mxu0 0.0
    %798 = vmatprep.subr.mxu0 0.0
    %799 = vmatpush2.msra.mxu0 0.0
    %800 = vmatprep.subr.mxu0 0.0
    %801 = vmatpush2.msra.mxu0 0.0
    %802 = vmatprep.subr.mxu0 0.0
    %803 = vmatpush2.msra.mxu0 0.0
    %804 = vmatprep.subr.mxu0 0.0
    %805 = vmatpush2.msra.mxu0 0.0
    %806 = vmatprep.subr.mxu0 0.0
    %807 = vmatpush2.msra.mxu0 0.0
    %808 = vmatprep.mubr.f32.mxu0 0.0
    %v809 = vand.u32 %v725, 4294901760
    %v810 = vsub.f32 %v725, %v809
    %v811 = vand.u32 %v810, 4294901760
    %v812 = vsub.f32 %v810, %v811
    %v813 = vand.u32 %v812, 4294901760
    %814 = vmatmul.mubr.f32.gmra.mxu0 %v813
    %v815 = vpop.f32.mrf.mxu0
    %v816 = vadd.f32 0.0, %v815
    %v817 = vpop.f32.mrf.mxu0
    %818 = vmatprep.mubr.f32.mxu0 0.0
    %v819 = vand.u32 %v728, 4294901760
    %v820 = vsub.f32 %v728, %v819
    %v821 = vand.u32 %v820, 4294901760
    %v822 = vsub.f32 %v820, %v821
    %v823 = vand.u32 %v822, 4294901760
    %824 = vmatmul.mubr.f32.gmra.mxu0 %v823
    %v825 = vpop.f32.mrf.mxu0
    %v826 = vadd.f32 0.0, %v825
    %v827 = vpop.f32.mrf.mxu0
    %828 = vmatprep.mubr.f32.mxu0 0.0
    %v829 = vand.u32 %v731, 4294901760
    %v830 = vsub.f32 %v731, %v829
    %v831 = vand.u32 %v830, 4294901760
    %v832 = vsub.f32 %v830, %v831
    %v833 = vand.u32 %v832, 4294901760
    %834 = vmatmul.mubr.f32.gmra.mxu0 %v833
    %v835 = vpop.f32.mrf.mxu0
    %v836 = vadd.f32 0.0, %v835
    %v837 = vpop.f32.mrf.mxu0
    %838 = vmatprep.mubr.f32.mxu0 0.0
    %v839 = vand.u32 %v734, 4294901760
    %v840 = vsub.f32 %v734, %v839
    %v841 = vand.u32 %v840, 4294901760
    %v842 = vsub.f32 %v840, %v841
    %v843 = vand.u32 %v842, 4294901760
    %844 = vmatmul.mubr.f32.gmra.mxu0 %v843
    %v845 = vpop.f32.mrf.mxu0
    %v846 = vadd.f32 0.0, %v845
    %v847 = vpop.f32.mrf.mxu0
    %848 = vdwg.mxu0
    %849 = vmatprep.subr.mxu0 0.0
    %850 = vmatpush1.msra.mxu0 0.0
    %851 = vmatprep.subr.mxu0 0.0
    %852 = vmatpush1.msra.mxu0 0.0
    %853 = vmatprep.subr.mxu0 0.0
    %854 = vmatpush1.msra.mxu0 0.0
    %855 = vmatprep.subr.mxu0 0.0
    %856 = vmatpush1.msra.mxu0 0.0
    %857 = vmatprep.subr.mxu0 0.0
    %858 = vmatpush1.msra.mxu0 0.0
    %859 = vmatprep.subr.mxu0 0.0
    %860 = vmatpush1.msra.mxu0 0.0
    %861 = vmatprep.subr.mxu0 0.0
    %862 = vmatpush1.msra.mxu0 0.0
    %863 = vmatprep.subr.mxu0 0.0
    %864 = vmatpush1.msra.mxu0 0.0
    %865 = vmatprep.subr.mxu0 0.0
    %v866 = vand.u32 %v722, 4294901760
    %v867 = vsub.f32 %v722, %v866
    %v868 = vand.u32 %v867, 4294901760
    %v869 = vsub.f32 %v867, %v868
    %v870 = vand.u32 %v869, 4294901760
    %871 = vmatpush1.msra.mxu0 %v870
    %872 = vmatprep.subr.mxu0 0.0
    %v873 = vand.u32 %v721, 4294901760
    %v874 = vsub.f32 %v721, %v873
    %v875 = vand.u32 %v874, 4294901760
    %v876 = vsub.f32 %v874, %v875
    %v877 = vand.u32 %v876, 4294901760
    %878 = vmatpush1.msra.mxu0 %v877
    %879 = vmatprep.subr.mxu0 0.0
    %v880 = vand.u32 %v720, 4294901760
    %v881 = vsub.f32 %v720, %v880
    %v882 = vand.u32 %v881, 4294901760
    %v883 = vsub.f32 %v881, %v882
    %v884 = vand.u32 %v883, 4294901760
    %885 = vmatpush1.msra.mxu0 %v884
    %886 = vmatprep.subr.mxu0 0.0
    %v887 = vand.u32 %v719, 4294901760
    %v888 = vsub.f32 %v719, %v887
    %v889 = vand.u32 %v888, 4294901760
    %v890 = vsub.f32 %v888, %v889
    %v891 = vand.u32 %v890, 4294901760
    %892 = vmatpush1.msra.mxu0 %v891
    %893 = vmatprep.subr.mxu0 0.0
    %v894 = vand.u32 %v718, 4294901760
    %v895 = vsub.f32 %v718, %v894
    %v896 = vand.u32 %v895, 4294901760
    %v897 = vsub.f32 %v895, %v896
    %v898 = vand.u32 %v897, 4294901760
    %899 = vmatpush1.msra.mxu0 %v898
    %900 = vmatprep.subr.mxu0 0.0
    %v901 = vand.u32 %v717, 4294901760
    %v902 = vsub.f32 %v717, %v901
    %v903 = vand.u32 %v902, 4294901760
    %v904 = vsub.f32 %v902, %v903
    %v905 = vand.u32 %v904, 4294901760
    %906 = vmatpush1.msra.mxu0 %v905
    %907 = vmatprep.subr.mxu0 0.0
    %v908 = vand.u32 %v716, 4294901760
    %v909 = vsub.f32 %v716, %v908
    %v910 = vand.u32 %v909, 4294901760
    %v911 = vsub.f32 %v909, %v910
    %v912 = vand.u32 %v911, 4294901760
    %913 = vmatpush1.msra.mxu0 %v912
    %914 = vmatprep.subr.mxu0 0.0
    %v915 = vand.u32 %v715, 4294901760
    %v916 = vsub.f32 %v715, %v915
    %v917 = vand.u32 %v916, 4294901760
    %v918 = vsub.f32 %v916, %v917
    %v919 = vand.u32 %v918, 4294901760
    %920 = vmatpush1.msra.mxu0 %v919
    %921 = vmatprep.subr.mxu0 0.0
    %922 = vmatpush2.msra.mxu0 0.0
    %923 = vmatprep.subr.mxu0 0.0
    %924 = vmatpush2.msra.mxu0 0.0
    %925 = vmatprep.subr.mxu0 0.0
    %926 = vmatpush2.msra.mxu0 0.0
    %927 = vmatprep.subr.mxu0 0.0
    %928 = vmatpush2.msra.mxu0 0.0
    %929 = vmatprep.subr.mxu0 0.0
    %930 = vmatpush2.msra.mxu0 0.0
    %931 = vmatprep.subr.mxu0 0.0
    %932 = vmatpush2.msra.mxu0 0.0
    %933 = vmatprep.subr.mxu0 0.0
    %934 = vmatpush2.msra.mxu0 0.0
    %935 = vmatprep.subr.mxu0 0.0
    %936 = vmatpush2.msra.mxu0 0.0
    %937 = vmatprep.subr.mxu0 0.0
    %938 = vmatpush2.msra.mxu0 0.0
    %939 = vmatprep.subr.mxu0 0.0
    %940 = vmatpush2.msra.mxu0 0.0
    %941 = vmatprep.subr.mxu0 0.0
    %942 = vmatpush2.msra.mxu0 0.0
    %943 = vmatprep.subr.mxu0 0.0
    %944 = vmatpush2.msra.mxu0 0.0
    %945 = vmatprep.subr.mxu0 0.0
    %946 = vmatpush2.msra.mxu0 0.0
    %947 = vmatprep.subr.mxu0 0.0
    %948 = vmatpush2.msra.mxu0 0.0
    %949 = vmatprep.subr.mxu0 0.0
    %950 = vmatpush2.msra.mxu0 0.0
    %951 = vmatprep.subr.mxu0 0.0
    %952 = vmatpush2.msra.mxu0 0.0
    %953 = vmatprep.mubr.f32.mxu0 0.0
    %v954 = vand.u32 %v725, 4294901760
    %955 = vmatmul.mubr.f32.gmra.mxu0 %v954
    %v956 = vpop.f32.mrf.mxu0
    %v957 = vadd.f32 %v816, %v956
    %v958 = vpop.f32.mrf.mxu0
    %959 = vmatprep.mubr.f32.mxu0 0.0
    %v960 = vand.u32 %v728, 4294901760
    %961 = vmatmul.mubr.f32.gmra.mxu0 %v960
    %v962 = vpop.f32.mrf.mxu0
    %v963 = vadd.f32 %v826, %v962
    %v964 = vpop.f32.mrf.mxu0
    %965 = vmatprep.mubr.f32.mxu0 0.0
    %v966 = vand.u32 %v731, 4294901760
    %967 = vmatmul.mubr.f32.gmra.mxu0 %v966
    %v968 = vpop.f32.mrf.mxu0
    %v969 = vadd.f32 %v836, %v968
    %v970 = vpop.f32.mrf.mxu0
    %971 = vmatprep.mubr.f32.mxu0 0.0
    %v972 = vand.u32 %v734, 4294901760
    %973 = vmatmul.mubr.f32.gmra.mxu0 %v972
    %v974 = vpop.f32.mrf.mxu0
    %v975 = vadd.f32 %v846, %v974
    %v976 = vpop.f32.mrf.mxu0
    %977 = vdwg.mxu0
    %978 = vmatprep.subr.mxu0 0.0
    %979 = vmatpush1.msra.mxu0 0.0
    %980 = vmatprep.subr.mxu0 0.0
    %981 = vmatpush1.msra.mxu0 0.0
    %982 = vmatprep.subr.mxu0 0.0
    %983 = vmatpush1.msra.mxu0 0.0
    %984 = vmatprep.subr.mxu0 0.0
    %985 = vmatpush1.msra.mxu0 0.0
    %986 = vmatprep.subr.mxu0 0.0
    %987 = vmatpush1.msra.mxu0 0.0
    %988 = vmatprep.subr.mxu0 0.0
    %989 = vmatpush1.msra.mxu0 0.0
    %990 = vmatprep.subr.mxu0 0.0
    %991 = vmatpush1.msra.mxu0 0.0
    %992 = vmatprep.subr.mxu0 0.0
    %993 = vmatpush1.msra.mxu0 0.0
    %994 = vmatprep.subr.mxu0 0.0
    %v995 = vand.u32 %v722, 4294901760
    %v996 = vsub.f32 %v722, %v995
    %997 = vmatpush1.msra.mxu0 %v996
    %998 = vmatprep.subr.mxu0 0.0
    %v999 = vand.u32 %v721, 4294901760
    %v1000 = vsub.f32 %v721, %v999
    %1001 = vmatpush1.msra.mxu0 %v1000
    %1002 = vmatprep.subr.mxu0 0.0
    %v1003 = vand.u32 %v720, 4294901760
    %v1004 = vsub.f32 %v720, %v1003
    %1005 = vmatpush1.msra.mxu0 %v1004
    %1006 = vmatprep.subr.mxu0 0.0
    %v1007 = vand.u32 %v719, 4294901760
    %v1008 = vsub.f32 %v719, %v1007
    %1009 = vmatpush1.msra.mxu0 %v1008
    %1010 = vmatprep.subr.mxu0 0.0
    %v1011 = vand.u32 %v718, 4294901760
    %v1012 = vsub.f32 %v718, %v1011
    %1013 = vmatpush1.msra.mxu0 %v1012
    %1014 = vmatprep.subr.mxu0 0.0
    %v1015 = vand.u32 %v717, 4294901760
    %v1016 = vsub.f32 %v717, %v1015
    %1017 = vmatpush1.msra.mxu0 %v1016
    %1018 = vmatprep.subr.mxu0 0.0
    %v1019 = vand.u32 %v716, 4294901760
    %v1020 = vsub.f32 %v716, %v1019
    %1021 = vmatpush1.msra.mxu0 %v1020
    %1022 = vmatprep.subr.mxu0 0.0
    %v1023 = vand.u32 %v715, 4294901760
    %v1024 = vsub.f32 %v715, %v1023
    %1025 = vmatpush1.msra.mxu0 %v1024
    %1026 = vmatprep.subr.mxu0 0.0
    %1027 = vmatpush2.msra.mxu0 0.0
    %1028 = vmatprep.subr.mxu0 0.0
    %1029 = vmatpush2.msra.mxu0 0.0
    %1030 = vmatprep.subr.mxu0 0.0
    %1031 = vmatpush2.msra.mxu0 0.0
    %1032 = vmatprep.subr.mxu0 0.0
    %1033 = vmatpush2.msra.mxu0 0.0
    %1034 = vmatprep.subr.mxu0 0.0
    %1035 = vmatpush2.msra.mxu0 0.0
    %1036 = vmatprep.subr.mxu0 0.0
    %1037 = vmatpush2.msra.mxu0 0.0
    %1038 = vmatprep.subr.mxu0 0.0
    %1039 = vmatpush2.msra.mxu0 0.0
    %1040 = vmatprep.subr.mxu0 0.0
    %1041 = vmatpush2.msra.mxu0 0.0
    %1042 = vmatprep.subr.mxu0 0.0
    %1043 = vmatpush2.msra.mxu0 0.0
    %1044 = vmatprep.subr.mxu0 0.0
    %1045 = vmatpush2.msra.mxu0 0.0
    %1046 = vmatprep.subr.mxu0 0.0
    %1047 = vmatpush2.msra.mxu0 0.0
    %1048 = vmatprep.subr.mxu0 0.0
    %1049 = vmatpush2.msra.mxu0 0.0
    %1050 = vmatprep.subr.mxu0 0.0
    %1051 = vmatpush2.msra.mxu0 0.0
    %1052 = vmatprep.subr.mxu0 0.0
    %1053 = vmatpush2.msra.mxu0 0.0
    %1054 = vmatprep.subr.mxu0 0.0
    %1055 = vmatpush2.msra.mxu0 0.0
    %1056 = vmatprep.subr.mxu0 0.0
    %1057 = vmatpush2.msra.mxu0 0.0
    %1058 = vmatprep.mubr.f32.mxu0 0.0
    %v1059 = vand.u32 %v725, 4294901760
    %v1060 = vsub.f32 %v725, %v1059
    %1061 = vmatmul.mubr.f32.gmra.mxu0 %v1060
    %v1062 = vpop.f32.mrf.mxu0
    %v1063 = vadd.f32 %v957, %v1062
    %v1064 = vpop.f32.mrf.mxu0
    %1065 = vmatprep.mubr.f32.mxu0 0.0
    %v1066 = vand.u32 %v728, 4294901760
    %v1067 = vsub.f32 %v728, %v1066
    %1068 = vmatmul.mubr.f32.gmra.mxu0 %v1067
    %v1069 = vpop.f32.mrf.mxu0
    %v1070 = vadd.f32 %v963, %v1069
    %v1071 = vpop.f32.mrf.mxu0
    %1072 = vmatprep.mubr.f32.mxu0 0.0
    %v1073 = vand.u32 %v731, 4294901760
    %v1074 = vsub.f32 %v731, %v1073
    %1075 = vmatmul.mubr.f32.gmra.mxu0 %v1074
    %v1076 = vpop.f32.mrf.mxu0
    %v1077 = vadd.f32 %v969, %v1076
    %v1078 = vpop.f32.mrf.mxu0
    %1079 = vmatprep.mubr.f32.mxu0 0.0
    %v1080 = vand.u32 %v734, 4294901760
    %v1081 = vsub.f32 %v734, %v1080
    %1082 = vmatmul.mubr.f32.gmra.mxu0 %v1081
    %v1083 = vpop.f32.mrf.mxu0
    %v1084 = vadd.f32 %v975, %v1083
    %v1085 = vpop.f32.mrf.mxu0
    %1086 = vdwg.mxu0
    %1087 = vmatprep.subr.mxu0 0.0
    %1088 = vmatpush1.msra.mxu0 0.0
    %1089 = vmatprep.subr.mxu0 0.0
    %1090 = vmatpush1.msra.mxu0 0.0
    %1091 = vmatprep.subr.mxu0 0.0
    %1092 = vmatpush1.msra.mxu0 0.0
    %1093 = vmatprep.subr.mxu0 0.0
    %1094 = vmatpush1.msra.mxu0 0.0
    %1095 = vmatprep.subr.mxu0 0.0
    %1096 = vmatpush1.msra.mxu0 0.0
    %1097 = vmatprep.subr.mxu0 0.0
    %1098 = vmatpush1.msra.mxu0 0.0
    %1099 = vmatprep.subr.mxu0 0.0
    %1100 = vmatpush1.msra.mxu0 0.0
    %1101 = vmatprep.subr.mxu0 0.0
    %1102 = vmatpush1.msra.mxu0 0.0
    %1103 = vmatprep.subr.mxu0 0.0
    %v1104 = vand.u32 %v722, 4294901760
    %1105 = vmatpush1.msra.mxu0 %v1104
    %1106 = vmatprep.subr.mxu0 0.0
    %v1107 = vand.u32 %v721, 4294901760
    %1108 = vmatpush1.msra.mxu0 %v1107
    %1109 = vmatprep.subr.mxu0 0.0
    %v1110 = vand.u32 %v720, 4294901760
    %1111 = vmatpush1.msra.mxu0 %v1110
    %1112 = vmatprep.subr.mxu0 0.0
    %v1113 = vand.u32 %v719, 4294901760
    %1114 = vmatpush1.msra.mxu0 %v1113
    %1115 = vmatprep.subr.mxu0 0.0
    %v1116 = vand.u32 %v718, 4294901760
    %1117 = vmatpush1.msra.mxu0 %v1116
    %1118 = vmatprep.subr.mxu0 0.0
    %v1119 = vand.u32 %v717, 4294901760
    %1120 = vmatpush1.msra.mxu0 %v1119
    %1121 = vmatprep.subr.mxu0 0.0
    %v1122 = vand.u32 %v716, 4294901760
    %1123 = vmatpush1.msra.mxu0 %v1122
    %1124 = vmatprep.subr.mxu0 0.0
    %v1125 = vand.u32 %v715, 4294901760
    %1126 = vmatpush1.msra.mxu0 %v1125
    %1127 = vmatprep.subr.mxu0 0.0
    %1128 = vmatpush2.msra.mxu0 0.0
    %1129 = vmatprep.subr.mxu0 0.0
    %1130 = vmatpush2.msra.mxu0 0.0
    %1131 = vmatprep.subr.mxu0 0.0
    %1132 = vmatpush2.msra.mxu0 0.0
    %1133 = vmatprep.subr.mxu0 0.0
    %1134 = vmatpush2.msra.mxu0 0.0
    %1135 = vmatprep.subr.mxu0 0.0
    %1136 = vmatpush2.msra.mxu0 0.0
    %1137 = vmatprep.subr.mxu0 0.0
    %1138 = vmatpush2.msra.mxu0 0.0
    %1139 = vmatprep.subr.mxu0 0.0
    %1140 = vmatpush2.msra.mxu0 0.0
    %1141 = vmatprep.subr.mxu0 0.0
    %1142 = vmatpush2.msra.mxu0 0.0
    %1143 = vmatprep.subr.mxu0 0.0
    %1144 = vmatpush2.msra.mxu0 0.0
    %1145 = vmatprep.subr.mxu0 0.0
    %1146 = vmatpush2.msra.mxu0 0.0
    %1147 = vmatprep.subr.mxu0 0.0
    %1148 = vmatpush2.msra.mxu0 0.0
    %1149 = vmatprep.subr.mxu0 0.0
    %1150 = vmatpush2.msra.mxu0 0.0
    %1151 = vmatprep.subr.mxu0 0.0
    %1152 = vmatpush2.msra.mxu0 0.0
    %1153 = vmatprep.subr.mxu0 0.0
    %1154 = vmatpush2.msra.mxu0 0.0
    %1155 = vmatprep.subr.mxu0 0.0
    %1156 = vmatpush2.msra.mxu0 0.0
    %1157 = vmatprep.subr.mxu0 0.0
    %1158 = vmatpush2.msra.mxu0 0.0
    %1159 = vmatprep.mubr.f32.mxu0 0.0
    %v1160 = vand.u32 %v725, 4294901760
    %v1161 = vsub.f32 %v725, %v1160
    %v1162 = vand.u32 %v1161, 4294901760
    %1163 = vmatmul.mubr.f32.gmra.mxu0 %v1162
    %v1164 = vpop.f32.mrf.mxu0
    %v1165 = vadd.f32 %v1063, %v1164
    %v1166 = vpop.f32.mrf.mxu0
    %1167 = vmatprep.mubr.f32.mxu0 0.0
    %v1168 = vand.u32 %v728, 4294901760
    %v1169 = vsub.f32 %v728, %v1168
    %v1170 = vand.u32 %v1169, 4294901760
    %1171 = vmatmul.mubr.f32.gmra.mxu0 %v1170
    %v1172 = vpop.f32.mrf.mxu0
    %v1173 = vadd.f32 %v1070, %v1172
    %v1174 = vpop.f32.mrf.mxu0
    %1175 = vmatprep.mubr.f32.mxu0 0.0
    %v1176 = vand.u32 %v731, 4294901760
    %v1177 = vsub.f32 %v731, %v1176
    %v1178 = vand.u32 %v1177, 4294901760
    %1179 = vmatmul.mubr.f32.gmra.mxu0 %v1178
    %v1180 = vpop.f32.mrf.mxu0
    %v1181 = vadd.f32 %v1077, %v1180
    %v1182 = vpop.f32.mrf.mxu0
    %1183 = vmatprep.mubr.f32.mxu0 0.0
    %v1184 = vand.u32 %v734, 4294901760
    %v1185 = vsub.f32 %v734, %v1184
    %v1186 = vand.u32 %v1185, 4294901760
    %1187 = vmatmul.mubr.f32.gmra.mxu0 %v1186
    %v1188 = vpop.f32.mrf.mxu0
    %v1189 = vadd.f32 %v1084, %v1188
    %v1190 = vpop.f32.mrf.mxu0
    %1191 = vdwg.mxu0
    %1192 = vmatprep.subr.mxu0 0.0
    %1193 = vmatpush1.msra.mxu0 0.0
    %1194 = vmatprep.subr.mxu0 0.0
    %1195 = vmatpush1.msra.mxu0 0.0
    %1196 = vmatprep.subr.mxu0 0.0
    %1197 = vmatpush1.msra.mxu0 0.0
    %1198 = vmatprep.subr.mxu0 0.0
    %1199 = vmatpush1.msra.mxu0 0.0
    %1200 = vmatprep.subr.mxu0 0.0
    %1201 = vmatpush1.msra.mxu0 0.0
    %1202 = vmatprep.subr.mxu0 0.0
    %1203 = vmatpush1.msra.mxu0 0.0
    %1204 = vmatprep.subr.mxu0 0.0
    %1205 = vmatpush1.msra.mxu0 0.0
    %1206 = vmatprep.subr.mxu0 0.0
    %1207 = vmatpush1.msra.mxu0 0.0
    %1208 = vmatprep.subr.mxu0 0.0
    %v1209 = vand.u32 %v722, 4294901760
    %v1210 = vsub.f32 %v722, %v1209
    %v1211 = vand.u32 %v1210, 4294901760
    %1212 = vmatpush1.msra.mxu0 %v1211
    %1213 = vmatprep.subr.mxu0 0.0
    %v1214 = vand.u32 %v721, 4294901760
    %v1215 = vsub.f32 %v721, %v1214
    %v1216 = vand.u32 %v1215, 4294901760
    %1217 = vmatpush1.msra.mxu0 %v1216
    %1218 = vmatprep.subr.mxu0 0.0
    %v1219 = vand.u32 %v720, 4294901760
    %v1220 = vsub.f32 %v720, %v1219
    %v1221 = vand.u32 %v1220, 4294901760
    %1222 = vmatpush1.msra.mxu0 %v1221
    %1223 = vmatprep.subr.mxu0 0.0
    %v1224 = vand.u32 %v719, 4294901760
    %v1225 = vsub.f32 %v719, %v1224
    %v1226 = vand.u32 %v1225, 4294901760
    %1227 = vmatpush1.msra.mxu0 %v1226
    %1228 = vmatprep.subr.mxu0 0.0
    %v1229 = vand.u32 %v718, 4294901760
    %v1230 = vsub.f32 %v718, %v1229
    %v1231 = vand.u32 %v1230, 4294901760
    %1232 = vmatpush1.msra.mxu0 %v1231
    %1233 = vmatprep.subr.mxu0 0.0
    %v1234 = vand.u32 %v717, 4294901760
    %v1235 = vsub.f32 %v717, %v1234
    %v1236 = vand.u32 %v1235, 4294901760
    %1237 = vmatpush1.msra.mxu0 %v1236
    %1238 = vmatprep.subr.mxu0 0.0
    %v1239 = vand.u32 %v716, 4294901760
    %v1240 = vsub.f32 %v716, %v1239
    %v1241 = vand.u32 %v1240, 4294901760
    %1242 = vmatpush1.msra.mxu0 %v1241
    %1243 = vmatprep.subr.mxu0 0.0
    %v1244 = vand.u32 %v715, 4294901760
    %v1245 = vsub.f32 %v715, %v1244
    %v1246 = vand.u32 %v1245, 4294901760
    %1247 = vmatpush1.msra.mxu0 %v1246
    %1248 = vmatprep.subr.mxu0 0.0
    %1249 = vmatpush2.msra.mxu0 0.0
    %1250 = vmatprep.subr.mxu0 0.0
    %1251 = vmatpush2.msra.mxu0 0.0
    %1252 = vmatprep.subr.mxu0 0.0
    %1253 = vmatpush2.msra.mxu0 0.0
    %1254 = vmatprep.subr.mxu0 0.0
    %1255 = vmatpush2.msra.mxu0 0.0
    %1256 = vmatprep.subr.mxu0 0.0
    %1257 = vmatpush2.msra.mxu0 0.0
    %1258 = vmatprep.subr.mxu0 0.0
    %1259 = vmatpush2.msra.mxu0 0.0
    %1260 = vmatprep.subr.mxu0 0.0
    %1261 = vmatpush2.msra.mxu0 0.0
    %1262 = vmatprep.subr.mxu0 0.0
    %1263 = vmatpush2.msra.mxu0 0.0
    %1264 = vmatprep.subr.mxu0 0.0
    %1265 = vmatpush2.msra.mxu0 0.0
    %1266 = vmatprep.subr.mxu0 0.0
    %1267 = vmatpush2.msra.mxu0 0.0
    %1268 = vmatprep.subr.mxu0 0.0
    %1269 = vmatpush2.msra.mxu0 0.0
    %1270 = vmatprep.subr.mxu0 0.0
    %1271 = vmatpush2.msra.mxu0 0.0
    %1272 = vmatprep.subr.mxu0 0.0
    %1273 = vmatpush2.msra.mxu0 0.0
    %1274 = vmatprep.subr.mxu0 0.0
    %1275 = vmatpush2.msra.mxu0 0.0
    %1276 = vmatprep.subr.mxu0 0.0
    %1277 = vmatpush2.msra.mxu0 0.0
    %1278 = vmatprep.subr.mxu0 0.0
    %1279 = vmatpush2.msra.mxu0 0.0
    %1280 = vmatprep.mubr.f32.mxu0 0.0
    %v1281 = vand.u32 %v725, 4294901760
    %1282 = vmatmul.mubr.f32.gmra.mxu0 %v1281
    %v1283 = vpop.f32.mrf.mxu0
    %v1284 = vadd.f32 %v1165, %v1283
    %v1285 = vpop.f32.mrf.mxu0
    %1286 = vmatprep.mubr.f32.mxu0 0.0
    %v1287 = vand.u32 %v728, 4294901760
    %1288 = vmatmul.mubr.f32.gmra.mxu0 %v1287
    %v1289 = vpop.f32.mrf.mxu0
    %v1290 = vadd.f32 %v1173, %v1289
    %v1291 = vpop.f32.mrf.mxu0
    %1292 = vmatprep.mubr.f32.mxu0 0.0
    %v1293 = vand.u32 %v731, 4294901760
    %1294 = vmatmul.mubr.f32.gmra.mxu0 %v1293
    %v1295 = vpop.f32.mrf.mxu0
    %v1296 = vadd.f32 %v1181, %v1295
    %v1297 = vpop.f32.mrf.mxu0
    %1298 = vmatprep.mubr.f32.mxu0 0.0
    %v1299 = vand.u32 %v734, 4294901760
    %1300 = vmatmul.mubr.f32.gmra.mxu0 %v1299
    %v1301 = vpop.f32.mrf.mxu0
    %v1302 = vadd.f32 %v1189, %v1301
    %v1303 = vpop.f32.mrf.mxu0
    %1304 = vdwg.mxu0
    %1305 = vmatprep.subr.mxu0 0.0
    %1306 = vmatpush1.msra.mxu0 0.0
    %1307 = vmatprep.subr.mxu0 0.0
    %1308 = vmatpush1.msra.mxu0 0.0
    %1309 = vmatprep.subr.mxu0 0.0
    %1310 = vmatpush1.msra.mxu0 0.0
    %1311 = vmatprep.subr.mxu0 0.0
    %1312 = vmatpush1.msra.mxu0 0.0
    %1313 = vmatprep.subr.mxu0 0.0
    %1314 = vmatpush1.msra.mxu0 0.0
    %1315 = vmatprep.subr.mxu0 0.0
    %1316 = vmatpush1.msra.mxu0 0.0
    %1317 = vmatprep.subr.mxu0 0.0
    %1318 = vmatpush1.msra.mxu0 0.0
    %1319 = vmatprep.subr.mxu0 0.0
    %1320 = vmatpush1.msra.mxu0 0.0
    %1321 = vmatprep.subr.mxu0 0.0
    %v1322 = vand.u32 %v722, 4294901760
    %1323 = vmatpush1.msra.mxu0 %v1322
    %1324 = vmatprep.subr.mxu0 0.0
    %v1325 = vand.u32 %v721, 4294901760
    %1326 = vmatpush1.msra.mxu0 %v1325
    %1327 = vmatprep.subr.mxu0 0.0
    %v1328 = vand.u32 %v720, 4294901760
    %1329 = vmatpush1.msra.mxu0 %v1328
    %1330 = vmatprep.subr.mxu0 0.0
    %v1331 = vand.u32 %v719, 4294901760
    %1332 = vmatpush1.msra.mxu0 %v1331
    %1333 = vmatprep.subr.mxu0 0.0
    %v1334 = vand.u32 %v718, 4294901760
    %1335 = vmatpush1.msra.mxu0 %v1334
    %1336 = vmatprep.subr.mxu0 0.0
    %v1337 = vand.u32 %v717, 4294901760
    %1338 = vmatpush1.msra.mxu0 %v1337
    %1339 = vmatprep.subr.mxu0 0.0
    %v1340 = vand.u32 %v716, 4294901760
    %1341 = vmatpush1.msra.mxu0 %v1340
    %1342 = vmatprep.subr.mxu0 0.0
    %v1343 = vand.u32 %v715, 4294901760
    %1344 = vmatpush1.msra.mxu0 %v1343
    %1345 = vmatprep.subr.mxu0 0.0
    %1346 = vmatpush2.msra.mxu0 0.0
    %1347 = vmatprep.subr.mxu0 0.0
    %1348 = vmatpush2.msra.mxu0 0.0
    %1349 = vmatprep.subr.mxu0 0.0
    %1350 = vmatpush2.msra.mxu0 0.0
    %1351 = vmatprep.subr.mxu0 0.0
    %1352 = vmatpush2.msra.mxu0 0.0
    %1353 = vmatprep.subr.mxu0 0.0
    %1354 = vmatpush2.msra.mxu0 0.0
    %1355 = vmatprep.subr.mxu0 0.0
    %1356 = vmatpush2.msra.mxu0 0.0
    %1357 = vmatprep.subr.mxu0 0.0
    %1358 = vmatpush2.msra.mxu0 0.0
    %1359 = vmatprep.subr.mxu0 0.0
    %1360 = vmatpush2.msra.mxu0 0.0
    %1361 = vmatprep.subr.mxu0 0.0
    %1362 = vmatpush2.msra.mxu0 0.0
    %1363 = vmatprep.subr.mxu0 0.0
    %1364 = vmatpush2.msra.mxu0 0.0
    %1365 = vmatprep.subr.mxu0 0.0
    %1366 = vmatpush2.msra.mxu0 0.0
    %1367 = vmatprep.subr.mxu0 0.0
    %1368 = vmatpush2.msra.mxu0 0.0
    %1369 = vmatprep.subr.mxu0 0.0
    %1370 = vmatpush2.msra.mxu0 0.0
    %1371 = vmatprep.subr.mxu0 0.0
    %1372 = vmatpush2.msra.mxu0 0.0
    %1373 = vmatprep.subr.mxu0 0.0
    %1374 = vmatpush2.msra.mxu0 0.0
    %1375 = vmatprep.subr.mxu0 0.0
    %1376 = vmatpush2.msra.mxu0 0.0
    %1377 = vmatprep.mubr.f32.mxu0 0.0
    %v1378 = vand.u32 %v725, 4294901760
    %1379 = vmatmul.mubr.f32.gmra.mxu0 %v1378
    %v1380 = vpop.f32.mrf.mxu0
    %v1381 = vadd.f32 %v1284, %v1380
    %v1382 = vpop.f32.mrf.mxu0
    %1383 = vmatprep.mubr.f32.mxu0 0.0
    %v1384 = vand.u32 %v728, 4294901760
    %1385 = vmatmul.mubr.f32.gmra.mxu0 %v1384
    %v1386 = vpop.f32.mrf.mxu0
    %v1387 = vadd.f32 %v1290, %v1386
    %v1388 = vpop.f32.mrf.mxu0
    %1389 = vmatprep.mubr.f32.mxu0 0.0
    %v1390 = vand.u32 %v731, 4294901760
    %1391 = vmatmul.mubr.f32.gmra.mxu0 %v1390
    %v1392 = vpop.f32.mrf.mxu0
    %v1393 = vadd.f32 %v1296, %v1392
    %v1394 = vpop.f32.mrf.mxu0
    %1395 = vmatprep.mubr.f32.mxu0 0.0
    %v1396 = vand.u32 %v734, 4294901760
    %1397 = vmatmul.mubr.f32.gmra.mxu0 %v1396
    %v1398 = vpop.f32.mrf.mxu0
    %v1399 = vadd.f32 %v1302, %v1398
    %v1400 = vpop.f32.mrf.mxu0
    %1401 = vdwg.mxu0
    %v1403 = vsel %vm723, %v59, 0
    %v1406 = vsel %vm723, %v60, 0
    %v1409 = vsel %vm723, %v61, 0
    %v1412 = vsel %vm723, %v62, 0
    %1414 = vmatprep.subr.mxu0 0.0
    %1415 = vmatpush1.msra.mxu0 0.0
    %1416 = vmatprep.subr.mxu0 0.0
    %1417 = vmatpush1.msra.mxu0 0.0
    %1418 = vmatprep.subr.mxu0 0.0
    %1419 = vmatpush1.msra.mxu0 0.0
    %1420 = vmatprep.subr.mxu0 0.0
    %1421 = vmatpush1.msra.mxu0 0.0
    %1422 = vmatprep.subr.mxu0 0.0
    %1423 = vmatpush1.msra.mxu0 0.0
    %1424 = vmatprep.subr.mxu0 0.0
    %1425 = vmatpush1.msra.mxu0 0.0
    %1426 = vmatprep.subr.mxu0 0.0
    %1427 = vmatpush1.msra.mxu0 0.0
    %1428 = vmatprep.subr.mxu0 0.0
    %1429 = vmatpush1.msra.mxu0 0.0
    %1430 = vmatprep.subr.mxu0 0.0
    %v1431 = vand.u32 %v74, 4294901760
    %1432 = vmatpush1.msra.mxu0 %v1431
    %1433 = vmatprep.subr.mxu0 0.0
    %v1434 = vand.u32 %v73, 4294901760
    %1435 = vmatpush1.msra.mxu0 %v1434
    %1436 = vmatprep.subr.mxu0 0.0
    %v1437 = vand.u32 %v72, 4294901760
    %1438 = vmatpush1.msra.mxu0 %v1437
    %1439 = vmatprep.subr.mxu0 0.0
    %v1440 = vand.u32 %v71, 4294901760
    %1441 = vmatpush1.msra.mxu0 %v1440
    %1442 = vmatprep.subr.mxu0 0.0
    %v1443 = vand.u32 %v70, 4294901760
    %1444 = vmatpush1.msra.mxu0 %v1443
    %1445 = vmatprep.subr.mxu0 0.0
    %v1446 = vand.u32 %v69, 4294901760
    %1447 = vmatpush1.msra.mxu0 %v1446
    %1448 = vmatprep.subr.mxu0 0.0
    %v1449 = vand.u32 %v68, 4294901760
    %1450 = vmatpush1.msra.mxu0 %v1449
    %1451 = vmatprep.subr.mxu0 0.0
    %v1452 = vand.u32 %v67, 4294901760
    %1453 = vmatpush1.msra.mxu0 %v1452
    %1454 = vmatprep.subr.mxu0 0.0
    %1455 = vmatpush2.msra.mxu0 0.0
    %1456 = vmatprep.subr.mxu0 0.0
    %1457 = vmatpush2.msra.mxu0 0.0
    %1458 = vmatprep.subr.mxu0 0.0
    %1459 = vmatpush2.msra.mxu0 0.0
    %1460 = vmatprep.subr.mxu0 0.0
    %1461 = vmatpush2.msra.mxu0 0.0
    %1462 = vmatprep.subr.mxu0 0.0
    %1463 = vmatpush2.msra.mxu0 0.0
    %1464 = vmatprep.subr.mxu0 0.0
    %1465 = vmatpush2.msra.mxu0 0.0
    %1466 = vmatprep.subr.mxu0 0.0
    %1467 = vmatpush2.msra.mxu0 0.0
    %1468 = vmatprep.subr.mxu0 0.0
    %1469 = vmatpush2.msra.mxu0 0.0
    %1470 = vmatprep.subr.mxu0 0.0
    %1471 = vmatpush2.msra.mxu0 0.0
    %1472 = vmatprep.subr.mxu0 0.0
    %1473 = vmatpush2.msra.mxu0 0.0
    %1474 = vmatprep.subr.mxu0 0.0
    %1475 = vmatpush2.msra.mxu0 0.0
    %1476 = vmatprep.subr.mxu0 0.0
    %1477 = vmatpush2.msra.mxu0 0.0
    %1478 = vmatprep.subr.mxu0 0.0
    %1479 = vmatpush2.msra.mxu0 0.0
    %1480 = vmatprep.subr.mxu0 0.0
    %1481 = vmatpush2.msra.mxu0 0.0
    %1482 = vmatprep.subr.mxu0 0.0
    %1483 = vmatpush2.msra.mxu0 0.0
    %1484 = vmatprep.subr.mxu0 0.0
    %1485 = vmatpush2.msra.mxu0 0.0
    %1486 = vmatprep.mubr.f32.mxu0 0.0
    %v1487 = vand.u32 %v1403, 4294901760
    %v1488 = vsub.f32 %v1403, %v1487
    %v1489 = vand.u32 %v1488, 4294901760
    %v1490 = vsub.f32 %v1488, %v1489
    %v1491 = vand.u32 %v1490, 4294901760
    %1492 = vmatmul.mubr.f32.gmra.mxu0 %v1491
    %v1493 = vpop.f32.mrf.mxu0
    %v1494 = vadd.f32 %v1381, %v1493
    %v1495 = vpop.f32.mrf.mxu0
    %1496 = vmatprep.mubr.f32.mxu0 0.0
    %v1497 = vand.u32 %v1406, 4294901760
    %v1498 = vsub.f32 %v1406, %v1497
    %v1499 = vand.u32 %v1498, 4294901760
    %v1500 = vsub.f32 %v1498, %v1499
    %v1501 = vand.u32 %v1500, 4294901760
    %1502 = vmatmul.mubr.f32.gmra.mxu0 %v1501
    %v1503 = vpop.f32.mrf.mxu0
    %v1504 = vadd.f32 %v1387, %v1503
    %v1505 = vpop.f32.mrf.mxu0
    %1506 = vmatprep.mubr.f32.mxu0 0.0
    %v1507 = vand.u32 %v1409, 4294901760
    %v1508 = vsub.f32 %v1409, %v1507
    %v1509 = vand.u32 %v1508, 4294901760
    %v1510 = vsub.f32 %v1508, %v1509
    %v1511 = vand.u32 %v1510, 4294901760
    %1512 = vmatmul.mubr.f32.gmra.mxu0 %v1511
    %v1513 = vpop.f32.mrf.mxu0
    %v1514 = vadd.f32 %v1393, %v1513
    %v1515 = vpop.f32.mrf.mxu0
    %1516 = vmatprep.mubr.f32.mxu0 0.0
    %v1517 = vand.u32 %v1412, 4294901760
    %v1518 = vsub.f32 %v1412, %v1517
    %v1519 = vand.u32 %v1518, 4294901760
    %v1520 = vsub.f32 %v1518, %v1519
    %v1521 = vand.u32 %v1520, 4294901760
    %1522 = vmatmul.mubr.f32.gmra.mxu0 %v1521
    %v1523 = vpop.f32.mrf.mxu0
    %v1524 = vadd.f32 %v1399, %v1523
    %v1525 = vpop.f32.mrf.mxu0
    %1526 = vdwg.mxu0
    %1527 = vmatprep.subr.mxu0 0.0
    %1528 = vmatpush1.msra.mxu0 0.0
    %1529 = vmatprep.subr.mxu0 0.0
    %1530 = vmatpush1.msra.mxu0 0.0
    %1531 = vmatprep.subr.mxu0 0.0
    %1532 = vmatpush1.msra.mxu0 0.0
    %1533 = vmatprep.subr.mxu0 0.0
    %1534 = vmatpush1.msra.mxu0 0.0
    %1535 = vmatprep.subr.mxu0 0.0
    %1536 = vmatpush1.msra.mxu0 0.0
    %1537 = vmatprep.subr.mxu0 0.0
    %1538 = vmatpush1.msra.mxu0 0.0
    %1539 = vmatprep.subr.mxu0 0.0
    %1540 = vmatpush1.msra.mxu0 0.0
    %1541 = vmatprep.subr.mxu0 0.0
    %1542 = vmatpush1.msra.mxu0 0.0
    %1543 = vmatprep.subr.mxu0 0.0
    %v1544 = vand.u32 %v74, 4294901760
    %v1545 = vsub.f32 %v74, %v1544
    %v1546 = vand.u32 %v1545, 4294901760
    %v1547 = vsub.f32 %v1545, %v1546
    %v1548 = vand.u32 %v1547, 4294901760
    %1549 = vmatpush1.msra.mxu0 %v1548
    %1550 = vmatprep.subr.mxu0 0.0
    %v1551 = vand.u32 %v73, 4294901760
    %v1552 = vsub.f32 %v73, %v1551
    %v1553 = vand.u32 %v1552, 4294901760
    %v1554 = vsub.f32 %v1552, %v1553
    %v1555 = vand.u32 %v1554, 4294901760
    %1556 = vmatpush1.msra.mxu0 %v1555
    %1557 = vmatprep.subr.mxu0 0.0
    %v1558 = vand.u32 %v72, 4294901760
    %v1559 = vsub.f32 %v72, %v1558
    %v1560 = vand.u32 %v1559, 4294901760
    %v1561 = vsub.f32 %v1559, %v1560
    %v1562 = vand.u32 %v1561, 4294901760
    %1563 = vmatpush1.msra.mxu0 %v1562
    %1564 = vmatprep.subr.mxu0 0.0
    %v1565 = vand.u32 %v71, 4294901760
    %v1566 = vsub.f32 %v71, %v1565
    %v1567 = vand.u32 %v1566, 4294901760
    %v1568 = vsub.f32 %v1566, %v1567
    %v1569 = vand.u32 %v1568, 4294901760
    %1570 = vmatpush1.msra.mxu0 %v1569
    %1571 = vmatprep.subr.mxu0 0.0
    %v1572 = vand.u32 %v70, 4294901760
    %v1573 = vsub.f32 %v70, %v1572
    %v1574 = vand.u32 %v1573, 4294901760
    %v1575 = vsub.f32 %v1573, %v1574
    %v1576 = vand.u32 %v1575, 4294901760
    %1577 = vmatpush1.msra.mxu0 %v1576
    %1578 = vmatprep.subr.mxu0 0.0
    %v1579 = vand.u32 %v69, 4294901760
    %v1580 = vsub.f32 %v69, %v1579
    %v1581 = vand.u32 %v1580, 4294901760
    %v1582 = vsub.f32 %v1580, %v1581
    %v1583 = vand.u32 %v1582, 4294901760
    %1584 = vmatpush1.msra.mxu0 %v1583
    %1585 = vmatprep.subr.mxu0 0.0
    %v1586 = vand.u32 %v68, 4294901760
    %v1587 = vsub.f32 %v68, %v1586
    %v1588 = vand.u32 %v1587, 4294901760
    %v1589 = vsub.f32 %v1587, %v1588
    %v1590 = vand.u32 %v1589, 4294901760
    %1591 = vmatpush1.msra.mxu0 %v1590
    %1592 = vmatprep.subr.mxu0 0.0
    %v1593 = vand.u32 %v67, 4294901760
    %v1594 = vsub.f32 %v67, %v1593
    %v1595 = vand.u32 %v1594, 4294901760
    %v1596 = vsub.f32 %v1594, %v1595
    %v1597 = vand.u32 %v1596, 4294901760
    %1598 = vmatpush1.msra.mxu0 %v1597
    %1599 = vmatprep.subr.mxu0 0.0
    %1600 = vmatpush2.msra.mxu0 0.0
    %1601 = vmatprep.subr.mxu0 0.0
    %1602 = vmatpush2.msra.mxu0 0.0
    %1603 = vmatprep.subr.mxu0 0.0
    %1604 = vmatpush2.msra.mxu0 0.0
    %1605 = vmatprep.subr.mxu0 0.0
    %1606 = vmatpush2.msra.mxu0 0.0
    %1607 = vmatprep.subr.mxu0 0.0
    %1608 = vmatpush2.msra.mxu0 0.0
    %1609 = vmatprep.subr.mxu0 0.0
    %1610 = vmatpush2.msra.mxu0 0.0
    %1611 = vmatprep.subr.mxu0 0.0
    %1612 = vmatpush2.msra.mxu0 0.0
    %1613 = vmatprep.subr.mxu0 0.0
    %1614 = vmatpush2.msra.mxu0 0.0
    %1615 = vmatprep.subr.mxu0 0.0
    %1616 = vmatpush2.msra.mxu0 0.0
    %1617 = vmatprep.subr.mxu0 0.0
    %1618 = vmatpush2.msra.mxu0 0.0
    %1619 = vmatprep.subr.mxu0 0.0
    %1620 = vmatpush2.msra.mxu0 0.0
    %1621 = vmatprep.subr.mxu0 0.0
    %1622 = vmatpush2.msra.mxu0 0.0
    %1623 = vmatprep.subr.mxu0 0.0
    %1624 = vmatpush2.msra.mxu0 0.0
    %1625 = vmatprep.subr.mxu0 0.0
    %1626 = vmatpush2.msra.mxu0 0.0
    %1627 = vmatprep.subr.mxu0 0.0
    %1628 = vmatpush2.msra.mxu0 0.0
    %1629 = vmatprep.subr.mxu0 0.0
    %1630 = vmatpush2.msra.mxu0 0.0
    %1631 = vmatprep.mubr.f32.mxu0 0.0
    %v1632 = vand.u32 %v1403, 4294901760
    %1633 = vmatmul.mubr.f32.gmra.mxu0 %v1632
    %v1634 = vpop.f32.mrf.mxu0
    %v1635 = vadd.f32 %v1494, %v1634
    %v1636 = vpop.f32.mrf.mxu0
    %1637 = vmatprep.mubr.f32.mxu0 0.0
    %v1638 = vand.u32 %v1406, 4294901760
    %1639 = vmatmul.mubr.f32.gmra.mxu0 %v1638
    %v1640 = vpop.f32.mrf.mxu0
    %v1641 = vadd.f32 %v1504, %v1640
    %v1642 = vpop.f32.mrf.mxu0
    %1643 = vmatprep.mubr.f32.mxu0 0.0
    %v1644 = vand.u32 %v1409, 4294901760
    %1645 = vmatmul.mubr.f32.gmra.mxu0 %v1644
    %v1646 = vpop.f32.mrf.mxu0
    %v1647 = vadd.f32 %v1514, %v1646
    %v1648 = vpop.f32.mrf.mxu0
    %1649 = vmatprep.mubr.f32.mxu0 0.0
    %v1650 = vand.u32 %v1412, 4294901760
    %1651 = vmatmul.mubr.f32.gmra.mxu0 %v1650
    %v1652 = vpop.f32.mrf.mxu0
    %v1653 = vadd.f32 %v1524, %v1652
    %v1654 = vpop.f32.mrf.mxu0
    %1655 = vdwg.mxu0
    %1656 = vmatprep.subr.mxu0 0.0
    %1657 = vmatpush1.msra.mxu0 0.0
    %1658 = vmatprep.subr.mxu0 0.0
    %1659 = vmatpush1.msra.mxu0 0.0
    %1660 = vmatprep.subr.mxu0 0.0
    %1661 = vmatpush1.msra.mxu0 0.0
    %1662 = vmatprep.subr.mxu0 0.0
    %1663 = vmatpush1.msra.mxu0 0.0
    %1664 = vmatprep.subr.mxu0 0.0
    %1665 = vmatpush1.msra.mxu0 0.0
    %1666 = vmatprep.subr.mxu0 0.0
    %1667 = vmatpush1.msra.mxu0 0.0
    %1668 = vmatprep.subr.mxu0 0.0
    %1669 = vmatpush1.msra.mxu0 0.0
    %1670 = vmatprep.subr.mxu0 0.0
    %1671 = vmatpush1.msra.mxu0 0.0
    %1672 = vmatprep.subr.mxu0 0.0
    %v1673 = vand.u32 %v74, 4294901760
    %v1674 = vsub.f32 %v74, %v1673
    %1675 = vmatpush1.msra.mxu0 %v1674
    %1676 = vmatprep.subr.mxu0 0.0
    %v1677 = vand.u32 %v73, 4294901760
    %v1678 = vsub.f32 %v73, %v1677
    %1679 = vmatpush1.msra.mxu0 %v1678
    %1680 = vmatprep.subr.mxu0 0.0
    %v1681 = vand.u32 %v72, 4294901760
    %v1682 = vsub.f32 %v72, %v1681
    %1683 = vmatpush1.msra.mxu0 %v1682
    %1684 = vmatprep.subr.mxu0 0.0
    %v1685 = vand.u32 %v71, 4294901760
    %v1686 = vsub.f32 %v71, %v1685
    %1687 = vmatpush1.msra.mxu0 %v1686
    %1688 = vmatprep.subr.mxu0 0.0
    %v1689 = vand.u32 %v70, 4294901760
    %v1690 = vsub.f32 %v70, %v1689
    %1691 = vmatpush1.msra.mxu0 %v1690
    %1692 = vmatprep.subr.mxu0 0.0
    %v1693 = vand.u32 %v69, 4294901760
    %v1694 = vsub.f32 %v69, %v1693
    %1695 = vmatpush1.msra.mxu0 %v1694
    %1696 = vmatprep.subr.mxu0 0.0
    %v1697 = vand.u32 %v68, 4294901760
    %v1698 = vsub.f32 %v68, %v1697
    %1699 = vmatpush1.msra.mxu0 %v1698
    %1700 = vmatprep.subr.mxu0 0.0
    %v1701 = vand.u32 %v67, 4294901760
    %v1702 = vsub.f32 %v67, %v1701
    %1703 = vmatpush1.msra.mxu0 %v1702
    %1704 = vmatprep.subr.mxu0 0.0
    %1705 = vmatpush2.msra.mxu0 0.0
    %1706 = vmatprep.subr.mxu0 0.0
    %1707 = vmatpush2.msra.mxu0 0.0
    %1708 = vmatprep.subr.mxu0 0.0
    %1709 = vmatpush2.msra.mxu0 0.0
    %1710 = vmatprep.subr.mxu0 0.0
    %1711 = vmatpush2.msra.mxu0 0.0
    %1712 = vmatprep.subr.mxu0 0.0
    %1713 = vmatpush2.msra.mxu0 0.0
    %1714 = vmatprep.subr.mxu0 0.0
    %1715 = vmatpush2.msra.mxu0 0.0
    %1716 = vmatprep.subr.mxu0 0.0
    %1717 = vmatpush2.msra.mxu0 0.0
    %1718 = vmatprep.subr.mxu0 0.0
    %1719 = vmatpush2.msra.mxu0 0.0
    %1720 = vmatprep.subr.mxu0 0.0
    %1721 = vmatpush2.msra.mxu0 0.0
    %1722 = vmatprep.subr.mxu0 0.0
    %1723 = vmatpush2.msra.mxu0 0.0
    %1724 = vmatprep.subr.mxu0 0.0
    %1725 = vmatpush2.msra.mxu0 0.0
    %1726 = vmatprep.subr.mxu0 0.0
    %1727 = vmatpush2.msra.mxu0 0.0
    %1728 = vmatprep.subr.mxu0 0.0
    %1729 = vmatpush2.msra.mxu0 0.0
    %1730 = vmatprep.subr.mxu0 0.0
    %1731 = vmatpush2.msra.mxu0 0.0
    %1732 = vmatprep.subr.mxu0 0.0
    %1733 = vmatpush2.msra.mxu0 0.0
    %1734 = vmatprep.subr.mxu0 0.0
    %1735 = vmatpush2.msra.mxu0 0.0
    %1736 = vmatprep.mubr.f32.mxu0 0.0
    %v1737 = vand.u32 %v1403, 4294901760
    %v1738 = vsub.f32 %v1403, %v1737
    %1739 = vmatmul.mubr.f32.gmra.mxu0 %v1738
    %v1740 = vpop.f32.mrf.mxu0
    %v1741 = vadd.f32 %v1635, %v1740
    %v1742 = vpop.f32.mrf.mxu0
    %1743 = vmatprep.mubr.f32.mxu0 0.0
    %v1744 = vand.u32 %v1406, 4294901760
    %v1745 = vsub.f32 %v1406, %v1744
    %1746 = vmatmul.mubr.f32.gmra.mxu0 %v1745
    %v1747 = vpop.f32.mrf.mxu0
    %v1748 = vadd.f32 %v1641, %v1747
    %v1749 = vpop.f32.mrf.mxu0
    %1750 = vmatprep.mubr.f32.mxu0 0.0
    %v1751 = vand.u32 %v1409, 4294901760
    %v1752 = vsub.f32 %v1409, %v1751
    %1753 = vmatmul.mubr.f32.gmra.mxu0 %v1752
    %v1754 = vpop.f32.mrf.mxu0
    %v1755 = vadd.f32 %v1647, %v1754
    %v1756 = vpop.f32.mrf.mxu0
    %1757 = vmatprep.mubr.f32.mxu0 0.0
    %v1758 = vand.u32 %v1412, 4294901760
    %v1759 = vsub.f32 %v1412, %v1758
    %1760 = vmatmul.mubr.f32.gmra.mxu0 %v1759
    %v1761 = vpop.f32.mrf.mxu0
    %v1762 = vadd.f32 %v1653, %v1761
    %v1763 = vpop.f32.mrf.mxu0
    %1764 = vdwg.mxu0
    %1765 = vmatprep.subr.mxu0 0.0
    %1766 = vmatpush1.msra.mxu0 0.0
    %1767 = vmatprep.subr.mxu0 0.0
    %1768 = vmatpush1.msra.mxu0 0.0
    %1769 = vmatprep.subr.mxu0 0.0
    %1770 = vmatpush1.msra.mxu0 0.0
    %1771 = vmatprep.subr.mxu0 0.0
    %1772 = vmatpush1.msra.mxu0 0.0
    %1773 = vmatprep.subr.mxu0 0.0
    %1774 = vmatpush1.msra.mxu0 0.0
    %1775 = vmatprep.subr.mxu0 0.0
    %1776 = vmatpush1.msra.mxu0 0.0
    %1777 = vmatprep.subr.mxu0 0.0
    %1778 = vmatpush1.msra.mxu0 0.0
    %1779 = vmatprep.subr.mxu0 0.0
    %1780 = vmatpush1.msra.mxu0 0.0
    %1781 = vmatprep.subr.mxu0 0.0
    %v1782 = vand.u32 %v74, 4294901760
    %1783 = vmatpush1.msra.mxu0 %v1782
    %1784 = vmatprep.subr.mxu0 0.0
    %v1785 = vand.u32 %v73, 4294901760
    %1786 = vmatpush1.msra.mxu0 %v1785
    %1787 = vmatprep.subr.mxu0 0.0
    %v1788 = vand.u32 %v72, 4294901760
    %1789 = vmatpush1.msra.mxu0 %v1788
    %1790 = vmatprep.subr.mxu0 0.0
    %v1791 = vand.u32 %v71, 4294901760
    %1792 = vmatpush1.msra.mxu0 %v1791
    %1793 = vmatprep.subr.mxu0 0.0
    %v1794 = vand.u32 %v70, 4294901760
    %1795 = vmatpush1.msra.mxu0 %v1794
    %1796 = vmatprep.subr.mxu0 0.0
    %v1797 = vand.u32 %v69, 4294901760
    %1798 = vmatpush1.msra.mxu0 %v1797
    %1799 = vmatprep.subr.mxu0 0.0
    %v1800 = vand.u32 %v68, 4294901760
    %1801 = vmatpush1.msra.mxu0 %v1800
    %1802 = vmatprep.subr.mxu0 0.0
    %v1803 = vand.u32 %v67, 4294901760
    %1804 = vmatpush1.msra.mxu0 %v1803
    %1805 = vmatprep.subr.mxu0 0.0
    %1806 = vmatpush2.msra.mxu0 0.0
    %1807 = vmatprep.subr.mxu0 0.0
    %1808 = vmatpush2.msra.mxu0 0.0
    %1809 = vmatprep.subr.mxu0 0.0
    %1810 = vmatpush2.msra.mxu0 0.0
    %1811 = vmatprep.subr.mxu0 0.0
    %1812 = vmatpush2.msra.mxu0 0.0
    %1813 = vmatprep.subr.mxu0 0.0
    %1814 = vmatpush2.msra.mxu0 0.0
    %1815 = vmatprep.subr.mxu0 0.0
    %1816 = vmatpush2.msra.mxu0 0.0
    %1817 = vmatprep.subr.mxu0 0.0
    %1818 = vmatpush2.msra.mxu0 0.0
    %1819 = vmatprep.subr.mxu0 0.0
    %1820 = vmatpush2.msra.mxu0 0.0
    %1821 = vmatprep.subr.mxu0 0.0
    %1822 = vmatpush2.msra.mxu0 0.0
    %1823 = vmatprep.subr.mxu0 0.0
    %1824 = vmatpush2.msra.mxu0 0.0
    %1825 = vmatprep.subr.mxu0 0.0
    %1826 = vmatpush2.msra.mxu0 0.0
    %1827 = vmatprep.subr.mxu0 0.0
    %1828 = vmatpush2.msra.mxu0 0.0
    %1829 = vmatprep.subr.mxu0 0.0
    %1830 = vmatpush2.msra.mxu0 0.0
    %1831 = vmatprep.subr.mxu0 0.0
    %1832 = vmatpush2.msra.mxu0 0.0
    %1833 = vmatprep.subr.mxu0 0.0
    %1834 = vmatpush2.msra.mxu0 0.0
    %1835 = vmatprep.subr.mxu0 0.0
    %1836 = vmatpush2.msra.mxu0 0.0
    %1837 = vmatprep.mubr.f32.mxu0 0.0
    %v1838 = vand.u32 %v1403, 4294901760
    %v1839 = vsub.f32 %v1403, %v1838
    %v1840 = vand.u32 %v1839, 4294901760
    %1841 = vmatmul.mubr.f32.gmra.mxu0 %v1840
    %v1842 = vpop.f32.mrf.mxu0
    %v1843 = vadd.f32 %v1741, %v1842
    %v1844 = vpop.f32.mrf.mxu0
    %1845 = vmatprep.mubr.f32.mxu0 0.0
    %v1846 = vand.u32 %v1406, 4294901760
    %v1847 = vsub.f32 %v1406, %v1846
    %v1848 = vand.u32 %v1847, 4294901760
    %1849 = vmatmul.mubr.f32.gmra.mxu0 %v1848
    %v1850 = vpop.f32.mrf.mxu0
    %v1851 = vadd.f32 %v1748, %v1850
    %v1852 = vpop.f32.mrf.mxu0
    %1853 = vmatprep.mubr.f32.mxu0 0.0
    %v1854 = vand.u32 %v1409, 4294901760
    %v1855 = vsub.f32 %v1409, %v1854
    %v1856 = vand.u32 %v1855, 4294901760
    %1857 = vmatmul.mubr.f32.gmra.mxu0 %v1856
    %v1858 = vpop.f32.mrf.mxu0
    %v1859 = vadd.f32 %v1755, %v1858
    %v1860 = vpop.f32.mrf.mxu0
    %1861 = vmatprep.mubr.f32.mxu0 0.0
    %v1862 = vand.u32 %v1412, 4294901760
    %v1863 = vsub.f32 %v1412, %v1862
    %v1864 = vand.u32 %v1863, 4294901760
    %1865 = vmatmul.mubr.f32.gmra.mxu0 %v1864
    %v1866 = vpop.f32.mrf.mxu0
    %v1867 = vadd.f32 %v1762, %v1866
    %v1868 = vpop.f32.mrf.mxu0
    %1869 = vdwg.mxu0
    %1870 = vmatprep.subr.mxu0 0.0
    %1871 = vmatpush1.msra.mxu0 0.0
    %1872 = vmatprep.subr.mxu0 0.0
    %1873 = vmatpush1.msra.mxu0 0.0
    %1874 = vmatprep.subr.mxu0 0.0
    %1875 = vmatpush1.msra.mxu0 0.0
    %1876 = vmatprep.subr.mxu0 0.0
    %1877 = vmatpush1.msra.mxu0 0.0
    %1878 = vmatprep.subr.mxu0 0.0
    %1879 = vmatpush1.msra.mxu0 0.0
    %1880 = vmatprep.subr.mxu0 0.0
    %1881 = vmatpush1.msra.mxu0 0.0
    %1882 = vmatprep.subr.mxu0 0.0
    %1883 = vmatpush1.msra.mxu0 0.0
    %1884 = vmatprep.subr.mxu0 0.0
    %1885 = vmatpush1.msra.mxu0 0.0
    %1886 = vmatprep.subr.mxu0 0.0
    %v1887 = vand.u32 %v74, 4294901760
    %v1888 = vsub.f32 %v74, %v1887
    %v1889 = vand.u32 %v1888, 4294901760
    %1890 = vmatpush1.msra.mxu0 %v1889
    %1891 = vmatprep.subr.mxu0 0.0
    %v1892 = vand.u32 %v73, 4294901760
    %v1893 = vsub.f32 %v73, %v1892
    %v1894 = vand.u32 %v1893, 4294901760
    %1895 = vmatpush1.msra.mxu0 %v1894
    %1896 = vmatprep.subr.mxu0 0.0
    %v1897 = vand.u32 %v72, 4294901760
    %v1898 = vsub.f32 %v72, %v1897
    %v1899 = vand.u32 %v1898, 4294901760
    %1900 = vmatpush1.msra.mxu0 %v1899
    %1901 = vmatprep.subr.mxu0 0.0
    %v1902 = vand.u32 %v71, 4294901760
    %v1903 = vsub.f32 %v71, %v1902
    %v1904 = vand.u32 %v1903, 4294901760
    %1905 = vmatpush1.msra.mxu0 %v1904
    %1906 = vmatprep.subr.mxu0 0.0
    %v1907 = vand.u32 %v70, 4294901760
    %v1908 = vsub.f32 %v70, %v1907
    %v1909 = vand.u32 %v1908, 4294901760
    %1910 = vmatpush1.msra.mxu0 %v1909
    %1911 = vmatprep.subr.mxu0 0.0
    %v1912 = vand.u32 %v69, 4294901760
    %v1913 = vsub.f32 %v69, %v1912
    %v1914 = vand.u32 %v1913, 4294901760
    %1915 = vmatpush1.msra.mxu0 %v1914
    %1916 = vmatprep.subr.mxu0 0.0
    %v1917 = vand.u32 %v68, 4294901760
    %v1918 = vsub.f32 %v68, %v1917
    %v1919 = vand.u32 %v1918, 4294901760
    %1920 = vmatpush1.msra.mxu0 %v1919
    %1921 = vmatprep.subr.mxu0 0.0
    %v1922 = vand.u32 %v67, 4294901760
    %v1923 = vsub.f32 %v67, %v1922
    %v1924 = vand.u32 %v1923, 4294901760
    %1925 = vmatpush1.msra.mxu0 %v1924
    %1926 = vmatprep.subr.mxu0 0.0
    %1927 = vmatpush2.msra.mxu0 0.0
    %1928 = vmatprep.subr.mxu0 0.0
    %1929 = vmatpush2.msra.mxu0 0.0
    %1930 = vmatprep.subr.mxu0 0.0
    %1931 = vmatpush2.msra.mxu0 0.0
    %1932 = vmatprep.subr.mxu0 0.0
    %1933 = vmatpush2.msra.mxu0 0.0
    %1934 = vmatprep.subr.mxu0 0.0
    %1935 = vmatpush2.msra.mxu0 0.0
    %1936 = vmatprep.subr.mxu0 0.0
    %1937 = vmatpush2.msra.mxu0 0.0
    %1938 = vmatprep.subr.mxu0 0.0
    %1939 = vmatpush2.msra.mxu0 0.0
    %1940 = vmatprep.subr.mxu0 0.0
    %1941 = vmatpush2.msra.mxu0 0.0
    %1942 = vmatprep.subr.mxu0 0.0
    %1943 = vmatpush2.msra.mxu0 0.0
    %1944 = vmatprep.subr.mxu0 0.0
    %1945 = vmatpush2.msra.mxu0 0.0
    %1946 = vmatprep.subr.mxu0 0.0
    %1947 = vmatpush2.msra.mxu0 0.0
    %1948 = vmatprep.subr.mxu0 0.0
    %1949 = vmatpush2.msra.mxu0 0.0
    %1950 = vmatprep.subr.mxu0 0.0
    %1951 = vmatpush2.msra.mxu0 0.0
    %1952 = vmatprep.subr.mxu0 0.0
    %1953 = vmatpush2.msra.mxu0 0.0
    %1954 = vmatprep.subr.mxu0 0.0
    %1955 = vmatpush2.msra.mxu0 0.0
    %1956 = vmatprep.subr.mxu0 0.0
    %1957 = vmatpush2.msra.mxu0 0.0
    %1958 = vmatprep.mubr.f32.mxu0 0.0
    %v1959 = vand.u32 %v1403, 4294901760
    %1960 = vmatmul.mubr.f32.gmra.mxu0 %v1959
    %v1961 = vpop.f32.mrf.mxu0
    %v1962 = vadd.f32 %v1843, %v1961
    %v1963 = vpop.f32.mrf.mxu0
    %1964 = vmatprep.mubr.f32.mxu0 0.0
    %v1965 = vand.u32 %v1406, 4294901760
    %1966 = vmatmul.mubr.f32.gmra.mxu0 %v1965
    %v1967 = vpop.f32.mrf.mxu0
    %v1968 = vadd.f32 %v1851, %v1967
    %v1969 = vpop.f32.mrf.mxu0
    %1970 = vmatprep.mubr.f32.mxu0 0.0
    %v1971 = vand.u32 %v1409, 4294901760
    %1972 = vmatmul.mubr.f32.gmra.mxu0 %v1971
    %v1973 = vpop.f32.mrf.mxu0
    %v1974 = vadd.f32 %v1859, %v1973
    %v1975 = vpop.f32.mrf.mxu0
    %1976 = vmatprep.mubr.f32.mxu0 0.0
    %v1977 = vand.u32 %v1412, 4294901760
    %1978 = vmatmul.mubr.f32.gmra.mxu0 %v1977
    %v1979 = vpop.f32.mrf.mxu0
    %v1980 = vadd.f32 %v1867, %v1979
    %v1981 = vpop.f32.mrf.mxu0
    %1982 = vdwg.mxu0
    %1983 = vmatprep.subr.mxu0 0.0
    %1984 = vmatpush1.msra.mxu0 0.0
    %1985 = vmatprep.subr.mxu0 0.0
    %1986 = vmatpush1.msra.mxu0 0.0
    %1987 = vmatprep.subr.mxu0 0.0
    %1988 = vmatpush1.msra.mxu0 0.0
    %1989 = vmatprep.subr.mxu0 0.0
    %1990 = vmatpush1.msra.mxu0 0.0
    %1991 = vmatprep.subr.mxu0 0.0
    %1992 = vmatpush1.msra.mxu0 0.0
    %1993 = vmatprep.subr.mxu0 0.0
    %1994 = vmatpush1.msra.mxu0 0.0
    %1995 = vmatprep.subr.mxu0 0.0
    %1996 = vmatpush1.msra.mxu0 0.0
    %1997 = vmatprep.subr.mxu0 0.0
    %1998 = vmatpush1.msra.mxu0 0.0
    %1999 = vmatprep.subr.mxu0 0.0
    %v2000 = vand.u32 %v74, 4294901760
    %2001 = vmatpush1.msra.mxu0 %v2000
    %2002 = vmatprep.subr.mxu0 0.0
    %v2003 = vand.u32 %v73, 4294901760
    %2004 = vmatpush1.msra.mxu0 %v2003
    %2005 = vmatprep.subr.mxu0 0.0
    %v2006 = vand.u32 %v72, 4294901760
    %2007 = vmatpush1.msra.mxu0 %v2006
    %2008 = vmatprep.subr.mxu0 0.0
    %v2009 = vand.u32 %v71, 4294901760
    %2010 = vmatpush1.msra.mxu0 %v2009
    %2011 = vmatprep.subr.mxu0 0.0
    %v2012 = vand.u32 %v70, 4294901760
    %2013 = vmatpush1.msra.mxu0 %v2012
    %2014 = vmatprep.subr.mxu0 0.0
    %v2015 = vand.u32 %v69, 4294901760
    %2016 = vmatpush1.msra.mxu0 %v2015
    %2017 = vmatprep.subr.mxu0 0.0
    %v2018 = vand.u32 %v68, 4294901760
    %2019 = vmatpush1.msra.mxu0 %v2018
    %2020 = vmatprep.subr.mxu0 0.0
    %v2021 = vand.u32 %v67, 4294901760
    %2022 = vmatpush1.msra.mxu0 %v2021
    %2023 = vmatprep.subr.mxu0 0.0
    %2024 = vmatpush2.msra.mxu0 0.0
    %2025 = vmatprep.subr.mxu0 0.0
    %2026 = vmatpush2.msra.mxu0 0.0
    %2027 = vmatprep.subr.mxu0 0.0
    %2028 = vmatpush2.msra.mxu0 0.0
    %2029 = vmatprep.subr.mxu0 0.0
    %2030 = vmatpush2.msra.mxu0 0.0
    %2031 = vmatprep.subr.mxu0 0.0
    %2032 = vmatpush2.msra.mxu0 0.0
    %2033 = vmatprep.subr.mxu0 0.0
    %2034 = vmatpush2.msra.mxu0 0.0
    %2035 = vmatprep.subr.mxu0 0.0
    %2036 = vmatpush2.msra.mxu0 0.0
    %2037 = vmatprep.subr.mxu0 0.0
    %2038 = vmatpush2.msra.mxu0 0.0
    %2039 = vmatprep.subr.mxu0 0.0
    %2040 = vmatpush2.msra.mxu0 0.0
    %2041 = vmatprep.subr.mxu0 0.0
    %2042 = vmatpush2.msra.mxu0 0.0
    %2043 = vmatprep.subr.mxu0 0.0
    %2044 = vmatpush2.msra.mxu0 0.0
    %2045 = vmatprep.subr.mxu0 0.0
    %2046 = vmatpush2.msra.mxu0 0.0
    %2047 = vmatprep.subr.mxu0 0.0
    %2048 = vmatpush2.msra.mxu0 0.0
    %2049 = vmatprep.subr.mxu0 0.0
    %2050 = vmatpush2.msra.mxu0 0.0
    %2051 = vmatprep.subr.mxu0 0.0
    %2052 = vmatpush2.msra.mxu0 0.0
    %2053 = vmatprep.subr.mxu0 0.0
    %2054 = vmatpush2.msra.mxu0 0.0
    %2055 = vmatprep.mubr.f32.mxu0 0.0
    %v2056 = vand.u32 %v1403, 4294901760
    %2057 = vmatmul.mubr.f32.gmra.mxu0 %v2056
    %v2058 = vpop.f32.mrf.mxu0
    %v2059 = vadd.f32 %v1962, %v2058
    %v2060 = vpop.f32.mrf.mxu0
    %2061 = vmatprep.mubr.f32.mxu0 0.0
    %v2062 = vand.u32 %v1406, 4294901760
    %2063 = vmatmul.mubr.f32.gmra.mxu0 %v2062
    %v2064 = vpop.f32.mrf.mxu0
    %v2065 = vadd.f32 %v1968, %v2064
    %v2066 = vpop.f32.mrf.mxu0
    %2067 = vmatprep.mubr.f32.mxu0 0.0
    %v2068 = vand.u32 %v1409, 4294901760
    %2069 = vmatmul.mubr.f32.gmra.mxu0 %v2068
    %v2070 = vpop.f32.mrf.mxu0
    %v2071 = vadd.f32 %v1974, %v2070
    %v2072 = vpop.f32.mrf.mxu0
    %2073 = vmatprep.mubr.f32.mxu0 0.0
    %v2074 = vand.u32 %v1412, 4294901760
    %2075 = vmatmul.mubr.f32.gmra.mxu0 %v2074
    %v2076 = vpop.f32.mrf.mxu0
    %v2077 = vadd.f32 %v1980, %v2076
    %v2078 = vpop.f32.mrf.mxu0
    %2079 = vdwg.mxu0
    %2080 = vmatprep.subr.mxu0 0.0
    %2081 = vmatpush1.msra.mxu0 0.0
    %2082 = vmatprep.subr.mxu0 0.0
    %2083 = vmatpush1.msra.mxu0 0.0
    %2084 = vmatprep.subr.mxu0 0.0
    %2085 = vmatpush1.msra.mxu0 0.0
    %2086 = vmatprep.subr.mxu0 0.0
    %2087 = vmatpush1.msra.mxu0 0.0
    %2088 = vmatprep.subr.mxu0 0.0
    %2089 = vmatpush1.msra.mxu0 0.0
    %2090 = vmatprep.subr.mxu0 0.0
    %2091 = vmatpush1.msra.mxu0 0.0
    %2092 = vmatprep.subr.mxu0 0.0
    %2093 = vmatpush1.msra.mxu0 0.0
    %2094 = vmatprep.subr.mxu0 0.0
    %2095 = vmatpush1.msra.mxu0 0.0
    %2096 = vmatprep.subr.mxu0 0.0
    %2097 = vmatpush1.msra.mxu0 0.0
    %2098 = vmatprep.subr.mxu0 0.0
    %2099 = vmatpush1.msra.mxu0 0.0
    %2100 = vmatprep.subr.mxu0 0.0
    %2101 = vmatpush1.msra.mxu0 0.0
    %2102 = vmatprep.subr.mxu0 0.0
    %2103 = vmatpush1.msra.mxu0 0.0
    %2104 = vmatprep.subr.mxu0 0.0
    %v2105 = vand.u32 %v713, 4294901760
    %2106 = vmatpush1.msra.mxu0 %v2105
    %2107 = vmatprep.subr.mxu0 0.0
    %v2108 = vand.u32 %v712, 4294901760
    %2109 = vmatpush1.msra.mxu0 %v2108
    %2110 = vmatprep.subr.mxu0 0.0
    %v2111 = vand.u32 %v711, 4294901760
    %2112 = vmatpush1.msra.mxu0 %v2111
    %2113 = vmatprep.subr.mxu0 0.0
    %v2114 = vand.u32 %v710, 4294901760
    %2115 = vmatpush1.msra.mxu0 %v2114
    %2116 = vmatprep.subr.mxu0 0.0
    %2117 = vmatpush2.msra.mxu0 0.0
    %2118 = vmatprep.subr.mxu0 0.0
    %2119 = vmatpush2.msra.mxu0 0.0
    %2120 = vmatprep.subr.mxu0 0.0
    %2121 = vmatpush2.msra.mxu0 0.0
    %2122 = vmatprep.subr.mxu0 0.0
    %2123 = vmatpush2.msra.mxu0 0.0
    %2124 = vmatprep.subr.mxu0 0.0
    %2125 = vmatpush2.msra.mxu0 0.0
    %2126 = vmatprep.subr.mxu0 0.0
    %2127 = vmatpush2.msra.mxu0 0.0
    %2128 = vmatprep.subr.mxu0 0.0
    %2129 = vmatpush2.msra.mxu0 0.0
    %2130 = vmatprep.subr.mxu0 0.0
    %2131 = vmatpush2.msra.mxu0 0.0
    %2132 = vmatprep.subr.mxu0 0.0
    %2133 = vmatpush2.msra.mxu0 0.0
    %2134 = vmatprep.subr.mxu0 0.0
    %2135 = vmatpush2.msra.mxu0 0.0
    %2136 = vmatprep.subr.mxu0 0.0
    %2137 = vmatpush2.msra.mxu0 0.0
    %2138 = vmatprep.subr.mxu0 0.0
    %2139 = vmatpush2.msra.mxu0 0.0
    %2140 = vmatprep.subr.mxu0 0.0
    %2141 = vmatpush2.msra.mxu0 0.0
    %2142 = vmatprep.subr.mxu0 0.0
    %2143 = vmatpush2.msra.mxu0 0.0
    %2144 = vmatprep.subr.mxu0 0.0
    %2145 = vmatpush2.msra.mxu0 0.0
    %2146 = vmatprep.subr.mxu0 0.0
    %2147 = vmatpush2.msra.mxu0 0.0
    %2148 = vmatprep.mubr.f32.mxu0 0.0
    %v2149 = vand.u32 %v77, 4294901760
    %v2150 = vsub.f32 %v77, %v2149
    %v2151 = vand.u32 %v2150, 4294901760
    %v2152 = vsub.f32 %v2150, %v2151
    %v2153 = vand.u32 %v2152, 4294901760
    %2154 = vmatmul.mubr.f32.gmra.mxu0 %v2153
    %v2155 = vpop.f32.mrf.mxu0
    %v2156 = vadd.f32 0.0, %v2155
    %v2157 = vpop.f32.mrf.mxu0
    %2158 = vmatprep.mubr.f32.mxu0 0.0
    %v2159 = vand.u32 %v80, 4294901760
    %v2160 = vsub.f32 %v80, %v2159
    %v2161 = vand.u32 %v2160, 4294901760
    %v2162 = vsub.f32 %v2160, %v2161
    %v2163 = vand.u32 %v2162, 4294901760
    %2164 = vmatmul.mubr.f32.gmra.mxu0 %v2163
    %v2165 = vpop.f32.mrf.mxu0
    %v2166 = vadd.f32 0.0, %v2165
    %v2167 = vpop.f32.mrf.mxu0
    %2168 = vmatprep.mubr.f32.mxu0 0.0
    %v2169 = vand.u32 %v83, 4294901760
    %v2170 = vsub.f32 %v83, %v2169
    %v2171 = vand.u32 %v2170, 4294901760
    %v2172 = vsub.f32 %v2170, %v2171
    %v2173 = vand.u32 %v2172, 4294901760
    %2174 = vmatmul.mubr.f32.gmra.mxu0 %v2173
    %v2175 = vpop.f32.mrf.mxu0
    %v2176 = vadd.f32 0.0, %v2175
    %v2177 = vpop.f32.mrf.mxu0
    %2178 = vmatprep.mubr.f32.mxu0 0.0
    %v2179 = vand.u32 %v86, 4294901760
    %v2180 = vsub.f32 %v86, %v2179
    %v2181 = vand.u32 %v2180, 4294901760
    %v2182 = vsub.f32 %v2180, %v2181
    %v2183 = vand.u32 %v2182, 4294901760
    %2184 = vmatmul.mubr.f32.gmra.mxu0 %v2183
    %v2185 = vpop.f32.mrf.mxu0
    %v2186 = vadd.f32 0.0, %v2185
    %v2187 = vpop.f32.mrf.mxu0
    %2188 = vdwg.mxu0
    %2189 = vmatprep.subr.mxu0 0.0
    %2190 = vmatpush1.msra.mxu0 0.0
    %2191 = vmatprep.subr.mxu0 0.0
    %2192 = vmatpush1.msra.mxu0 0.0
    %2193 = vmatprep.subr.mxu0 0.0
    %2194 = vmatpush1.msra.mxu0 0.0
    %2195 = vmatprep.subr.mxu0 0.0
    %2196 = vmatpush1.msra.mxu0 0.0
    %2197 = vmatprep.subr.mxu0 0.0
    %2198 = vmatpush1.msra.mxu0 0.0
    %2199 = vmatprep.subr.mxu0 0.0
    %2200 = vmatpush1.msra.mxu0 0.0
    %2201 = vmatprep.subr.mxu0 0.0
    %2202 = vmatpush1.msra.mxu0 0.0
    %2203 = vmatprep.subr.mxu0 0.0
    %2204 = vmatpush1.msra.mxu0 0.0
    %2205 = vmatprep.subr.mxu0 0.0
    %2206 = vmatpush1.msra.mxu0 0.0
    %2207 = vmatprep.subr.mxu0 0.0
    %2208 = vmatpush1.msra.mxu0 0.0
    %2209 = vmatprep.subr.mxu0 0.0
    %2210 = vmatpush1.msra.mxu0 0.0
    %2211 = vmatprep.subr.mxu0 0.0
    %2212 = vmatpush1.msra.mxu0 0.0
    %2213 = vmatprep.subr.mxu0 0.0
    %v2214 = vand.u32 %v713, 4294901760
    %v2215 = vsub.f32 %v713, %v2214
    %v2216 = vand.u32 %v2215, 4294901760
    %v2217 = vsub.f32 %v2215, %v2216
    %v2218 = vand.u32 %v2217, 4294901760
    %2219 = vmatpush1.msra.mxu0 %v2218
    %2220 = vmatprep.subr.mxu0 0.0
    %v2221 = vand.u32 %v712, 4294901760
    %v2222 = vsub.f32 %v712, %v2221
    %v2223 = vand.u32 %v2222, 4294901760
    %v2224 = vsub.f32 %v2222, %v2223
    %v2225 = vand.u32 %v2224, 4294901760
    %2226 = vmatpush1.msra.mxu0 %v2225
    %2227 = vmatprep.subr.mxu0 0.0
    %v2228 = vand.u32 %v711, 4294901760
    %v2229 = vsub.f32 %v711, %v2228
    %v2230 = vand.u32 %v2229, 4294901760
    %v2231 = vsub.f32 %v2229, %v2230
    %v2232 = vand.u32 %v2231, 4294901760
    %2233 = vmatpush1.msra.mxu0 %v2232
    %2234 = vmatprep.subr.mxu0 0.0
    %v2235 = vand.u32 %v710, 4294901760
    %v2236 = vsub.f32 %v710, %v2235
    %v2237 = vand.u32 %v2236, 4294901760
    %v2238 = vsub.f32 %v2236, %v2237
    %v2239 = vand.u32 %v2238, 4294901760
    %2240 = vmatpush1.msra.mxu0 %v2239
    %2241 = vmatprep.subr.mxu0 0.0
    %2242 = vmatpush2.msra.mxu0 0.0
    %2243 = vmatprep.subr.mxu0 0.0
    %2244 = vmatpush2.msra.mxu0 0.0
    %2245 = vmatprep.subr.mxu0 0.0
    %2246 = vmatpush2.msra.mxu0 0.0
    %2247 = vmatprep.subr.mxu0 0.0
    %2248 = vmatpush2.msra.mxu0 0.0
    %2249 = vmatprep.subr.mxu0 0.0
    %2250 = vmatpush2.msra.mxu0 0.0
    %2251 = vmatprep.subr.mxu0 0.0
    %2252 = vmatpush2.msra.mxu0 0.0
    %2253 = vmatprep.subr.mxu0 0.0
    %2254 = vmatpush2.msra.mxu0 0.0
    %2255 = vmatprep.subr.mxu0 0.0
    %2256 = vmatpush2.msra.mxu0 0.0
    %2257 = vmatprep.subr.mxu0 0.0
    %2258 = vmatpush2.msra.mxu0 0.0
    %2259 = vmatprep.subr.mxu0 0.0
    %2260 = vmatpush2.msra.mxu0 0.0
    %2261 = vmatprep.subr.mxu0 0.0
    %2262 = vmatpush2.msra.mxu0 0.0
    %2263 = vmatprep.subr.mxu0 0.0
    %2264 = vmatpush2.msra.mxu0 0.0
    %2265 = vmatprep.subr.mxu0 0.0
    %2266 = vmatpush2.msra.mxu0 0.0
    %2267 = vmatprep.subr.mxu0 0.0
    %2268 = vmatpush2.msra.mxu0 0.0
    %2269 = vmatprep.subr.mxu0 0.0
    %2270 = vmatpush2.msra.mxu0 0.0
    %2271 = vmatprep.subr.mxu0 0.0
    %2272 = vmatpush2.msra.mxu0 0.0
    %2273 = vmatprep.mubr.f32.mxu0 0.0
    %v2274 = vand.u32 %v77, 4294901760
    %2275 = vmatmul.mubr.f32.gmra.mxu0 %v2274
    %v2276 = vpop.f32.mrf.mxu0
    %v2277 = vadd.f32 %v2156, %v2276
    %v2278 = vpop.f32.mrf.mxu0
    %2279 = vmatprep.mubr.f32.mxu0 0.0
    %v2280 = vand.u32 %v80, 4294901760
    %2281 = vmatmul.mubr.f32.gmra.mxu0 %v2280
    %v2282 = vpop.f32.mrf.mxu0
    %v2283 = vadd.f32 %v2166, %v2282
    %v2284 = vpop.f32.mrf.mxu0
    %2285 = vmatprep.mubr.f32.mxu0 0.0
    %v2286 = vand.u32 %v83, 4294901760
    %2287 = vmatmul.mubr.f32.gmra.mxu0 %v2286
    %v2288 = vpop.f32.mrf.mxu0
    %v2289 = vadd.f32 %v2176, %v2288
    %v2290 = vpop.f32.mrf.mxu0
    %2291 = vmatprep.mubr.f32.mxu0 0.0
    %v2292 = vand.u32 %v86, 4294901760
    %2293 = vmatmul.mubr.f32.gmra.mxu0 %v2292
    %v2294 = vpop.f32.mrf.mxu0
    %v2295 = vadd.f32 %v2186, %v2294
    %v2296 = vpop.f32.mrf.mxu0
    %2297 = vdwg.mxu0
    %2298 = vmatprep.subr.mxu0 0.0
    %2299 = vmatpush1.msra.mxu0 0.0
    %2300 = vmatprep.subr.mxu0 0.0
    %2301 = vmatpush1.msra.mxu0 0.0
    %2302 = vmatprep.subr.mxu0 0.0
    %2303 = vmatpush1.msra.mxu0 0.0
    %2304 = vmatprep.subr.mxu0 0.0
    %2305 = vmatpush1.msra.mxu0 0.0
    %2306 = vmatprep.subr.mxu0 0.0
    %2307 = vmatpush1.msra.mxu0 0.0
    %2308 = vmatprep.subr.mxu0 0.0
    %2309 = vmatpush1.msra.mxu0 0.0
    %2310 = vmatprep.subr.mxu0 0.0
    %2311 = vmatpush1.msra.mxu0 0.0
    %2312 = vmatprep.subr.mxu0 0.0
    %2313 = vmatpush1.msra.mxu0 0.0
    %2314 = vmatprep.subr.mxu0 0.0
    %2315 = vmatpush1.msra.mxu0 0.0
    %2316 = vmatprep.subr.mxu0 0.0
    %2317 = vmatpush1.msra.mxu0 0.0
    %2318 = vmatprep.subr.mxu0 0.0
    %2319 = vmatpush1.msra.mxu0 0.0
    %2320 = vmatprep.subr.mxu0 0.0
    %2321 = vmatpush1.msra.mxu0 0.0
    %2322 = vmatprep.subr.mxu0 0.0
    %v2323 = vand.u32 %v713, 4294901760
    %v2324 = vsub.f32 %v713, %v2323
    %2325 = vmatpush1.msra.mxu0 %v2324
    %2326 = vmatprep.subr.mxu0 0.0
    %v2327 = vand.u32 %v712, 4294901760
    %v2328 = vsub.f32 %v712, %v2327
    %2329 = vmatpush1.msra.mxu0 %v2328
    %2330 = vmatprep.subr.mxu0 0.0
    %v2331 = vand.u32 %v711, 4294901760
    %v2332 = vsub.f32 %v711, %v2331
    %2333 = vmatpush1.msra.mxu0 %v2332
    %2334 = vmatprep.subr.mxu0 0.0
    %v2335 = vand.u32 %v710, 4294901760
    %v2336 = vsub.f32 %v710, %v2335
    %2337 = vmatpush1.msra.mxu0 %v2336
    %2338 = vmatprep.subr.mxu0 0.0
    %2339 = vmatpush2.msra.mxu0 0.0
    %2340 = vmatprep.subr.mxu0 0.0
    %2341 = vmatpush2.msra.mxu0 0.0
    %2342 = vmatprep.subr.mxu0 0.0
    %2343 = vmatpush2.msra.mxu0 0.0
    %2344 = vmatprep.subr.mxu0 0.0
    %2345 = vmatpush2.msra.mxu0 0.0
    %2346 = vmatprep.subr.mxu0 0.0
    %2347 = vmatpush2.msra.mxu0 0.0
    %2348 = vmatprep.subr.mxu0 0.0
    %2349 = vmatpush2.msra.mxu0 0.0
    %2350 = vmatprep.subr.mxu0 0.0
    %2351 = vmatpush2.msra.mxu0 0.0
    %2352 = vmatprep.subr.mxu0 0.0
    %2353 = vmatpush2.msra.mxu0 0.0
    %2354 = vmatprep.subr.mxu0 0.0
    %2355 = vmatpush2.msra.mxu0 0.0
    %2356 = vmatprep.subr.mxu0 0.0
    %2357 = vmatpush2.msra.mxu0 0.0
    %2358 = vmatprep.subr.mxu0 0.0
    %2359 = vmatpush2.msra.mxu0 0.0
    %2360 = vmatprep.subr.mxu0 0.0
    %2361 = vmatpush2.msra.mxu0 0.0
    %2362 = vmatprep.subr.mxu0 0.0
    %2363 = vmatpush2.msra.mxu0 0.0
    %2364 = vmatprep.subr.mxu0 0.0
    %2365 = vmatpush2.msra.mxu0 0.0
    %2366 = vmatprep.subr.mxu0 0.0
    %2367 = vmatpush2.msra.mxu0 0.0
    %2368 = vmatprep.subr.mxu0 0.0
    %2369 = vmatpush2.msra.mxu0 0.0
    %2370 = vmatprep.mubr.f32.mxu0 0.0
    %v2371 = vand.u32 %v77, 4294901760
    %v2372 = vsub.f32 %v77, %v2371
    %2373 = vmatmul.mubr.f32.gmra.mxu0 %v2372
    %v2374 = vpop.f32.mrf.mxu0
    %v2375 = vadd.f32 %v2277, %v2374
    %v2376 = vpop.f32.mrf.mxu0
    %2377 = vmatprep.mubr.f32.mxu0 0.0
    %v2378 = vand.u32 %v80, 4294901760
    %v2379 = vsub.f32 %v80, %v2378
    %2380 = vmatmul.mubr.f32.gmra.mxu0 %v2379
    %v2381 = vpop.f32.mrf.mxu0
    %v2382 = vadd.f32 %v2283, %v2381
    %v2383 = vpop.f32.mrf.mxu0
    %2384 = vmatprep.mubr.f32.mxu0 0.0
    %v2385 = vand.u32 %v83, 4294901760
    %v2386 = vsub.f32 %v83, %v2385
    %2387 = vmatmul.mubr.f32.gmra.mxu0 %v2386
    %v2388 = vpop.f32.mrf.mxu0
    %v2389 = vadd.f32 %v2289, %v2388
    %v2390 = vpop.f32.mrf.mxu0
    %2391 = vmatprep.mubr.f32.mxu0 0.0
    %v2392 = vand.u32 %v86, 4294901760
    %v2393 = vsub.f32 %v86, %v2392
    %2394 = vmatmul.mubr.f32.gmra.mxu0 %v2393
    %v2395 = vpop.f32.mrf.mxu0
    %v2396 = vadd.f32 %v2295, %v2395
    %v2397 = vpop.f32.mrf.mxu0
    %2398 = vdwg.mxu0
    %2399 = vmatprep.subr.mxu0 0.0
    %2400 = vmatpush1.msra.mxu0 0.0
    %2401 = vmatprep.subr.mxu0 0.0
    %2402 = vmatpush1.msra.mxu0 0.0
    %2403 = vmatprep.subr.mxu0 0.0
    %2404 = vmatpush1.msra.mxu0 0.0
    %2405 = vmatprep.subr.mxu0 0.0
    %2406 = vmatpush1.msra.mxu0 0.0
    %2407 = vmatprep.subr.mxu0 0.0
    %2408 = vmatpush1.msra.mxu0 0.0
    %2409 = vmatprep.subr.mxu0 0.0
    %2410 = vmatpush1.msra.mxu0 0.0
    %2411 = vmatprep.subr.mxu0 0.0
    %2412 = vmatpush1.msra.mxu0 0.0
    %2413 = vmatprep.subr.mxu0 0.0
    %2414 = vmatpush1.msra.mxu0 0.0
    %2415 = vmatprep.subr.mxu0 0.0
    %2416 = vmatpush1.msra.mxu0 0.0
    %2417 = vmatprep.subr.mxu0 0.0
    %2418 = vmatpush1.msra.mxu0 0.0
    %2419 = vmatprep.subr.mxu0 0.0
    %2420 = vmatpush1.msra.mxu0 0.0
    %2421 = vmatprep.subr.mxu0 0.0
    %2422 = vmatpush1.msra.mxu0 0.0
    %2423 = vmatprep.subr.mxu0 0.0
    %v2424 = vand.u32 %v713, 4294901760
    %2425 = vmatpush1.msra.mxu0 %v2424
    %2426 = vmatprep.subr.mxu0 0.0
    %v2427 = vand.u32 %v712, 4294901760
    %2428 = vmatpush1.msra.mxu0 %v2427
    %2429 = vmatprep.subr.mxu0 0.0
    %v2430 = vand.u32 %v711, 4294901760
    %2431 = vmatpush1.msra.mxu0 %v2430
    %2432 = vmatprep.subr.mxu0 0.0
    %v2433 = vand.u32 %v710, 4294901760
    %2434 = vmatpush1.msra.mxu0 %v2433
    %2435 = vmatprep.subr.mxu0 0.0
    %2436 = vmatpush2.msra.mxu0 0.0
    %2437 = vmatprep.subr.mxu0 0.0
    %2438 = vmatpush2.msra.mxu0 0.0
    %2439 = vmatprep.subr.mxu0 0.0
    %2440 = vmatpush2.msra.mxu0 0.0
    %2441 = vmatprep.subr.mxu0 0.0
    %2442 = vmatpush2.msra.mxu0 0.0
    %2443 = vmatprep.subr.mxu0 0.0
    %2444 = vmatpush2.msra.mxu0 0.0
    %2445 = vmatprep.subr.mxu0 0.0
    %2446 = vmatpush2.msra.mxu0 0.0
    %2447 = vmatprep.subr.mxu0 0.0
    %2448 = vmatpush2.msra.mxu0 0.0
    %2449 = vmatprep.subr.mxu0 0.0
    %2450 = vmatpush2.msra.mxu0 0.0
    %2451 = vmatprep.subr.mxu0 0.0
    %2452 = vmatpush2.msra.mxu0 0.0
    %2453 = vmatprep.subr.mxu0 0.0
    %2454 = vmatpush2.msra.mxu0 0.0
    %2455 = vmatprep.subr.mxu0 0.0
    %2456 = vmatpush2.msra.mxu0 0.0
    %2457 = vmatprep.subr.mxu0 0.0
    %2458 = vmatpush2.msra.mxu0 0.0
    %2459 = vmatprep.subr.mxu0 0.0
    %2460 = vmatpush2.msra.mxu0 0.0
    %2461 = vmatprep.subr.mxu0 0.0
    %2462 = vmatpush2.msra.mxu0 0.0
    %2463 = vmatprep.subr.mxu0 0.0
    %2464 = vmatpush2.msra.mxu0 0.0
    %2465 = vmatprep.subr.mxu0 0.0
    %2466 = vmatpush2.msra.mxu0 0.0
    %2467 = vmatprep.mubr.f32.mxu0 0.0
    %v2468 = vand.u32 %v77, 4294901760
    %v2469 = vsub.f32 %v77, %v2468
    %v2470 = vand.u32 %v2469, 4294901760
    %2471 = vmatmul.mubr.f32.gmra.mxu0 %v2470
    %v2472 = vpop.f32.mrf.mxu0
    %v2473 = vadd.f32 %v2375, %v2472
    %v2474 = vpop.f32.mrf.mxu0
    %2475 = vmatprep.mubr.f32.mxu0 0.0
    %v2476 = vand.u32 %v80, 4294901760
    %v2477 = vsub.f32 %v80, %v2476
    %v2478 = vand.u32 %v2477, 4294901760
    %2479 = vmatmul.mubr.f32.gmra.mxu0 %v2478
    %v2480 = vpop.f32.mrf.mxu0
    %v2481 = vadd.f32 %v2382, %v2480
    %v2482 = vpop.f32.mrf.mxu0
    %2483 = vmatprep.mubr.f32.mxu0 0.0
    %v2484 = vand.u32 %v83, 4294901760
    %v2485 = vsub.f32 %v83, %v2484
    %v2486 = vand.u32 %v2485, 4294901760
    %2487 = vmatmul.mubr.f32.gmra.mxu0 %v2486
    %v2488 = vpop.f32.mrf.mxu0
    %v2489 = vadd.f32 %v2389, %v2488
    %v2490 = vpop.f32.mrf.mxu0
    %2491 = vmatprep.mubr.f32.mxu0 0.0
    %v2492 = vand.u32 %v86, 4294901760
    %v2493 = vsub.f32 %v86, %v2492
    %v2494 = vand.u32 %v2493, 4294901760
    %2495 = vmatmul.mubr.f32.gmra.mxu0 %v2494
    %v2496 = vpop.f32.mrf.mxu0
    %v2497 = vadd.f32 %v2396, %v2496
    %v2498 = vpop.f32.mrf.mxu0
    %2499 = vdwg.mxu0
    %2500 = vmatprep.subr.mxu0 0.0
    %2501 = vmatpush1.msra.mxu0 0.0
    %2502 = vmatprep.subr.mxu0 0.0
    %2503 = vmatpush1.msra.mxu0 0.0
    %2504 = vmatprep.subr.mxu0 0.0
    %2505 = vmatpush1.msra.mxu0 0.0
    %2506 = vmatprep.subr.mxu0 0.0
    %2507 = vmatpush1.msra.mxu0 0.0
    %2508 = vmatprep.subr.mxu0 0.0
    %2509 = vmatpush1.msra.mxu0 0.0
    %2510 = vmatprep.subr.mxu0 0.0
    %2511 = vmatpush1.msra.mxu0 0.0
    %2512 = vmatprep.subr.mxu0 0.0
    %2513 = vmatpush1.msra.mxu0 0.0
    %2514 = vmatprep.subr.mxu0 0.0
    %2515 = vmatpush1.msra.mxu0 0.0
    %2516 = vmatprep.subr.mxu0 0.0
    %2517 = vmatpush1.msra.mxu0 0.0
    %2518 = vmatprep.subr.mxu0 0.0
    %2519 = vmatpush1.msra.mxu0 0.0
    %2520 = vmatprep.subr.mxu0 0.0
    %2521 = vmatpush1.msra.mxu0 0.0
    %2522 = vmatprep.subr.mxu0 0.0
    %2523 = vmatpush1.msra.mxu0 0.0
    %2524 = vmatprep.subr.mxu0 0.0
    %v2525 = vand.u32 %v713, 4294901760
    %v2526 = vsub.f32 %v713, %v2525
    %v2527 = vand.u32 %v2526, 4294901760
    %2528 = vmatpush1.msra.mxu0 %v2527
    %2529 = vmatprep.subr.mxu0 0.0
    %v2530 = vand.u32 %v712, 4294901760
    %v2531 = vsub.f32 %v712, %v2530
    %v2532 = vand.u32 %v2531, 4294901760
    %2533 = vmatpush1.msra.mxu0 %v2532
    %2534 = vmatprep.subr.mxu0 0.0
    %v2535 = vand.u32 %v711, 4294901760
    %v2536 = vsub.f32 %v711, %v2535
    %v2537 = vand.u32 %v2536, 4294901760
    %2538 = vmatpush1.msra.mxu0 %v2537
    %2539 = vmatprep.subr.mxu0 0.0
    %v2540 = vand.u32 %v710, 4294901760
    %v2541 = vsub.f32 %v710, %v2540
    %v2542 = vand.u32 %v2541, 4294901760
    %2543 = vmatpush1.msra.mxu0 %v2542
    %2544 = vmatprep.subr.mxu0 0.0
    %2545 = vmatpush2.msra.mxu0 0.0
    %2546 = vmatprep.subr.mxu0 0.0
    %2547 = vmatpush2.msra.mxu0 0.0
    %2548 = vmatprep.subr.mxu0 0.0
    %2549 = vmatpush2.msra.mxu0 0.0
    %2550 = vmatprep.subr.mxu0 0.0
    %2551 = vmatpush2.msra.mxu0 0.0
    %2552 = vmatprep.subr.mxu0 0.0
    %2553 = vmatpush2.msra.mxu0 0.0
    %2554 = vmatprep.subr.mxu0 0.0
    %2555 = vmatpush2.msra.mxu0 0.0
    %2556 = vmatprep.subr.mxu0 0.0
    %2557 = vmatpush2.msra.mxu0 0.0
    %2558 = vmatprep.subr.mxu0 0.0
    %2559 = vmatpush2.msra.mxu0 0.0
    %2560 = vmatprep.subr.mxu0 0.0
    %2561 = vmatpush2.msra.mxu0 0.0
    %2562 = vmatprep.subr.mxu0 0.0
    %2563 = vmatpush2.msra.mxu0 0.0
    %2564 = vmatprep.subr.mxu0 0.0
    %2565 = vmatpush2.msra.mxu0 0.0
    %2566 = vmatprep.subr.mxu0 0.0
    %2567 = vmatpush2.msra.mxu0 0.0
    %2568 = vmatprep.subr.mxu0 0.0
    %2569 = vmatpush2.msra.mxu0 0.0
    %2570 = vmatprep.subr.mxu0 0.0
    %2571 = vmatpush2.msra.mxu0 0.0
    %2572 = vmatprep.subr.mxu0 0.0
    %2573 = vmatpush2.msra.mxu0 0.0
    %2574 = vmatprep.subr.mxu0 0.0
    %2575 = vmatpush2.msra.mxu0 0.0
    %2576 = vmatprep.mubr.f32.mxu0 0.0
    %v2577 = vand.u32 %v77, 4294901760
    %2578 = vmatmul.mubr.f32.gmra.mxu0 %v2577
    %v2579 = vpop.f32.mrf.mxu0
    %v2580 = vadd.f32 %v2473, %v2579
    %v2581 = vpop.f32.mrf.mxu0
    %2582 = vmatprep.mubr.f32.mxu0 0.0
    %v2583 = vand.u32 %v80, 4294901760
    %2584 = vmatmul.mubr.f32.gmra.mxu0 %v2583
    %v2585 = vpop.f32.mrf.mxu0
    %v2586 = vadd.f32 %v2481, %v2585
    %v2587 = vpop.f32.mrf.mxu0
    %2588 = vmatprep.mubr.f32.mxu0 0.0
    %v2589 = vand.u32 %v83, 4294901760
    %2590 = vmatmul.mubr.f32.gmra.mxu0 %v2589
    %v2591 = vpop.f32.mrf.mxu0
    %v2592 = vadd.f32 %v2489, %v2591
    %v2593 = vpop.f32.mrf.mxu0
    %2594 = vmatprep.mubr.f32.mxu0 0.0
    %v2595 = vand.u32 %v86, 4294901760
    %2596 = vmatmul.mubr.f32.gmra.mxu0 %v2595
    %v2597 = vpop.f32.mrf.mxu0
    %v2598 = vadd.f32 %v2497, %v2597
    %v2599 = vpop.f32.mrf.mxu0
    %2600 = vdwg.mxu0
    %2601 = vmatprep.subr.mxu0 0.0
    %2602 = vmatpush1.msra.mxu0 0.0
    %2603 = vmatprep.subr.mxu0 0.0
    %2604 = vmatpush1.msra.mxu0 0.0
    %2605 = vmatprep.subr.mxu0 0.0
    %2606 = vmatpush1.msra.mxu0 0.0
    %2607 = vmatprep.subr.mxu0 0.0
    %2608 = vmatpush1.msra.mxu0 0.0
    %2609 = vmatprep.subr.mxu0 0.0
    %2610 = vmatpush1.msra.mxu0 0.0
    %2611 = vmatprep.subr.mxu0 0.0
    %2612 = vmatpush1.msra.mxu0 0.0
    %2613 = vmatprep.subr.mxu0 0.0
    %2614 = vmatpush1.msra.mxu0 0.0
    %2615 = vmatprep.subr.mxu0 0.0
    %2616 = vmatpush1.msra.mxu0 0.0
    %2617 = vmatprep.subr.mxu0 0.0
    %2618 = vmatpush1.msra.mxu0 0.0
    %2619 = vmatprep.subr.mxu0 0.0
    %2620 = vmatpush1.msra.mxu0 0.0
    %2621 = vmatprep.subr.mxu0 0.0
    %2622 = vmatpush1.msra.mxu0 0.0
    %2623 = vmatprep.subr.mxu0 0.0
    %2624 = vmatpush1.msra.mxu0 0.0
    %2625 = vmatprep.subr.mxu0 0.0
    %v2626 = vand.u32 %v713, 4294901760
    %2627 = vmatpush1.msra.mxu0 %v2626
    %2628 = vmatprep.subr.mxu0 0.0
    %v2629 = vand.u32 %v712, 4294901760
    %2630 = vmatpush1.msra.mxu0 %v2629
    %2631 = vmatprep.subr.mxu0 0.0
    %v2632 = vand.u32 %v711, 4294901760
    %2633 = vmatpush1.msra.mxu0 %v2632
    %2634 = vmatprep.subr.mxu0 0.0
    %v2635 = vand.u32 %v710, 4294901760
    %2636 = vmatpush1.msra.mxu0 %v2635
    %2637 = vmatprep.subr.mxu0 0.0
    %2638 = vmatpush2.msra.mxu0 0.0
    %2639 = vmatprep.subr.mxu0 0.0
    %2640 = vmatpush2.msra.mxu0 0.0
    %2641 = vmatprep.subr.mxu0 0.0
    %2642 = vmatpush2.msra.mxu0 0.0
    %2643 = vmatprep.subr.mxu0 0.0
    %2644 = vmatpush2.msra.mxu0 0.0
    %2645 = vmatprep.subr.mxu0 0.0
    %2646 = vmatpush2.msra.mxu0 0.0
    %2647 = vmatprep.subr.mxu0 0.0
    %2648 = vmatpush2.msra.mxu0 0.0
    %2649 = vmatprep.subr.mxu0 0.0
    %2650 = vmatpush2.msra.mxu0 0.0
    %2651 = vmatprep.subr.mxu0 0.0
    %2652 = vmatpush2.msra.mxu0 0.0
    %2653 = vmatprep.subr.mxu0 0.0
    %2654 = vmatpush2.msra.mxu0 0.0
    %2655 = vmatprep.subr.mxu0 0.0
    %2656 = vmatpush2.msra.mxu0 0.0
    %2657 = vmatprep.subr.mxu0 0.0
    %2658 = vmatpush2.msra.mxu0 0.0
    %2659 = vmatprep.subr.mxu0 0.0
    %2660 = vmatpush2.msra.mxu0 0.0
    %2661 = vmatprep.subr.mxu0 0.0
    %2662 = vmatpush2.msra.mxu0 0.0
    %2663 = vmatprep.subr.mxu0 0.0
    %2664 = vmatpush2.msra.mxu0 0.0
    %2665 = vmatprep.subr.mxu0 0.0
    %2666 = vmatpush2.msra.mxu0 0.0
    %2667 = vmatprep.subr.mxu0 0.0
    %2668 = vmatpush2.msra.mxu0 0.0
    %2669 = vmatprep.mubr.f32.mxu0 0.0
    %v2670 = vand.u32 %v77, 4294901760
    %2671 = vmatmul.mubr.f32.gmra.mxu0 %v2670
    %v2672 = vpop.f32.mrf.mxu0
    %v2673 = vadd.f32 %v2580, %v2672
    %v2674 = vpop.f32.mrf.mxu0
    %2675 = vmatprep.mubr.f32.mxu0 0.0
    %v2676 = vand.u32 %v80, 4294901760
    %2677 = vmatmul.mubr.f32.gmra.mxu0 %v2676
    %v2678 = vpop.f32.mrf.mxu0
    %v2679 = vadd.f32 %v2586, %v2678
    %v2680 = vpop.f32.mrf.mxu0
    %2681 = vmatprep.mubr.f32.mxu0 0.0
    %v2682 = vand.u32 %v83, 4294901760
    %2683 = vmatmul.mubr.f32.gmra.mxu0 %v2682
    %v2684 = vpop.f32.mrf.mxu0
    %v2685 = vadd.f32 %v2592, %v2684
    %v2686 = vpop.f32.mrf.mxu0
    %2687 = vmatprep.mubr.f32.mxu0 0.0
    %v2688 = vand.u32 %v86, 4294901760
    %2689 = vmatmul.mubr.f32.gmra.mxu0 %v2688
    %v2690 = vpop.f32.mrf.mxu0
    %v2691 = vadd.f32 %v2598, %v2690
    %v2692 = vpop.f32.mrf.mxu0
    %2693 = vdwg.mxu0
    %v2694 = vmul.f32 %v2673, 0.05
    %v2695 = vmul.f32 %v2679, 0.05
    %v2696 = vmul.f32 %v2685, 0.05
    %v2697 = vmul.f32 %v2691, 0.05
    %v2698 = vadd.f32 %v702, %v2694
    %v2699 = vadd.f32 %v703, %v2695
    %v2700 = vadd.f32 %v704, %v2696
    %v2701 = vadd.f32 %v705, %v2697
    %s2702 = scalar_lea.vmem [#allocation7], 128
    %v2703 = vld [vmem:[%s2702] sm:$0xff]
    %v2704 = vld [vmem:[%s2702 + $0x8] sm:$0xff]
    %v2705 = vld [vmem:[%s2702 + $0x10] sm:$0xff]
    %v2706 = vld [vmem:[%s2702 + $0x18] sm:$0xff]
    %v2707 = vld [vmem:[%s2702 + $0x20] sm:$0xff]
    %v2708 = vld [vmem:[%s2702 + $0x28] sm:$0xff]
    %v2709 = vld [vmem:[%s2702 + $0x30] sm:$0xff]
    %v2710 = vld [vmem:[%s2702 + $0x38] sm:$0xff]
    %v2712 = vsel %vm723, %v2698, 0
    %v2715 = vsel %vm723, %v2699, 0
    %v2718 = vsel %vm723, %v2700, 0
    %v2721 = vsel %vm723, %v2701, 0
    %2723 = vmatprep.subr.mxu0 0.0
    %2724 = vmatpush1.msra.mxu0 0.0
    %2725 = vmatprep.subr.mxu0 0.0
    %2726 = vmatpush1.msra.mxu0 0.0
    %2727 = vmatprep.subr.mxu0 0.0
    %2728 = vmatpush1.msra.mxu0 0.0
    %2729 = vmatprep.subr.mxu0 0.0
    %2730 = vmatpush1.msra.mxu0 0.0
    %2731 = vmatprep.subr.mxu0 0.0
    %2732 = vmatpush1.msra.mxu0 0.0
    %2733 = vmatprep.subr.mxu0 0.0
    %2734 = vmatpush1.msra.mxu0 0.0
    %2735 = vmatprep.subr.mxu0 0.0
    %2736 = vmatpush1.msra.mxu0 0.0
    %2737 = vmatprep.subr.mxu0 0.0
    %2738 = vmatpush1.msra.mxu0 0.0
    %2739 = vmatprep.subr.mxu0 0.0
    %v2740 = vand.u32 %v2710, 4294901760
    %2741 = vmatpush1.msra.mxu0 %v2740
    %2742 = vmatprep.subr.mxu0 0.0
    %v2743 = vand.u32 %v2709, 4294901760
    %2744 = vmatpush1.msra.mxu0 %v2743
    %2745 = vmatprep.subr.mxu0 0.0
    %v2746 = vand.u32 %v2708, 4294901760
    %2747 = vmatpush1.msra.mxu0 %v2746
    %2748 = vmatprep.subr.mxu0 0.0
    %v2749 = vand.u32 %v2707, 4294901760
    %2750 = vmatpush1.msra.mxu0 %v2749
    %2751 = vmatprep.subr.mxu0 0.0
    %v2752 = vand.u32 %v2706, 4294901760
    %2753 = vmatpush1.msra.mxu0 %v2752
    %2754 = vmatprep.subr.mxu0 0.0
    %v2755 = vand.u32 %v2705, 4294901760
    %2756 = vmatpush1.msra.mxu0 %v2755
    %2757 = vmatprep.subr.mxu0 0.0
    %v2758 = vand.u32 %v2704, 4294901760
    %2759 = vmatpush1.msra.mxu0 %v2758
    %2760 = vmatprep.subr.mxu0 0.0
    %v2761 = vand.u32 %v2703, 4294901760
    %2762 = vmatpush1.msra.mxu0 %v2761
    %2763 = vmatprep.subr.mxu0 0.0
    %2764 = vmatpush2.msra.mxu0 0.0
    %2765 = vmatprep.subr.mxu0 0.0
    %2766 = vmatpush2.msra.mxu0 0.0
    %2767 = vmatprep.subr.mxu0 0.0
    %2768 = vmatpush2.msra.mxu0 0.0
    %2769 = vmatprep.subr.mxu0 0.0
    %2770 = vmatpush2.msra.mxu0 0.0
    %2771 = vmatprep.subr.mxu0 0.0
    %2772 = vmatpush2.msra.mxu0 0.0
    %2773 = vmatprep.subr.mxu0 0.0
    %2774 = vmatpush2.msra.mxu0 0.0
    %2775 = vmatprep.subr.mxu0 0.0
    %2776 = vmatpush2.msra.mxu0 0.0
    %2777 = vmatprep.subr.mxu0 0.0
    %2778 = vmatpush2.msra.mxu0 0.0
    %2779 = vmatprep.subr.mxu0 0.0
    %2780 = vmatpush2.msra.mxu0 0.0
    %2781 = vmatprep.subr.mxu0 0.0
    %2782 = vmatpush2.msra.mxu0 0.0
    %2783 = vmatprep.subr.mxu0 0.0
    %2784 = vmatpush2.msra.mxu0 0.0
    %2785 = vmatprep.subr.mxu0 0.0
    %2786 = vmatpush2.msra.mxu0 0.0
    %2787 = vmatprep.subr.mxu0 0.0
    %2788 = vmatpush2.msra.mxu0 0.0
    %2789 = vmatprep.subr.mxu0 0.0
    %2790 = vmatpush2.msra.mxu0 0.0
    %2791 = vmatprep.subr.mxu0 0.0
    %2792 = vmatpush2.msra.mxu0 0.0
    %2793 = vmatprep.subr.mxu0 0.0
    %2794 = vmatpush2.msra.mxu0 0.0
    %2795 = vmatprep.mubr.f32.mxu0 0.0
    %v2796 = vand.u32 %v2712, 4294901760
    %v2797 = vsub.f32 %v2712, %v2796
    %v2798 = vand.u32 %v2797, 4294901760
    %v2799 = vsub.f32 %v2797, %v2798
    %v2800 = vand.u32 %v2799, 4294901760
    %2801 = vmatmul.mubr.f32.gmra.mxu0 %v2800
    %v2802 = vpop.f32.mrf.mxu0
    %v2803 = vadd.f32 0.0, %v2802
    %v2804 = vpop.f32.mrf.mxu0
    %2805 = vmatprep.mubr.f32.mxu0 0.0
    %v2806 = vand.u32 %v2715, 4294901760
    %v2807 = vsub.f32 %v2715, %v2806
    %v2808 = vand.u32 %v2807, 4294901760
    %v2809 = vsub.f32 %v2807, %v2808
    %v2810 = vand.u32 %v2809, 4294901760
    %2811 = vmatmul.mubr.f32.gmra.mxu0 %v2810
    %v2812 = vpop.f32.mrf.mxu0
    %v2813 = vadd.f32 0.0, %v2812
    %v2814 = vpop.f32.mrf.mxu0
    %2815 = vmatprep.mubr.f32.mxu0 0.0
    %v2816 = vand.u32 %v2718, 4294901760
    %v2817 = vsub.f32 %v2718, %v2816
    %v2818 = vand.u32 %v2817, 4294901760
    %v2819 = vsub.f32 %v2817, %v2818
    %v2820 = vand.u32 %v2819, 4294901760
    %2821 = vmatmul.mubr.f32.gmra.mxu0 %v2820
    %v2822 = vpop.f32.mrf.mxu0
    %v2823 = vadd.f32 0.0, %v2822
    %v2824 = vpop.f32.mrf.mxu0
    %2825 = vmatprep.mubr.f32.mxu0 0.0
    %v2826 = vand.u32 %v2721, 4294901760
    %v2827 = vsub.f32 %v2721, %v2826
    %v2828 = vand.u32 %v2827, 4294901760
    %v2829 = vsub.f32 %v2827, %v2828
    %v2830 = vand.u32 %v2829, 4294901760
    %2831 = vmatmul.mubr.f32.gmra.mxu0 %v2830
    %v2832 = vpop.f32.mrf.mxu0
    %v2833 = vadd.f32 0.0, %v2832
    %v2834 = vpop.f32.mrf.mxu0
    %2835 = vdwg.mxu0
    %2836 = vmatprep.subr.mxu0 0.0
    %2837 = vmatpush1.msra.mxu0 0.0
    %2838 = vmatprep.subr.mxu0 0.0
    %2839 = vmatpush1.msra.mxu0 0.0
    %2840 = vmatprep.subr.mxu0 0.0
    %2841 = vmatpush1.msra.mxu0 0.0
    %2842 = vmatprep.subr.mxu0 0.0
    %2843 = vmatpush1.msra.mxu0 0.0
    %2844 = vmatprep.subr.mxu0 0.0
    %2845 = vmatpush1.msra.mxu0 0.0
    %2846 = vmatprep.subr.mxu0 0.0
    %2847 = vmatpush1.msra.mxu0 0.0
    %2848 = vmatprep.subr.mxu0 0.0
    %2849 = vmatpush1.msra.mxu0 0.0
    %2850 = vmatprep.subr.mxu0 0.0
    %2851 = vmatpush1.msra.mxu0 0.0
    %2852 = vmatprep.subr.mxu0 0.0
    %v2853 = vand.u32 %v2710, 4294901760
    %v2854 = vsub.f32 %v2710, %v2853
    %v2855 = vand.u32 %v2854, 4294901760
    %v2856 = vsub.f32 %v2854, %v2855
    %v2857 = vand.u32 %v2856, 4294901760
    %2858 = vmatpush1.msra.mxu0 %v2857
    %2859 = vmatprep.subr.mxu0 0.0
    %v2860 = vand.u32 %v2709, 4294901760
    %v2861 = vsub.f32 %v2709, %v2860
    %v2862 = vand.u32 %v2861, 4294901760
    %v2863 = vsub.f32 %v2861, %v2862
    %v2864 = vand.u32 %v2863, 4294901760
    %2865 = vmatpush1.msra.mxu0 %v2864
    %2866 = vmatprep.subr.mxu0 0.0
    %v2867 = vand.u32 %v2708, 4294901760
    %v2868 = vsub.f32 %v2708, %v2867
    %v2869 = vand.u32 %v2868, 4294901760
    %v2870 = vsub.f32 %v2868, %v2869
    %v2871 = vand.u32 %v2870, 4294901760
    %2872 = vmatpush1.msra.mxu0 %v2871
    %2873 = vmatprep.subr.mxu0 0.0
    %v2874 = vand.u32 %v2707, 4294901760
    %v2875 = vsub.f32 %v2707, %v2874
    %v2876 = vand.u32 %v2875, 4294901760
    %v2877 = vsub.f32 %v2875, %v2876
    %v2878 = vand.u32 %v2877, 4294901760
    %2879 = vmatpush1.msra.mxu0 %v2878
    %2880 = vmatprep.subr.mxu0 0.0
    %v2881 = vand.u32 %v2706, 4294901760
    %v2882 = vsub.f32 %v2706, %v2881
    %v2883 = vand.u32 %v2882, 4294901760
    %v2884 = vsub.f32 %v2882, %v2883
    %v2885 = vand.u32 %v2884, 4294901760
    %2886 = vmatpush1.msra.mxu0 %v2885
    %2887 = vmatprep.subr.mxu0 0.0
    %v2888 = vand.u32 %v2705, 4294901760
    %v2889 = vsub.f32 %v2705, %v2888
    %v2890 = vand.u32 %v2889, 4294901760
    %v2891 = vsub.f32 %v2889, %v2890
    %v2892 = vand.u32 %v2891, 4294901760
    %2893 = vmatpush1.msra.mxu0 %v2892
    %2894 = vmatprep.subr.mxu0 0.0
    %v2895 = vand.u32 %v2704, 4294901760
    %v2896 = vsub.f32 %v2704, %v2895
    %v2897 = vand.u32 %v2896, 4294901760
    %v2898 = vsub.f32 %v2896, %v2897
    %v2899 = vand.u32 %v2898, 4294901760
    %2900 = vmatpush1.msra.mxu0 %v2899
    %2901 = vmatprep.subr.mxu0 0.0
    %v2902 = vand.u32 %v2703, 4294901760
    %v2903 = vsub.f32 %v2703, %v2902
    %v2904 = vand.u32 %v2903, 4294901760
    %v2905 = vsub.f32 %v2903, %v2904
    %v2906 = vand.u32 %v2905, 4294901760
    %2907 = vmatpush1.msra.mxu0 %v2906
    %2908 = vmatprep.subr.mxu0 0.0
    %2909 = vmatpush2.msra.mxu0 0.0
    %2910 = vmatprep.subr.mxu0 0.0
    %2911 = vmatpush2.msra.mxu0 0.0
    %2912 = vmatprep.subr.mxu0 0.0
    %2913 = vmatpush2.msra.mxu0 0.0
    %2914 = vmatprep.subr.mxu0 0.0
    %2915 = vmatpush2.msra.mxu0 0.0
    %2916 = vmatprep.subr.mxu0 0.0
    %2917 = vmatpush2.msra.mxu0 0.0
    %2918 = vmatprep.subr.mxu0 0.0
    %2919 = vmatpush2.msra.mxu0 0.0
    %2920 = vmatprep.subr.mxu0 0.0
    %2921 = vmatpush2.msra.mxu0 0.0
    %2922 = vmatprep.subr.mxu0 0.0
    %2923 = vmatpush2.msra.mxu0 0.0
    %2924 = vmatprep.subr.mxu0 0.0
    %2925 = vmatpush2.msra.mxu0 0.0
    %2926 = vmatprep.subr.mxu0 0.0
    %2927 = vmatpush2.msra.mxu0 0.0
    %2928 = vmatprep.subr.mxu0 0.0
    %2929 = vmatpush2.msra.mxu0 0.0
    %2930 = vmatprep.subr.mxu0 0.0
    %2931 = vmatpush2.msra.mxu0 0.0
    %2932 = vmatprep.subr.mxu0 0.0
    %2933 = vmatpush2.msra.mxu0 0.0
    %2934 = vmatprep.subr.mxu0 0.0
    %2935 = vmatpush2.msra.mxu0 0.0
    %2936 = vmatprep.subr.mxu0 0.0
    %2937 = vmatpush2.msra.mxu0 0.0
    %2938 = vmatprep.subr.mxu0 0.0
    %2939 = vmatpush2.msra.mxu0 0.0
    %2940 = vmatprep.mubr.f32.mxu0 0.0
    %v2941 = vand.u32 %v2712, 4294901760
    %2942 = vmatmul.mubr.f32.gmra.mxu0 %v2941
    %v2943 = vpop.f32.mrf.mxu0
    %v2944 = vadd.f32 %v2803, %v2943
    %v2945 = vpop.f32.mrf.mxu0
    %2946 = vmatprep.mubr.f32.mxu0 0.0
    %v2947 = vand.u32 %v2715, 4294901760
    %2948 = vmatmul.mubr.f32.gmra.mxu0 %v2947
    %v2949 = vpop.f32.mrf.mxu0
    %v2950 = vadd.f32 %v2813, %v2949
    %v2951 = vpop.f32.mrf.mxu0
    %2952 = vmatprep.mubr.f32.mxu0 0.0
    %v2953 = vand.u32 %v2718, 4294901760
    %2954 = vmatmul.mubr.f32.gmra.mxu0 %v2953
    %v2955 = vpop.f32.mrf.mxu0
    %v2956 = vadd.f32 %v2823, %v2955
    %v2957 = vpop.f32.mrf.mxu0
    %2958 = vmatprep.mubr.f32.mxu0 0.0
    %v2959 = vand.u32 %v2721, 4294901760
    %2960 = vmatmul.mubr.f32.gmra.mxu0 %v2959
    %v2961 = vpop.f32.mrf.mxu0
    %v2962 = vadd.f32 %v2833, %v2961
    %v2963 = vpop.f32.mrf.mxu0
    %2964 = vdwg.mxu0
    %2965 = vmatprep.subr.mxu0 0.0
    %2966 = vmatpush1.msra.mxu0 0.0
    %2967 = vmatprep.subr.mxu0 0.0
    %2968 = vmatpush1.msra.mxu0 0.0
    %2969 = vmatprep.subr.mxu0 0.0
    %2970 = vmatpush1.msra.mxu0 0.0
    %2971 = vmatprep.subr.mxu0 0.0
    %2972 = vmatpush1.msra.mxu0 0.0
    %2973 = vmatprep.subr.mxu0 0.0
    %2974 = vmatpush1.msra.mxu0 0.0
    %2975 = vmatprep.subr.mxu0 0.0
    %2976 = vmatpush1.msra.mxu0 0.0
    %2977 = vmatprep.subr.mxu0 0.0
    %2978 = vmatpush1.msra.mxu0 0.0
    %2979 = vmatprep.subr.mxu0 0.0
    %2980 = vmatpush1.msra.mxu0 0.0
    %2981 = vmatprep.subr.mxu0 0.0
    %v2982 = vand.u32 %v2710, 4294901760
    %v2983 = vsub.f32 %v2710, %v2982
    %2984 = vmatpush1.msra.mxu0 %v2983
    %2985 = vmatprep.subr.mxu0 0.0
    %v2986 = vand.u32 %v2709, 4294901760
    %v2987 = vsub.f32 %v2709, %v2986
    %2988 = vmatpush1.msra.mxu0 %v2987
    %2989 = vmatprep.subr.mxu0 0.0
    %v2990 = vand.u32 %v2708, 4294901760
    %v2991 = vsub.f32 %v2708, %v2990
    %2992 = vmatpush1.msra.mxu0 %v2991
    %2993 = vmatprep.subr.mxu0 0.0
    %v2994 = vand.u32 %v2707, 4294901760
    %v2995 = vsub.f32 %v2707, %v2994
    %2996 = vmatpush1.msra.mxu0 %v2995
    %2997 = vmatprep.subr.mxu0 0.0
    %v2998 = vand.u32 %v2706, 4294901760
    %v2999 = vsub.f32 %v2706, %v2998
    %3000 = vmatpush1.msra.mxu0 %v2999
    %3001 = vmatprep.subr.mxu0 0.0
    %v3002 = vand.u32 %v2705, 4294901760
    %v3003 = vsub.f32 %v2705, %v3002
    %3004 = vmatpush1.msra.mxu0 %v3003
    %3005 = vmatprep.subr.mxu0 0.0
    %v3006 = vand.u32 %v2704, 4294901760
    %v3007 = vsub.f32 %v2704, %v3006
    %3008 = vmatpush1.msra.mxu0 %v3007
    %3009 = vmatprep.subr.mxu0 0.0
    %v3010 = vand.u32 %v2703, 4294901760
    %v3011 = vsub.f32 %v2703, %v3010
    %3012 = vmatpush1.msra.mxu0 %v3011
    %3013 = vmatprep.subr.mxu0 0.0
    %3014 = vmatpush2.msra.mxu0 0.0
    %3015 = vmatprep.subr.mxu0 0.0
    %3016 = vmatpush2.msra.mxu0 0.0
    %3017 = vmatprep.subr.mxu0 0.0
    %3018 = vmatpush2.msra.mxu0 0.0
    %3019 = vmatprep.subr.mxu0 0.0
    %3020 = vmatpush2.msra.mxu0 0.0
    %3021 = vmatprep.subr.mxu0 0.0
    %3022 = vmatpush2.msra.mxu0 0.0
    %3023 = vmatprep.subr.mxu0 0.0
    %3024 = vmatpush2.msra.mxu0 0.0
    %3025 = vmatprep.subr.mxu0 0.0
    %3026 = vmatpush2.msra.mxu0 0.0
    %3027 = vmatprep.subr.mxu0 0.0
    %3028 = vmatpush2.msra.mxu0 0.0
    %3029 = vmatprep.subr.mxu0 0.0
    %3030 = vmatpush2.msra.mxu0 0.0
    %3031 = vmatprep.subr.mxu0 0.0
    %3032 = vmatpush2.msra.mxu0 0.0
    %3033 = vmatprep.subr.mxu0 0.0
    %3034 = vmatpush2.msra.mxu0 0.0
    %3035 = vmatprep.subr.mxu0 0.0
    %3036 = vmatpush2.msra.mxu0 0.0
    %3037 = vmatprep.subr.mxu0 0.0
    %3038 = vmatpush2.msra.mxu0 0.0
    %3039 = vmatprep.subr.mxu0 0.0
    %3040 = vmatpush2.msra.mxu0 0.0
    %3041 = vmatprep.subr.mxu0 0.0
    %3042 = vmatpush2.msra.mxu0 0.0
    %3043 = vmatprep.subr.mxu0 0.0
    %3044 = vmatpush2.msra.mxu0 0.0
    %3045 = vmatprep.mubr.f32.mxu0 0.0
    %v3046 = vand.u32 %v2712, 4294901760
    %v3047 = vsub.f32 %v2712, %v3046
    %3048 = vmatmul.mubr.f32.gmra.mxu0 %v3047
    %v3049 = vpop.f32.mrf.mxu0
    %v3050 = vadd.f32 %v2944, %v3049
    %v3051 = vpop.f32.mrf.mxu0
    %3052 = vmatprep.mubr.f32.mxu0 0.0
    %v3053 = vand.u32 %v2715, 4294901760
    %v3054 = vsub.f32 %v2715, %v3053
    %3055 = vmatmul.mubr.f32.gmra.mxu0 %v3054
    %v3056 = vpop.f32.mrf.mxu0
    %v3057 = vadd.f32 %v2950, %v3056
    %v3058 = vpop.f32.mrf.mxu0
    %3059 = vmatprep.mubr.f32.mxu0 0.0
    %v3060 = vand.u32 %v2718, 4294901760
    %v3061 = vsub.f32 %v2718, %v3060
    %3062 = vmatmul.mubr.f32.gmra.mxu0 %v3061
    %v3063 = vpop.f32.mrf.mxu0
    %v3064 = vadd.f32 %v2956, %v3063
    %v3065 = vpop.f32.mrf.mxu0
    %3066 = vmatprep.mubr.f32.mxu0 0.0
    %v3067 = vand.u32 %v2721, 4294901760
    %v3068 = vsub.f32 %v2721, %v3067
    %3069 = vmatmul.mubr.f32.gmra.mxu0 %v3068
    %v3070 = vpop.f32.mrf.mxu0
    %v3071 = vadd.f32 %v2962, %v3070
    %v3072 = vpop.f32.mrf.mxu0
    %3073 = vdwg.mxu0
    %3074 = vmatprep.subr.mxu0 0.0
    %3075 = vmatpush1.msra.mxu0 0.0
    %3076 = vmatprep.subr.mxu0 0.0
    %3077 = vmatpush1.msra.mxu0 0.0
    %3078 = vmatprep.subr.mxu0 0.0
    %3079 = vmatpush1.msra.mxu0 0.0
    %3080 = vmatprep.subr.mxu0 0.0
    %3081 = vmatpush1.msra.mxu0 0.0
    %3082 = vmatprep.subr.mxu0 0.0
    %3083 = vmatpush1.msra.mxu0 0.0
    %3084 = vmatprep.subr.mxu0 0.0
    %3085 = vmatpush1.msra.mxu0 0.0
    %3086 = vmatprep.subr.mxu0 0.0
    %3087 = vmatpush1.msra.mxu0 0.0
    %3088 = vmatprep.subr.mxu0 0.0
    %3089 = vmatpush1.msra.mxu0 0.0
    %3090 = vmatprep.subr.mxu0 0.0
    %v3091 = vand.u32 %v2710, 4294901760
    %3092 = vmatpush1.msra.mxu0 %v3091
    %3093 = vmatprep.subr.mxu0 0.0
    %v3094 = vand.u32 %v2709, 4294901760
    %3095 = vmatpush1.msra.mxu0 %v3094
    %3096 = vmatprep.subr.mxu0 0.0
    %v3097 = vand.u32 %v2708, 4294901760
    %3098 = vmatpush1.msra.mxu0 %v3097
    %3099 = vmatprep.subr.mxu0 0.0
    %v3100 = vand.u32 %v2707, 4294901760
    %3101 = vmatpush1.msra.mxu0 %v3100
    %3102 = vmatprep.subr.mxu0 0.0
    %v3103 = vand.u32 %v2706, 4294901760
    %3104 = vmatpush1.msra.mxu0 %v3103
    %3105 = vmatprep.subr.mxu0 0.0
    %v3106 = vand.u32 %v2705, 4294901760
    %3107 = vmatpush1.msra.mxu0 %v3106
    %3108 = vmatprep.subr.mxu0 0.0
    %v3109 = vand.u32 %v2704, 4294901760
    %3110 = vmatpush1.msra.mxu0 %v3109
    %3111 = vmatprep.subr.mxu0 0.0
    %v3112 = vand.u32 %v2703, 4294901760
    %3113 = vmatpush1.msra.mxu0 %v3112
    %3114 = vmatprep.subr.mxu0 0.0
    %3115 = vmatpush2.msra.mxu0 0.0
    %3116 = vmatprep.subr.mxu0 0.0
    %3117 = vmatpush2.msra.mxu0 0.0
    %3118 = vmatprep.subr.mxu0 0.0
    %3119 = vmatpush2.msra.mxu0 0.0
    %3120 = vmatprep.subr.mxu0 0.0
    %3121 = vmatpush2.msra.mxu0 0.0
    %3122 = vmatprep.subr.mxu0 0.0
    %3123 = vmatpush2.msra.mxu0 0.0
    %3124 = vmatprep.subr.mxu0 0.0
    %3125 = vmatpush2.msra.mxu0 0.0
    %3126 = vmatprep.subr.mxu0 0.0
    %3127 = vmatpush2.msra.mxu0 0.0
    %3128 = vmatprep.subr.mxu0 0.0
    %3129 = vmatpush2.msra.mxu0 0.0
    %3130 = vmatprep.subr.mxu0 0.0
    %3131 = vmatpush2.msra.mxu0 0.0
    %3132 = vmatprep.subr.mxu0 0.0
    %3133 = vmatpush2.msra.mxu0 0.0
    %3134 = vmatprep.subr.mxu0 0.0
    %3135 = vmatpush2.msra.mxu0 0.0
    %3136 = vmatprep.subr.mxu0 0.0
    %3137 = vmatpush2.msra.mxu0 0.0
    %3138 = vmatprep.subr.mxu0 0.0
    %3139 = vmatpush2.msra.mxu0 0.0
    %3140 = vmatprep.subr.mxu0 0.0
    %3141 = vmatpush2.msra.mxu0 0.0
    %3142 = vmatprep.subr.mxu0 0.0
    %3143 = vmatpush2.msra.mxu0 0.0
    %3144 = vmatprep.subr.mxu0 0.0
    %3145 = vmatpush2.msra.mxu0 0.0
    %3146 = vmatprep.mubr.f32.mxu0 0.0
    %v3147 = vand.u32 %v2712, 4294901760
    %v3148 = vsub.f32 %v2712, %v3147
    %v3149 = vand.u32 %v3148, 4294901760
    %3150 = vmatmul.mubr.f32.gmra.mxu0 %v3149
    %v3151 = vpop.f32.mrf.mxu0
    %v3152 = vadd.f32 %v3050, %v3151
    %v3153 = vpop.f32.mrf.mxu0
    %3154 = vmatprep.mubr.f32.mxu0 0.0
    %v3155 = vand.u32 %v2715, 4294901760
    %v3156 = vsub.f32 %v2715, %v3155
    %v3157 = vand.u32 %v3156, 4294901760
    %3158 = vmatmul.mubr.f32.gmra.mxu0 %v3157
    %v3159 = vpop.f32.mrf.mxu0
    %v3160 = vadd.f32 %v3057, %v3159
    %v3161 = vpop.f32.mrf.mxu0
    %3162 = vmatprep.mubr.f32.mxu0 0.0
    %v3163 = vand.u32 %v2718, 4294901760
    %v3164 = vsub.f32 %v2718, %v3163
    %v3165 = vand.u32 %v3164, 4294901760
    %3166 = vmatmul.mubr.f32.gmra.mxu0 %v3165
    %v3167 = vpop.f32.mrf.mxu0
    %v3168 = vadd.f32 %v3064, %v3167
    %v3169 = vpop.f32.mrf.mxu0
    %3170 = vmatprep.mubr.f32.mxu0 0.0
    %v3171 = vand.u32 %v2721, 4294901760
    %v3172 = vsub.f32 %v2721, %v3171
    %v3173 = vand.u32 %v3172, 4294901760
    %3174 = vmatmul.mubr.f32.gmra.mxu0 %v3173
    %v3175 = vpop.f32.mrf.mxu0
    %v3176 = vadd.f32 %v3071, %v3175
    %v3177 = vpop.f32.mrf.mxu0
    %3178 = vdwg.mxu0
    %3179 = vmatprep.subr.mxu0 0.0
    %3180 = vmatpush1.msra.mxu0 0.0
    %3181 = vmatprep.subr.mxu0 0.0
    %3182 = vmatpush1.msra.mxu0 0.0
    %3183 = vmatprep.subr.mxu0 0.0
    %3184 = vmatpush1.msra.mxu0 0.0
    %3185 = vmatprep.subr.mxu0 0.0
    %3186 = vmatpush1.msra.mxu0 0.0
    %3187 = vmatprep.subr.mxu0 0.0
    %3188 = vmatpush1.msra.mxu0 0.0
    %3189 = vmatprep.subr.mxu0 0.0
    %3190 = vmatpush1.msra.mxu0 0.0
    %3191 = vmatprep.subr.mxu0 0.0
    %3192 = vmatpush1.msra.mxu0 0.0
    %3193 = vmatprep.subr.mxu0 0.0
    %3194 = vmatpush1.msra.mxu0 0.0
    %3195 = vmatprep.subr.mxu0 0.0
    %v3196 = vand.u32 %v2710, 4294901760
    %v3197 = vsub.f32 %v2710, %v3196
    %v3198 = vand.u32 %v3197, 4294901760
    %3199 = vmatpush1.msra.mxu0 %v3198
    %3200 = vmatprep.subr.mxu0 0.0
    %v3201 = vand.u32 %v2709, 4294901760
    %v3202 = vsub.f32 %v2709, %v3201
    %v3203 = vand.u32 %v3202, 4294901760
    %3204 = vmatpush1.msra.mxu0 %v3203
    %3205 = vmatprep.subr.mxu0 0.0
    %v3206 = vand.u32 %v2708, 4294901760
    %v3207 = vsub.f32 %v2708, %v3206
    %v3208 = vand.u32 %v3207, 4294901760
    %3209 = vmatpush1.msra.mxu0 %v3208
    %3210 = vmatprep.subr.mxu0 0.0
    %v3211 = vand.u32 %v2707, 4294901760
    %v3212 = vsub.f32 %v2707, %v3211
    %v3213 = vand.u32 %v3212, 4294901760
    %3214 = vmatpush1.msra.mxu0 %v3213
    %3215 = vmatprep.subr.mxu0 0.0
    %v3216 = vand.u32 %v2706, 4294901760
    %v3217 = vsub.f32 %v2706, %v3216
    %v3218 = vand.u32 %v3217, 4294901760
    %3219 = vmatpush1.msra.mxu0 %v3218
    %3220 = vmatprep.subr.mxu0 0.0
    %v3221 = vand.u32 %v2705, 4294901760
    %v3222 = vsub.f32 %v2705, %v3221
    %v3223 = vand.u32 %v3222, 4294901760
    %3224 = vmatpush1.msra.mxu0 %v3223
    %3225 = vmatprep.subr.mxu0 0.0
    %v3226 = vand.u32 %v2704, 4294901760
    %v3227 = vsub.f32 %v2704, %v3226
    %v3228 = vand.u32 %v3227, 4294901760
    %3229 = vmatpush1.msra.mxu0 %v3228
    %3230 = vmatprep.subr.mxu0 0.0
    %v3231 = vand.u32 %v2703, 4294901760
    %v3232 = vsub.f32 %v2703, %v3231
    %v3233 = vand.u32 %v3232, 4294901760
    %3234 = vmatpush1.msra.mxu0 %v3233
    %3235 = vmatprep.subr.mxu0 0.0
    %3236 = vmatpush2.msra.mxu0 0.0
    %3237 = vmatprep.subr.mxu0 0.0
    %3238 = vmatpush2.msra.mxu0 0.0
    %3239 = vmatprep.subr.mxu0 0.0
    %3240 = vmatpush2.msra.mxu0 0.0
    %3241 = vmatprep.subr.mxu0 0.0
    %3242 = vmatpush2.msra.mxu0 0.0
    %3243 = vmatprep.subr.mxu0 0.0
    %3244 = vmatpush2.msra.mxu0 0.0
    %3245 = vmatprep.subr.mxu0 0.0
    %3246 = vmatpush2.msra.mxu0 0.0
    %3247 = vmatprep.subr.mxu0 0.0
    %3248 = vmatpush2.msra.mxu0 0.0
    %3249 = vmatprep.subr.mxu0 0.0
    %3250 = vmatpush2.msra.mxu0 0.0
    %3251 = vmatprep.subr.mxu0 0.0
    %3252 = vmatpush2.msra.mxu0 0.0
    %3253 = vmatprep.subr.mxu0 0.0
    %3254 = vmatpush2.msra.mxu0 0.0
    %3255 = vmatprep.subr.mxu0 0.0
    %3256 = vmatpush2.msra.mxu0 0.0
    %3257 = vmatprep.subr.mxu0 0.0
    %3258 = vmatpush2.msra.mxu0 0.0
    %3259 = vmatprep.subr.mxu0 0.0
    %3260 = vmatpush2.msra.mxu0 0.0
    %3261 = vmatprep.subr.mxu0 0.0
    %3262 = vmatpush2.msra.mxu0 0.0
    %3263 = vmatprep.subr.mxu0 0.0
    %3264 = vmatpush2.msra.mxu0 0.0
    %3265 = vmatprep.subr.mxu0 0.0
    %3266 = vmatpush2.msra.mxu0 0.0
    %3267 = vmatprep.mubr.f32.mxu0 0.0
    %v3268 = vand.u32 %v2712, 4294901760
    %3269 = vmatmul.mubr.f32.gmra.mxu0 %v3268
    %v3270 = vpop.f32.mrf.mxu0
    %v3271 = vadd.f32 %v3152, %v3270
    %v3272 = vpop.f32.mrf.mxu0
    %3273 = vmatprep.mubr.f32.mxu0 0.0
    %v3274 = vand.u32 %v2715, 4294901760
    %3275 = vmatmul.mubr.f32.gmra.mxu0 %v3274
    %v3276 = vpop.f32.mrf.mxu0
    %v3277 = vadd.f32 %v3160, %v3276
    %v3278 = vpop.f32.mrf.mxu0
    %3279 = vmatprep.mubr.f32.mxu0 0.0
    %v3280 = vand.u32 %v2718, 4294901760
    %3281 = vmatmul.mubr.f32.gmra.mxu0 %v3280
    %v3282 = vpop.f32.mrf.mxu0
    %v3283 = vadd.f32 %v3168, %v3282
    %v3284 = vpop.f32.mrf.mxu0
    %3285 = vmatprep.mubr.f32.mxu0 0.0
    %v3286 = vand.u32 %v2721, 4294901760
    %3287 = vmatmul.mubr.f32.gmra.mxu0 %v3286
    %v3288 = vpop.f32.mrf.mxu0
    %v3289 = vadd.f32 %v3176, %v3288
    %v3290 = vpop.f32.mrf.mxu0
    %3291 = vdwg.mxu0
    %3292 = vmatprep.subr.mxu0 0.0
    %3293 = vmatpush1.msra.mxu0 0.0
    %3294 = vmatprep.subr.mxu0 0.0
    %3295 = vmatpush1.msra.mxu0 0.0
    %3296 = vmatprep.subr.mxu0 0.0
    %3297 = vmatpush1.msra.mxu0 0.0
    %3298 = vmatprep.subr.mxu0 0.0
    %3299 = vmatpush1.msra.mxu0 0.0
    %3300 = vmatprep.subr.mxu0 0.0
    %3301 = vmatpush1.msra.mxu0 0.0
    %3302 = vmatprep.subr.mxu0 0.0
    %3303 = vmatpush1.msra.mxu0 0.0
    %3304 = vmatprep.subr.mxu0 0.0
    %3305 = vmatpush1.msra.mxu0 0.0
    %3306 = vmatprep.subr.mxu0 0.0
    %3307 = vmatpush1.msra.mxu0 0.0
    %3308 = vmatprep.subr.mxu0 0.0
    %v3309 = vand.u32 %v2710, 4294901760
    %3310 = vmatpush1.msra.mxu0 %v3309
    %3311 = vmatprep.subr.mxu0 0.0
    %v3312 = vand.u32 %v2709, 4294901760
    %3313 = vmatpush1.msra.mxu0 %v3312
    %3314 = vmatprep.subr.mxu0 0.0
    %v3315 = vand.u32 %v2708, 4294901760
    %3316 = vmatpush1.msra.mxu0 %v3315
    %3317 = vmatprep.subr.mxu0 0.0
    %v3318 = vand.u32 %v2707, 4294901760
    %3319 = vmatpush1.msra.mxu0 %v3318
    %3320 = vmatprep.subr.mxu0 0.0
    %v3321 = vand.u32 %v2706, 4294901760
    %3322 = vmatpush1.msra.mxu0 %v3321
    %3323 = vmatprep.subr.mxu0 0.0
    %v3324 = vand.u32 %v2705, 4294901760
    %3325 = vmatpush1.msra.mxu0 %v3324
    %3326 = vmatprep.subr.mxu0 0.0
    %v3327 = vand.u32 %v2704, 4294901760
    %3328 = vmatpush1.msra.mxu0 %v3327
    %3329 = vmatprep.subr.mxu0 0.0
    %v3330 = vand.u32 %v2703, 4294901760
    %3331 = vmatpush1.msra.mxu0 %v3330
    %3332 = vmatprep.subr.mxu0 0.0
    %3333 = vmatpush2.msra.mxu0 0.0
    %3334 = vmatprep.subr.mxu0 0.0
    %3335 = vmatpush2.msra.mxu0 0.0
    %3336 = vmatprep.subr.mxu0 0.0
    %3337 = vmatpush2.msra.mxu0 0.0
    %3338 = vmatprep.subr.mxu0 0.0
    %3339 = vmatpush2.msra.mxu0 0.0
    %3340 = vmatprep.subr.mxu0 0.0
    %3341 = vmatpush2.msra.mxu0 0.0
    %3342 = vmatprep.subr.mxu0 0.0
    %3343 = vmatpush2.msra.mxu0 0.0
    %3344 = vmatprep.subr.mxu0 0.0
    %3345 = vmatpush2.msra.mxu0 0.0
    %3346 = vmatprep.subr.mxu0 0.0
    %3347 = vmatpush2.msra.mxu0 0.0
    %3348 = vmatprep.subr.mxu0 0.0
    %3349 = vmatpush2.msra.mxu0 0.0
    %3350 = vmatprep.subr.mxu0 0.0
    %3351 = vmatpush2.msra.mxu0 0.0
    %3352 = vmatprep.subr.mxu0 0.0
    %3353 = vmatpush2.msra.mxu0 0.0
    %3354 = vmatprep.subr.mxu0 0.0
    %3355 = vmatpush2.msra.mxu0 0.0
    %3356 = vmatprep.subr.mxu0 0.0
    %3357 = vmatpush2.msra.mxu0 0.0
    %3358 = vmatprep.subr.mxu0 0.0
    %3359 = vmatpush2.msra.mxu0 0.0
    %3360 = vmatprep.subr.mxu0 0.0
    %3361 = vmatpush2.msra.mxu0 0.0
    %3362 = vmatprep.subr.mxu0 0.0
    %3363 = vmatpush2.msra.mxu0 0.0
    %3364 = vmatprep.mubr.f32.mxu0 0.0
    %v3365 = vand.u32 %v2712, 4294901760
    %3366 = vmatmul.mubr.f32.gmra.mxu0 %v3365
    %v3367 = vpop.f32.mrf.mxu0
    %v3368 = vadd.f32 %v3271, %v3367
    %v3369 = vpop.f32.mrf.mxu0
    %3370 = vmatprep.mubr.f32.mxu0 0.0
    %v3371 = vand.u32 %v2715, 4294901760
    %3372 = vmatmul.mubr.f32.gmra.mxu0 %v3371
    %v3373 = vpop.f32.mrf.mxu0
    %v3374 = vadd.f32 %v3277, %v3373
    %v3375 = vpop.f32.mrf.mxu0
    %3376 = vmatprep.mubr.f32.mxu0 0.0
    %v3377 = vand.u32 %v2718, 4294901760
    %3378 = vmatmul.mubr.f32.gmra.mxu0 %v3377
    %v3379 = vpop.f32.mrf.mxu0
    %v3380 = vadd.f32 %v3283, %v3379
    %v3381 = vpop.f32.mrf.mxu0
    %3382 = vmatprep.mubr.f32.mxu0 0.0
    %v3383 = vand.u32 %v2721, 4294901760
    %3384 = vmatmul.mubr.f32.gmra.mxu0 %v3383
    %v3385 = vpop.f32.mrf.mxu0
    %v3386 = vadd.f32 %v3289, %v3385
    %v3387 = vpop.f32.mrf.mxu0
    %3388 = vdwg.mxu0
    %v3389 = vadd.f32 %v2059, %v3368
    %v3390 = vadd.f32 %v2065, %v3374
    %v3391 = vadd.f32 %v2071, %v3380
    %v3392 = vadd.f32 %v2077, %v3386
    %v3393 = vld [vmem:[%s3] sm:$0x1]
    %v3395 = vlaneseq
    %v3396 = vshrl.u32 %v3395, 7
    %v3397 = vsub.s32 0, %v3396
    %v3398 = vrot.slane %v3393, %v3397
    %v3400 = vadd.f32 %v3389, %v3398
    %v3401 = vadd.f32 %v3390, %v3398
    %v3402 = vadd.f32 %v3391, %v3398
    %v3403 = vadd.f32 %v3392, %v3398
    %3404 = vst [vmem:[#allocation8] sm:$0xff] %v3400
    %3405 = vst [vmem:[#allocation8 + $0x8] sm:$0xff] %v3401
    %3406 = vst [vmem:[#allocation8 + $0x10] sm:$0xff] %v3402
    %3407 = vst [vmem:[#allocation8 + $0x18] sm:$0xff] %v3403
    // Predicated region
    $region30: #{tpu_custom_call.1} parent=1 // pred_check
      _
    $region31: #{tpu_custom_call.1} parent=1 // pred_check_branch
      %3409 = sbr.rel (0) target = $region33
    $region32: #{tpu_custom_call.1} parent=1 // pred_region
      %s3411 = ssub.s32 512, 512
      %3412 = vsyncadd [#allocation4], %s3411
      %s3413 = sshll.u32 [#allocation8], 4
      %s3414 = int_to_ptr.vmem [resolvable:$true] %s3413
      %3419 = dma.vmem_to_hbm [thread:$0]  %s3414, 512, %s4, [#allocation4], 128, 128, 8
    $region33: #{tpu_custom_call.1} parent=1 // pred_fallthru
      _
    // Predicated region
    $region34: #{tpu_custom_call.1} parent=1 // pred_check
      _
    $region35: #{tpu_custom_call.1} parent=1 // pred_check_branch
      %3421 = sbr.rel (0) target = $region37
    $region36: #{tpu_custom_call.1} parent=1 // pred_region
      %3422 = dma.done [#allocation4], 512
    $region37: #{tpu_custom_call.1} parent=1 // pred_fallthru
      _
    %3423 = vsyncpa [#allocation3], 1
    %3424 = vsyncpa [#allocation6], 1
    %3425 = vsyncpa [#allocation4], 1

</llo_original>
